<compile_context>
chip_gen: v7x
topology: tpu7x:2x2x1
jax: 0.10.0
libtpu: 0.0.40
codegen_flags: <defaults>
</compile_context>

<pallas_src>
import functools

import jax
import jax.numpy as jnp
from jax.experimental import pallas as pl
from jax.experimental.pallas import tpu as pltpu


# 32 MiB: plenty for tm=4096 @ K<=576 double-buffered (~11 MiB), and within the
# scoped budget on every generation (v7x physical VMEM is only 64 MiB).
_VMEM_LIMIT_BYTES = 32 * 1024 * 1024


def _round_up(x, m):
    return ((x + m - 1) // m) * m


def _pick_tile(mp):
    """Largest lane-dense M tile dividing mp; prefer >=2 grid steps (v7x 2 TCs)."""
    cands = (4096, 2048, 1024, 512, 256, 128)
    for t in cands:
        if mp % t == 0 and mp // t >= 2:
            return t
    for t in cands:
        if mp % t == 0:
            return t
    return 128


# --------------------------------------------------------------------------
# Pallas kernel 1: lane-dense (W @ A) + bias, optional ReLU  (MXU path)
#   W (Cout, K) bf16,  A (K, tm) bf16,  bias (Cout, 1) f32  ->  (Cout, tm)
# --------------------------------------------------------------------------
def _wmm_bias_act_kernel(w_ref, a_ref, b_ref, o_ref, *, act):
    acc = jnp.dot(w_ref[...], a_ref[...], preferred_element_type=jnp.float32)
    acc = acc + b_ref[...]                    # (Cout, 1) broadcasts over lanes
    if act == "relu":
        acc = jnp.maximum(acc, 0.0)
    o_ref[...] = acc.astype(o_ref.dtype)      # bf16 store for intermediates


def matmul_bias_act(w, a, b, act="none", out_dtype=jnp.float32):
    """w (Cout, K) bf16, a (K, M) bf16, b (Cout,) f32 -> (Cout, M) out_dtype."""
    Cout, K = w.shape
    M = a.shape[1]
    Mp = _round_up(M, 128)                    # lane-dense / unmasked stores
    if Mp != M:
        a = jnp.pad(a, ((0, 0), (0, Mp - M)))
    tm = _pick_tile(Mp)
    out = pl.pallas_call(
        functools.partial(_wmm_bias_act_kernel, act=act),
        out_shape=jax.ShapeDtypeStruct((Cout, Mp), out_dtype),
        grid=(Mp // tm,),
        in_specs=[
            pl.BlockSpec((Cout, K), lambda i: (0, 0)),   # resident weight
            pl.BlockSpec((K, tm), lambda i: (0, i)),     # im2col tile
            pl.BlockSpec((Cout, 1), lambda i: (0, 0)),   # bias column
        ],
        out_specs=pl.BlockSpec((Cout, tm), lambda i: (0, i)),
        compiler_params=pltpu.CompilerParams(
            dimension_semantics=("parallel",),
            vmem_limit_bytes=_VMEM_LIMIT_BYTES),
    )(w, a, b.reshape(Cout, 1).astype(jnp.float32))
    return out[:, :M] if Mp != M else out


# --------------------------------------------------------------------------
# Pallas kernel 2: conv_out matmul fused with white-balanced color correction
#   c3 = relu(W @ A + b)           (9, tm)
#   out[i] = sum_j rgb[j] * c3[3i+j]   stored as one dense (3, tm) block
# --------------------------------------------------------------------------
def _convout_cc_kernel(w_ref, a_ref, b_ref, rgb_ref, o_ref):
    c3 = jnp.dot(w_ref[...], a_ref[...], preferred_element_type=jnp.float32)
    c3 = jnp.maximum(c3 + b_ref[...], 0.0)    # (9, tm) = relu(conv_out)
    s = rgb_ref[...]                          # (3, tm), already rgb * wb
    rows = []
    for i in range(3):
        rows.append(s[0:1, :] * c3[3 * i + 0:3 * i + 1, :]
                    + s[1:2, :] * c3[3 * i + 1:3 * i + 2, :]
                    + s[2:3, :] * c3[3 * i + 2:3 * i + 3, :])
    o_ref[...] = jnp.concatenate(rows, axis=0)   # single full-block store


def convout_colorcorrect(w_mat, cols, b, rgb_scaled):
    """w_mat (9, K) bf16, cols (K, M) bf16, b (9,), rgb_scaled (3, M) f32."""
    Cout, K = w_mat.shape
    M = cols.shape[1]
    Mp = _round_up(M, 128)
    if Mp != M:
        cols = jnp.pad(cols, ((0, 0), (0, Mp - M)))
        rgb_scaled = jnp.pad(rgb_scaled, ((0, 0), (0, Mp - M)))
    tm = _pick_tile(Mp)
    out = pl.pallas_call(
        _convout_cc_kernel,
        out_shape=jax.ShapeDtypeStruct((3, Mp), jnp.float32),
        grid=(Mp // tm,),
        in_specs=[
            pl.BlockSpec((Cout, K), lambda i: (0, 0)),
            pl.BlockSpec((K, tm), lambda i: (0, i)),
            pl.BlockSpec((Cout, 1), lambda i: (0, 0)),
            pl.BlockSpec((3, tm), lambda i: (0, i)),
        ],
        out_specs=pl.BlockSpec((3, tm), lambda i: (0, i)),
        compiler_params=pltpu.CompilerParams(
            dimension_semantics=("parallel",),
            vmem_limit_bytes=_VMEM_LIMIT_BYTES),
    )(w_mat, cols, b.reshape(Cout, 1).astype(jnp.float32),
      rgb_scaled.astype(jnp.float32))
    return out[:, :M] if Mp != M else out


# --------------------------------------------------------------------------
# JAX glue: bf16 im2col in CNHW layout, conv / sub-pixel conv-transpose
# --------------------------------------------------------------------------
def _as_pads(p):
    if isinstance(p, int):
        return ((p, p), (p, p))
    return p


def _im2col_cnhw(xb, kh, kw, stride, pads):
    """xb (Cin, N, H, W) bf16 -> cols (Cin*kh*kw, N*Ho*Wo) bf16."""
    (pt, pb), (pleft, pright) = pads
    Cin, N, H, W = xb.shape
    if pt or pb or pleft or pright:
        xb = jnp.pad(xb, ((0, 0), (0, 0), (pt, pb), (pleft, pright)))
    Ho = (H + pt + pb - kh) // stride + 1
    Wo = (W + pleft + pright - kw) // stride + 1
    if kh == 1 and kw == 1 and stride == 1:
        return xb.reshape(Cin, N * Ho * Wo), N, Ho, Wo     # no taps, no copy
    taps = []
    for i in range(kh):
        for j in range(kw):
            taps.append(xb[:, :, i:i + stride * Ho:stride,
                           j:j + stride * Wo:stride])
    cols = jnp.stack(taps, axis=1).reshape(Cin * kh * kw, N * Ho * Wo)
    return cols, N, Ho, Wo


def conv2d_cnhw(x, w, b, stride=1, padding=0, act="none",
                out_dtype=jnp.float32):
    """x (Cin, N, H, W); w (Cout, Cin, kh, kw) torch layout; b (Cout,)."""
    Cout, Cin, kh, kw = w.shape
    pads = _as_pads(padding)
    # bf16 BEFORE tap slicing: im2col buffer is built (and re-read) in bf16.
    cols, N, Ho, Wo = _im2col_cnhw(x.astype(jnp.bfloat16), kh, kw, stride, pads)
    w_mat = w.reshape(Cout, Cin * kh * kw).astype(jnp.bfloat16)
    out = matmul_bias_act(w_mat, cols, b, act=act, out_dtype=out_dtype)
    return out.reshape(Cout, N, Ho, Wo)


def conv_transpose2x_cnhw(x, w, b, act="none", out_dtype=jnp.float32):
    """ConvTranspose2d(k=3, stride=2, padding=1, output = 2x input) in CNHW,
    lowered as a stride-phase (sub-pixel) decomposition: 4 small convs on the
    UNdilated input, outputs interleaved -> no zero-stuffed buffer, no wasted
    MACs on zeros. w is torch layout (Cin, Cout, 3, 3)."""
    Cin, Cout, _, _ = w.shape
    C, N, H, W = x.shape
    wt = jnp.transpose(w, (1, 0, 2, 3))               # (Cout, Cin, 3, 3)
    # Phase kernels (derived from oh = 2*ih - 1 + i, ow = 2*iw - 1 + j):
    w_ee = wt[:, :, 1:2, 1:2]                                          # 1x1
    w_eo = jnp.stack([wt[:, :, 1, 2], wt[:, :, 1, 0]],
                     axis=-1).reshape(Cout, Cin, 1, 2)                 # 1x2
    w_oe = jnp.stack([wt[:, :, 2, 1], wt[:, :, 0, 1]],
                     axis=-1).reshape(Cout, Cin, 2, 1)                 # 2x1
    w_oo = jnp.stack([wt[:, :, 2, 2], wt[:, :, 2, 0],
                      wt[:, :, 0, 2], wt[:, :, 0, 0]],
                     axis=-1).reshape(Cout, Cin, 2, 2)                 # 2x2
    ee = conv2d_cnhw(x, w_ee, b, 1, ((0, 0), (0, 0)), act, out_dtype)
    eo = conv2d_cnhw(x, w_eo, b, 1, ((0, 0), (0, 1)), act, out_dtype)
    oe = conv2d_cnhw(x, w_oe, b, 1, ((0, 1), (0, 0)), act, out_dtype)
    oo = conv2d_cnhw(x, w_oo, b, 1, ((0, 1), (0, 1)), act, out_dtype)
    # Interleave: out[2m+a, 2p+c] = phase[a][c][m, p]
    t0 = jnp.stack([ee, eo], axis=-1)                 # (Cout, N, H, W, 2)
    t1 = jnp.stack([oe, oo], axis=-1)
    t = jnp.stack([t0, t1], axis=3)                   # (Cout, N, H, 2, W, 2)
    return t.reshape(Cout, N, 2 * H, 2 * W)


def bilinear_up2(x):
    """F.interpolate(scale_factor=2, mode='bilinear', align_corners=True), NCHW."""
    N, C, H, W = x.shape

    def interp_matrix(n_in, n_out):
        if n_in == 1:
            return jnp.ones((n_out, 1), jnp.float32)
        src = jnp.arange(n_out, dtype=jnp.float32) * (n_in - 1) / (n_out - 1)
        i0 = jnp.clip(jnp.floor(src).astype(jnp.int32), 0, n_in - 2)
        frac = src - i0.astype(jnp.float32)
        rows = jnp.arange(n_out)
        M = jnp.zeros((n_out, n_in), jnp.float32)
        M = M.at[rows, i0].add(1.0 - frac)
        M = M.at[rows, i0 + 1].add(frac)
        return M

    Mh = interp_matrix(H, 2 * H)
    Mw = interp_matrix(W, 2 * W)
    return jnp.einsum("oh,nchw,pw->ncop", Mh, x, Mw)


# --------------------------------------------------------------------------
# Deterministic parameter initialization (shapes from RawVSR.__init__)
# --------------------------------------------------------------------------
def init_params(key):
    ks = jax.random.split(key, 20)
    p = {}

    def cw(k, cout, cin, kh, kw):
        fan_in = cin * kh * kw
        return (jax.random.normal(k, (cout, cin, kh, kw), jnp.float32)
                / jnp.sqrt(jnp.float32(fan_in)))

    def bias(k, n):
        return 0.01 * jax.random.normal(k, (n,), jnp.float32)

    p["fuseGreen_w"] = cw(ks[0], 1, 2, 1, 1);  p["fuseGreen_b"] = bias(ks[1], 1)
    p["conv1_w"] = cw(ks[2], 16, 3, 3, 3);     p["conv1_b"] = bias(ks[3], 16)
    p["conv2_w"] = cw(ks[4], 32, 16, 3, 3);    p["conv2_b"] = bias(ks[5], 32)
    p["conv3_w"] = cw(ks[6], 64, 32, 3, 3);    p["conv3_b"] = bias(ks[7], 64)
    p["conv4_w"] = cw(ks[8], 64, 64, 3, 3);    p["conv4_b"] = bias(ks[9], 64)
    # ConvTranspose2d weights are (Cin, Cout, kh, kw)
    p["deconv3_w"] = (jax.random.normal(ks[10], (64, 32, 3, 3), jnp.float32)
                      / jnp.sqrt(jnp.float32(64 * 9)))
    p["deconv3_b"] = bias(ks[11], 32)
    p["deconv2_w"] = (jax.random.normal(ks[12], (64, 16, 3, 3), jnp.float32)
                      / jnp.sqrt(jnp.float32(64 * 9)))
    p["deconv2_b"] = bias(ks[13], 16)
    p["conv_out_w"] = cw(ks[14], 9, 32, 3, 3); p["conv_out_b"] = bias(ks[15], 9)
    # TODO(synk): ChannelAttention class was not provided; assumed SE-style
    # (global average pool -> fc -> ReLU -> fc -> sigmoid).
    p["wb_fc1_w"] = jax.random.normal(ks[16], (3, 3), jnp.float32) / jnp.sqrt(3.0)
    p["wb_fc1_b"] = bias(ks[17], 3)
    p["wb_fc2_w"] = jax.random.normal(ks[18], (3, 3), jnp.float32) / jnp.sqrt(3.0)
    p["wb_fc2_b"] = bias(ks[19], 3)
    return p


# --------------------------------------------------------------------------
# Full RawVSR forward
# --------------------------------------------------------------------------
def rawvsr_forward(params, x, ref_rgb_lr):
    N, _, H, W = x.shape
    bf16 = jnp.bfloat16

    # ---- Bayer split (tiny ops kept in plain XLA) ----
    r = x[:, :, ::2, ::2]
    g1 = x[:, :, ::2, 1::2]
    g2 = x[:, :, 1::2, ::2]
    b = x[:, :, 1::2, 1::2]

    r_up = bilinear_up2(r)
    b_up = bilinear_up2(b)
    g = jnp.concatenate([g1, g2], axis=1)                        # (N,2,H/2,W/2)
    g = conv2d_cnhw(g.transpose(1, 0, 2, 3),
                    params["fuseGreen_w"], params["fuseGreen_b"],
                    1, 0, out_dtype=jnp.float32)
    g_up = bilinear_up2(g.transpose(1, 0, 2, 3))                 # back to NCHW
    rgb = jnp.concatenate([r_up, g_up, b_up], axis=1)            # (N,3,H,W) f32

    # ---- white balance via channel attention (SE-style, tiny -> plain jnp) ----
    avg = jnp.mean(rgb, axis=(2, 3))                             # (N, 3)
    h = jnp.maximum(avg @ params["wb_fc1_w"] + params["wb_fc1_b"], 0.0)
    wb = jax.nn.sigmoid(h @ params["wb_fc2_w"] + params["wb_fc2_b"])   # (N, 3)
    # Fold wb into rgb here (3*M elementwise) instead of materializing a
    # separate (3, M) broadcast read by the epilogue kernel.
    rgb_scaled = rgb * wb[:, :, None, None]                      # (N,3,H,W) f32

    # ---- encoder / decoder on the RGB low-res reference, CNHW + bf16 ----
    x0 = ref_rgb_lr.transpose(1, 0, 2, 3)                        # (3, N, H, W)
    f1 = conv2d_cnhw(x0, params["conv1_w"], params["conv1_b"], 1, 1,
                     act="relu", out_dtype=bf16)
    f2 = conv2d_cnhw(f1, params["conv2_w"], params["conv2_b"], 2, 1,
                     act="relu", out_dtype=bf16)
    f3 = conv2d_cnhw(f2, params["conv3_w"], params["conv3_b"], 2, 1,
                     act="relu", out_dtype=bf16)
    f4 = conv2d_cnhw(f3, params["conv4_w"], params["conv4_b"], 1, 1,
                     act="relu", out_dtype=bf16)
    d3 = conv_transpose2x_cnhw(f4, params["deconv3_w"], params["deconv3_b"],
                               act="relu", out_dtype=bf16)
    # TODO(synk): the skip-connection concats could be removed by splitting the
    # weight along Cin and accumulating two dots inside one Pallas call.
    d2 = conv_transpose2x_cnhw(jnp.concatenate([d3, f2], axis=0),
                               params["deconv2_w"], params["deconv2_b"],
                               act="relu", out_dtype=bf16)
    co_in = jnp.concatenate([d2, f1], axis=0)                    # (32,N,H,W) bf16

    # ---- conv_out fused with the color correction epilogue ----
    cols, _, Ho, Wo = _im2col_cnhw(co_in, 3, 3, 1, ((1, 1), (1, 1)))
    w_out = params["conv_out_w"].reshape(9, -1).astype(bf16)
    M = N * H * W
    rgb_c = rgb_scaled.transpose(1, 0, 2, 3).reshape(3, M)       # (3, M) f32
    out = convout_colorcorrect(w_out, cols, params["conv_out_b"], rgb_c)
    return out.reshape(3, N, H, W).transpose(1, 0, 2, 3)         # (N, 3, H, W)


if __name__ == "__main__":
    key = jax.random.PRNGKey(0)
    kx, kref, kp = jax.random.split(key, 3)
    # x: raw Bayer mosaic (N, 1, H, W); ref_rgb_lr: (N, 3, H, W), same spatial size.
    x = jax.random.uniform(kx, (2, 1, 16, 16), jnp.float32)
    ref_rgb_lr = jax.random.uniform(kref, (2, 3, 16, 16), jnp.float32)
    params = init_params(kp)

    out = jax.jit(rawvsr_forward)(params, x, ref_rgb_lr)
    out = jax.block_until_ready(out)
    assert out.shape == (2, 3, 16, 16), out.shape
    assert out.dtype == jnp.float32
    print("KERNEL_OK")
</pallas_src>

<mosaic_0001>
module attributes {stable_mosaic.version = 11 : i64} {
  func.func private @main(%arg0: i32) attributes {dimension_semantics = [#tpu.dimension_semantics<core_parallel>], iteration_bounds = array<i64: 2>, tpu.core_type = #tpu.core_type<sc_scalar_subcore>, window_params = []} {
    return
  }
}

module attributes {stable_mosaic.version = 11 : i64} {
  func.func private @main(%arg0: i32) attributes {dimension_semantics = [#tpu.dimension_semantics<core_parallel>], iteration_bounds = array<i64: 2>, tpu.core_type = #tpu.core_type<sc_scalar_subcore>, window_params = []} {
    return
  }
}

module attributes {stable_mosaic.version = 11 : i64} {
  func.func @_wmm_bias_act_kernel(%arg0: i32, %arg1: memref<16x27xbf16, #tpu.memory_space<vmem>>, %arg2: memref<27x256xbf16, #tpu.memory_space<vmem>>, %arg3: memref<16x1xf32, #tpu.memory_space<vmem>>, %arg4: memref<16x256xbf16, #tpu.memory_space<vmem>>) attributes {dimension_semantics = [#tpu.dimension_semantics<parallel>], iteration_bounds = array<i64: 2>, scalar_prefetch = 0 : i64, scratch_operands = 0 : i64, tpu.core_type = #tpu.core_type<tc>, window_params = [{pipeline_mode = #tpu.pipeline_mode<synchronous>, transform_indices = @transform_0, window_bounds = array<i64: 16, 27>}, {transform_indices = @transform_1, window_bounds = array<i64: 27, 256>}, {pipeline_mode = #tpu.pipeline_mode<synchronous>, transform_indices = @transform_2, window_bounds = array<i64: 16, 1>}, {transform_indices = @transform_3, window_bounds = array<i64: 16, 256>}]} {
    %c0 = arith.constant 0 : index
    %c0_0 = arith.constant 0 : index
    %0 = vector.load %arg1[%c0, %c0_0] : memref<16x27xbf16, #tpu.memory_space<vmem>>, vector<16x27xbf16>
    %c0_1 = arith.constant 0 : index
    %c0_2 = arith.constant 0 : index
    %1 = vector.load %arg2[%c0_1, %c0_2] : memref<27x256xbf16, #tpu.memory_space<vmem>>, vector<27x256xbf16>
    %cst = arith.constant dense<0.000000e+00> : vector<16x256xf32>
    %2 = tpu.matmul %0, %1, %cst {dimension_numbers = #tpu.dot_dimension_numbers<[1], [0], [0], [1], [0, 0, 1, 1], [], []>} : vector<16x27xbf16>, vector<27x256xbf16>, vector<16x256xf32> -> vector<16x256xf32>
    %c0_3 = arith.constant 0 : index
    %c0_4 = arith.constant 0 : index
    %3 = vector.load %arg3[%c0_3, %c0_4] : memref<16x1xf32, #tpu.memory_space<vmem>>, vector<16x1xf32>
    %4 = vector.broadcast %3 : vector<16x1xf32> to vector<16x256xf32>
    %5 = arith.addf %2, %4 : vector<16x256xf32>
    %cst_5 = arith.constant 0.000000e+00 : f32
    %6 = vector.broadcast %cst_5 : f32 to vector<16x256xf32>
    %7 = arith.maximumf %5, %6 : vector<16x256xf32>
    %8 = arith.truncf %7 : vector<16x256xf32> to vector<16x256xbf16>
    %c0_6 = arith.constant 0 : index
    %c0_7 = arith.constant 0 : index
    %9 = vector.load %arg4[%c0_6, %c0_7] : memref<16x256xbf16, #tpu.memory_space<vmem>>, vector<16x256xbf16>
    tpu.vector_store %arg4[%c0_6, %c0_7], %8 {strides = array<i32>} : memref<16x256xbf16, #tpu.memory_space<vmem>>, vector<16x256xbf16>,
    return
  }
  func.func @transform_0(%arg0: i32) -> (i32, i32) {
    %c0_i32 = arith.constant 0 : i32
    %c0_i32_0 = arith.constant 0 : i32
    %c0_i32_1 = arith.constant 0 : i32
    return %c0_i32, %c0_i32_0 : i32, i32
  }
  func.func @transform_1(%arg0: i32) -> (i32, i32) {
    %c0_i32 = arith.constant 0 : i32
    %c0_i32_0 = arith.constant 0 : i32
    return %c0_i32, %arg0 : i32, i32
  }
  func.func @transform_2(%arg0: i32) -> (i32, i32) {
    %c0_i32 = arith.constant 0 : i32
    %c0_i32_0 = arith.constant 0 : i32
    %c0_i32_1 = arith.constant 0 : i32
    return %c0_i32, %c0_i32_0 : i32, i32
  }
  func.func @transform_3(%arg0: i32) -> (i32, i32) {
    %c0_i32 = arith.constant 0 : i32
    %c0_i32_0 = arith.constant 0 : i32
    return %c0_i32, %arg0 : i32, i32
  }
}

module attributes {stable_mosaic.version = 11 : i64} {
  func.func @_wmm_bias_act_kernel(%arg0: i32, %arg1: memref<32x144xbf16, #tpu.memory_space<vmem>>, %arg2: memref<144x128xbf16, #tpu.memory_space<vmem>>, %arg3: memref<32x1xf32, #tpu.memory_space<vmem>>, %arg4: memref<32x128xbf16, #tpu.memory_space<vmem>>) attributes {dimension_semantics = [#tpu.dimension_semantics<parallel>], iteration_bounds = array<i64: 1>, scalar_prefetch = 0 : i64, scratch_operands = 0 : i64, tpu.core_type = #tpu.core_type<tc>, window_params = [{pipeline_mode = #tpu.pipeline_mode<synchronous>, transform_indices = @transform_0, window_bounds = array<i64: 32, 144>}, {transform_indices = @transform_1, window_bounds = array<i64: 144, 128>}, {pipeline_mode = #tpu.pipeline_mode<synchronous>, transform_indices = @transform_2, window_bounds = array<i64: 32, 1>}, {transform_indices = @transform_3, window_bounds = array<i64: 32, 128>}]} {
    %c0 = arith.constant 0 : index
    %c0_0 = arith.constant 0 : index
    %0 = vector.load %arg1[%c0, %c0_0] : memref<32x144xbf16, #tpu.memory_space<vmem>>, vector<32x144xbf16>
    %c0_1 = arith.constant 0 : index
    %c0_2 = arith.constant 0 : index
    %1 = vector.load %arg2[%c0_1, %c0_2] : memref<144x128xbf16, #tpu.memory_space<vmem>>, vector<144x128xbf16>
    %cst = arith.constant dense<0.000000e+00> : vector<32x128xf32>
    %2 = tpu.matmul %0, %1, %cst {dimension_numbers = #tpu.dot_dimension_numbers<[1], [0], [0], [1], [0, 0, 1, 1], [], []>} : vector<32x144xbf16>, vector<144x128xbf16>, vector<32x128xf32> -> vector<32x128xf32>
    %c0_3 = arith.constant 0 : index
    %c0_4 = arith.constant 0 : index
    %3 = vector.load %arg3[%c0_3, %c0_4] : memref<32x1xf32, #tpu.memory_space<vmem>>, vector<32x1xf32>
    %4 = vector.broadcast %3 : vector<32x1xf32> to vector<32x128xf32>
    %5 = arith.addf %2, %4 : vector<32x128xf32>
    %cst_5 = arith.constant 0.000000e+00 : f32
    %6 = vector.broadcast %cst_5 : f32 to vector<32x128xf32>
    %7 = arith.maximumf %5, %6 : vector<32x128xf32>
    %8 = arith.truncf %7 : vector<32x128xf32> to vector<32x128xbf16>
    %c0_6 = arith.constant 0 : index
    %c0_7 = arith.constant 0 : index
    %9 = vector.load %arg4[%c0_6, %c0_7] : memref<32x128xbf16, #tpu.memory_space<vmem>>, vector<32x128xbf16>
    tpu.vector_store %arg4[%c0_6, %c0_7], %8 {strides = array<i32>} : memref<32x128xbf16, #tpu.memory_space<vmem>>, vector<32x128xbf16>,
    return
  }
  func.func @transform_0(%arg0: i32) -> (i32, i32) {
    %c0_i32 = arith.constant 0 : i32
    %c0_i32_0 = arith.constant 0 : i32
    %c0_i32_1 = arith.constant 0 : i32
    return %c0_i32, %c0_i32_0 : i32, i32
  }
  func.func @transform_1(%arg0: i32) -> (i32, i32) {
    %c0_i32 = arith.constant 0 : i32
    %c0_i32_0 = arith.constant 0 : i32
    return %c0_i32, %arg0 : i32, i32
  }
  func.func @transform_2(%arg0: i32) -> (i32, i32) {
    %c0_i32 = arith.constant 0 : i32
    %c0_i32_0 = arith.constant 0 : i32
    %c0_i32_1 = arith.constant 0 : i32
    return %c0_i32, %c0_i32_0 : i32, i32
  }
  func.func @transform_3(%arg0: i32) -> (i32, i32) {
    %c0_i32 = arith.constant 0 : i32
    %c0_i32_0 = arith.constant 0 : i32
    return %c0_i32, %arg0 : i32, i32
  }
}

module attributes {stable_mosaic.version = 11 : i64} {
  func.func @_wmm_bias_act_kernel(%arg0: i32, %arg1: memref<64x288xbf16, #tpu.memory_space<vmem>>, %arg2: memref<288x128xbf16, #tpu.memory_space<vmem>>, %arg3: memref<64x1xf32, #tpu.memory_space<vmem>>, %arg4: memref<64x128xbf16, #tpu.memory_space<vmem>>) attributes {dimension_semantics = [#tpu.dimension_semantics<parallel>], iteration_bounds = array<i64: 1>, scalar_prefetch = 0 : i64, scratch_operands = 0 : i64, tpu.core_type = #tpu.core_type<tc>, window_params = [{pipeline_mode = #tpu.pipeline_mode<synchronous>, transform_indices = @transform_0, window_bounds = array<i64: 64, 288>}, {transform_indices = @transform_1, window_bounds = array<i64: 288, 128>}, {pipeline_mode = #tpu.pipeline_mode<synchronous>, transform_indices = @transform_2, window_bounds = array<i64: 64, 1>}, {transform_indices = @transform_3, window_bounds = array<i64: 64, 128>}]} {
    %c0 = arith.constant 0 : index
    %c0_0 = arith.constant 0 : index
    %0 = vector.load %arg1[%c0, %c0_0] : memref<64x288xbf16, #tpu.memory_space<vmem>>, vector<64x288xbf16>
    %c0_1 = arith.constant 0 : index
    %c0_2 = arith.constant 0 : index
    %1 = vector.load %arg2[%c0_1, %c0_2] : memref<288x128xbf16, #tpu.memory_space<vmem>>, vector<288x128xbf16>
    %cst = arith.constant dense<0.000000e+00> : vector<64x128xf32>
    %2 = tpu.matmul %0, %1, %cst {dimension_numbers = #tpu.dot_dimension_numbers<[1], [0], [0], [1], [0, 0, 1, 1], [], []>} : vector<64x288xbf16>, vector<288x128xbf16>, vector<64x128xf32> -> vector<64x128xf32>
    %c0_3 = arith.constant 0 : index
    %c0_4 = arith.constant 0 : index
    %3 = vector.load %arg3[%c0_3, %c0_4] : memref<64x1xf32, #tpu.memory_space<vmem>>, vector<64x1xf32>
    %4 = vector.broadcast %3 : vector<64x1xf32> to vector<64x128xf32>
    %5 = arith.addf %2, %4 : vector<64x128xf32>
    %cst_5 = arith.constant 0.000000e+00 : f32
    %6 = vector.broadcast %cst_5 : f32 to vector<64x128xf32>
    %7 = arith.maximumf %5, %6 : vector<64x128xf32>
    %8 = arith.truncf %7 : vector<64x128xf32> to vector<64x128xbf16>
    %c0_6 = arith.constant 0 : index
    %c0_7 = arith.constant 0 : index
    %9 = vector.load %arg4[%c0_6, %c0_7] : memref<64x128xbf16, #tpu.memory_space<vmem>>, vector<64x128xbf16>
    tpu.vector_store %arg4[%c0_6, %c0_7], %8 {strides = array<i32>} : memref<64x128xbf16, #tpu.memory_space<vmem>>, vector<64x128xbf16>,
    return
  }
  func.func @transform_0(%arg0: i32) -> (i32, i32) {
    %c0_i32 = arith.constant 0 : i32
    %c0_i32_0 = arith.constant 0 : i32
    %c0_i32_1 = arith.constant 0 : i32
    return %c0_i32, %c0_i32_0 : i32, i32
  }
  func.func @transform_1(%arg0: i32) -> (i32, i32) {
    %c0_i32 = arith.constant 0 : i32
    %c0_i32_0 = arith.constant 0 : i32
    return %c0_i32, %arg0 : i32, i32
  }
  func.func @transform_2(%arg0: i32) -> (i32, i32) {
    %c0_i32 = arith.constant 0 : i32
    %c0_i32_0 = arith.constant 0 : i32
    %c0_i32_1 = arith.constant 0 : i32
    return %c0_i32, %c0_i32_0 : i32, i32
  }
  func.func @transform_3(%arg0: i32) -> (i32, i32) {
    %c0_i32 = arith.constant 0 : i32
    %c0_i32_0 = arith.constant 0 : i32
    return %c0_i32, %arg0 : i32, i32
  }
}

module attributes {stable_mosaic.version = 11 : i64} {
  func.func @_wmm_bias_act_kernel(%arg0: i32, %arg1: memref<64x576xbf16, #tpu.memory_space<vmem>>, %arg2: memref<576x128xbf16, #tpu.memory_space<vmem>>, %arg3: memref<64x1xf32, #tpu.memory_space<vmem>>, %arg4: memref<64x128xbf16, #tpu.memory_space<vmem>>) attributes {dimension_semantics = [#tpu.dimension_semantics<parallel>], iteration_bounds = array<i64: 1>, scalar_prefetch = 0 : i64, scratch_operands = 0 : i64, tpu.core_type = #tpu.core_type<tc>, window_params = [{pipeline_mode = #tpu.pipeline_mode<synchronous>, transform_indices = @transform_0, window_bounds = array<i64: 64, 576>}, {transform_indices = @transform_1, window_bounds = array<i64: 576, 128>}, {pipeline_mode = #tpu.pipeline_mode<synchronous>, transform_indices = @transform_2, window_bounds = array<i64: 64, 1>}, {transform_indices = @transform_3, window_bounds = array<i64: 64, 128>}]} {
    %c0 = arith.constant 0 : index
    %c0_0 = arith.constant 0 : index
    %0 = vector.load %arg1[%c0, %c0_0] : memref<64x576xbf16, #tpu.memory_space<vmem>>, vector<64x576xbf16>
    %c0_1 = arith.constant 0 : index
    %c0_2 = arith.constant 0 : index
    %1 = vector.load %arg2[%c0_1, %c0_2] : memref<576x128xbf16, #tpu.memory_space<vmem>>, vector<576x128xbf16>
    %cst = arith.constant dense<0.000000e+00> : vector<64x128xf32>
    %2 = tpu.matmul %0, %1, %cst {dimension_numbers = #tpu.dot_dimension_numbers<[1], [0], [0], [1], [0, 0, 1, 1], [], []>} : vector<64x576xbf16>, vector<576x128xbf16>, vector<64x128xf32> -> vector<64x128xf32>
    %c0_3 = arith.constant 0 : index
    %c0_4 = arith.constant 0 : index
    %3 = vector.load %arg3[%c0_3, %c0_4] : memref<64x1xf32, #tpu.memory_space<vmem>>, vector<64x1xf32>
    %4 = vector.broadcast %3 : vector<64x1xf32> to vector<64x128xf32>
    %5 = arith.addf %2, %4 : vector<64x128xf32>
    %cst_5 = arith.constant 0.000000e+00 : f32
    %6 = vector.broadcast %cst_5 : f32 to vector<64x128xf32>
    %7 = arith.maximumf %5, %6 : vector<64x128xf32>
    %8 = arith.truncf %7 : vector<64x128xf32> to vector<64x128xbf16>
    %c0_6 = arith.constant 0 : index
    %c0_7 = arith.constant 0 : index
    %9 = vector.load %arg4[%c0_6, %c0_7] : memref<64x128xbf16, #tpu.memory_space<vmem>>, vector<64x128xbf16>
    tpu.vector_store %arg4[%c0_6, %c0_7], %8 {strides = array<i32>} : memref<64x128xbf16, #tpu.memory_space<vmem>>, vector<64x128xbf16>,
    return
  }
  func.func @transform_0(%arg0: i32) -> (i32, i32) {
    %c0_i32 = arith.constant 0 : i32
    %c0_i32_0 = arith.constant 0 : i32
    %c0_i32_1 = arith.constant 0 : i32
    return %c0_i32, %c0_i32_0 : i32, i32
  }
  func.func @transform_1(%arg0: i32) -> (i32, i32) {
    %c0_i32 = arith.constant 0 : i32
    %c0_i32_0 = arith.constant 0 : i32
    return %c0_i32, %arg0 : i32, i32
  }
  func.func @transform_2(%arg0: i32) -> (i32, i32) {
    %c0_i32 = arith.constant 0 : i32
    %c0_i32_0 = arith.constant 0 : i32
    %c0_i32_1 = arith.constant 0 : i32
    return %c0_i32, %c0_i32_0 : i32, i32
  }
  func.func @transform_3(%arg0: i32) -> (i32, i32) {
    %c0_i32 = arith.constant 0 : i32
    %c0_i32_0 = arith.constant 0 : i32
    return %c0_i32, %arg0 : i32, i32
  }
}

module attributes {stable_mosaic.version = 11 : i64} {
  func.func @_wmm_bias_act_kernel(%arg0: i32, %arg1: memref<32x128xbf16, #tpu.memory_space<vmem>>, %arg2: memref<128x128xbf16, #tpu.memory_space<vmem>>, %arg3: memref<32x1xf32, #tpu.memory_space<vmem>>, %arg4: memref<32x128xbf16, #tpu.memory_space<vmem>>) attributes {dimension_semantics = [#tpu.dimension_semantics<parallel>], iteration_bounds = array<i64: 1>, scalar_prefetch = 0 : i64, scratch_operands = 0 : i64, tpu.core_type = #tpu.core_type<tc>, window_params = [{pipeline_mode = #tpu.pipeline_mode<synchronous>, transform_indices = @transform_0, window_bounds = array<i64: 32, 128>}, {transform_indices = @transform_1, window_bounds = array<i64: 128, 128>}, {pipeline_mode = #tpu.pipeline_mode<synchronous>, transform_indices = @transform_2, window_bounds = array<i64: 32, 1>}, {transform_indices = @transform_3, window_bounds = array<i64: 32, 128>}]} {
    %c0 = arith.constant 0 : index
    %c0_0 = arith.constant 0 : index
    %0 = vector.load %arg1[%c0, %c0_0] : memref<32x128xbf16, #tpu.memory_space<vmem>>, vector<32x128xbf16>
    %c0_1 = arith.constant 0 : index
    %c0_2 = arith.constant 0 : index
    %1 = vector.load %arg2[%c0_1, %c0_2] : memref<128x128xbf16, #tpu.memory_space<vmem>>, vector<128x128xbf16>
    %cst = arith.constant dense<0.000000e+00> : vector<32x128xf32>
    %2 = tpu.matmul %0, %1, %cst {dimension_numbers = #tpu.dot_dimension_numbers<[1], [0], [0], [1], [0, 0, 1, 1], [], []>} : vector<32x128xbf16>, vector<128x128xbf16>, vector<32x128xf32> -> vector<32x128xf32>
    %c0_3 = arith.constant 0 : index
    %c0_4 = arith.constant 0 : index
    %3 = vector.load %arg3[%c0_3, %c0_4] : memref<32x1xf32, #tpu.memory_space<vmem>>, vector<32x1xf32>
    %4 = vector.broadcast %3 : vector<32x1xf32> to vector<32x128xf32>
    %5 = arith.addf %2, %4 : vector<32x128xf32>
    %cst_5 = arith.constant 0.000000e+00 : f32
    %6 = vector.broadcast %cst_5 : f32 to vector<32x128xf32>
    %7 = arith.maximumf %5, %6 : vector<32x128xf32>
    %8 = arith.truncf %7 : vector<32x128xf32> to vector<32x128xbf16>
    %c0_6 = arith.constant 0 : index
    %c0_7 = arith.constant 0 : index
    %9 = vector.load %arg4[%c0_6, %c0_7] : memref<32x128xbf16, #tpu.memory_space<vmem>>, vector<32x128xbf16>
    tpu.vector_store %arg4[%c0_6, %c0_7], %8 {strides = array<i32>} : memref<32x128xbf16, #tpu.memory_space<vmem>>, vector<32x128xbf16>,
    return
  }
  func.func @transform_0(%arg0: i32) -> (i32, i32) {
    %c0_i32 = arith.constant 0 : i32
    %c0_i32_0 = arith.constant 0 : i32
    %c0_i32_1 = arith.constant 0 : i32
    return %c0_i32, %c0_i32_0 : i32, i32
  }
  func.func @transform_1(%arg0: i32) -> (i32, i32) {
    %c0_i32 = arith.constant 0 : i32
    %c0_i32_0 = arith.constant 0 : i32
    return %c0_i32, %arg0 : i32, i32
  }
  func.func @transform_2(%arg0: i32) -> (i32, i32) {
    %c0_i32 = arith.constant 0 : i32
    %c0_i32_0 = arith.constant 0 : i32
    %c0_i32_1 = arith.constant 0 : i32
    return %c0_i32, %c0_i32_0 : i32, i32
  }
  func.func @transform_3(%arg0: i32) -> (i32, i32) {
    %c0_i32 = arith.constant 0 : i32
    %c0_i32_0 = arith.constant 0 : i32
    return %c0_i32, %arg0 : i32, i32
  }
}

module attributes {stable_mosaic.version = 11 : i64} {
  func.func @_wmm_bias_act_kernel(%arg0: i32, %arg1: memref<32x64xbf16, #tpu.memory_space<vmem>>, %arg2: memref<64x128xbf16, #tpu.memory_space<vmem>>, %arg3: memref<32x1xf32, #tpu.memory_space<vmem>>, %arg4: memref<32x128xbf16, #tpu.memory_space<vmem>>) attributes {dimension_semantics = [#tpu.dimension_semantics<parallel>], iteration_bounds = array<i64: 1>, scalar_prefetch = 0 : i64, scratch_operands = 0 : i64, tpu.core_type = #tpu.core_type<tc>, window_params = [{pipeline_mode = #tpu.pipeline_mode<synchronous>, transform_indices = @transform_0, window_bounds = array<i64: 32, 64>}, {transform_indices = @transform_1, window_bounds = array<i64: 64, 128>}, {pipeline_mode = #tpu.pipeline_mode<synchronous>, transform_indices = @transform_2, window_bounds = array<i64: 32, 1>}, {transform_indices = @transform_3, window_bounds = array<i64: 32, 128>}]} {
    %c0 = arith.constant 0 : index
    %c0_0 = arith.constant 0 : index
    %0 = vector.load %arg1[%c0, %c0_0] : memref<32x64xbf16, #tpu.memory_space<vmem>>, vector<32x64xbf16>
    %c0_1 = arith.constant 0 : index
    %c0_2 = arith.constant 0 : index
    %1 = vector.load %arg2[%c0_1, %c0_2] : memref<64x128xbf16, #tpu.memory_space<vmem>>, vector<64x128xbf16>
    %cst = arith.constant dense<0.000000e+00> : vector<32x128xf32>
    %2 = tpu.matmul %0, %1, %cst {dimension_numbers = #tpu.dot_dimension_numbers<[1], [0], [0], [1], [0, 0, 1, 1], [], []>} : vector<32x64xbf16>, vector<64x128xbf16>, vector<32x128xf32> -> vector<32x128xf32>
    %c0_3 = arith.constant 0 : index
    %c0_4 = arith.constant 0 : index
    %3 = vector.load %arg3[%c0_3, %c0_4] : memref<32x1xf32, #tpu.memory_space<vmem>>, vector<32x1xf32>
    %4 = vector.broadcast %3 : vector<32x1xf32> to vector<32x128xf32>
    %5 = arith.addf %2, %4 : vector<32x128xf32>
    %cst_5 = arith.constant 0.000000e+00 : f32
    %6 = vector.broadcast %cst_5 : f32 to vector<32x128xf32>
    %7 = arith.maximumf %5, %6 : vector<32x128xf32>
    %8 = arith.truncf %7 : vector<32x128xf32> to vector<32x128xbf16>
    %c0_6 = arith.constant 0 : index
    %c0_7 = arith.constant 0 : index
    %9 = vector.load %arg4[%c0_6, %c0_7] : memref<32x128xbf16, #tpu.memory_space<vmem>>, vector<32x128xbf16>
    tpu.vector_store %arg4[%c0_6, %c0_7], %8 {strides = array<i32>} : memref<32x128xbf16, #tpu.memory_space<vmem>>, vector<32x128xbf16>,
    return
  }
  func.func @transform_0(%arg0: i32) -> (i32, i32) {
    %c0_i32 = arith.constant 0 : i32
    %c0_i32_0 = arith.constant 0 : i32
    %c0_i32_1 = arith.constant 0 : i32
    return %c0_i32, %c0_i32_0 : i32, i32
  }
  func.func @transform_1(%arg0: i32) -> (i32, i32) {
    %c0_i32 = arith.constant 0 : i32
    %c0_i32_0 = arith.constant 0 : i32
    return %c0_i32, %arg0 : i32, i32
  }
  func.func @transform_2(%arg0: i32) -> (i32, i32) {
    %c0_i32 = arith.constant 0 : i32
    %c0_i32_0 = arith.constant 0 : i32
    %c0_i32_1 = arith.constant 0 : i32
    return %c0_i32, %c0_i32_0 : i32, i32
  }
  func.func @transform_3(%arg0: i32) -> (i32, i32) {
    %c0_i32 = arith.constant 0 : i32
    %c0_i32_0 = arith.constant 0 : i32
    return %c0_i32, %arg0 : i32, i32
  }
}

module attributes {stable_mosaic.version = 11 : i64} {
  func.func @_wmm_bias_act_kernel(%arg0: i32, %arg1: memref<32x256xbf16, #tpu.memory_space<vmem>>, %arg2: memref<256x128xbf16, #tpu.memory_space<vmem>>, %arg3: memref<32x1xf32, #tpu.memory_space<vmem>>, %arg4: memref<32x128xbf16, #tpu.memory_space<vmem>>) attributes {dimension_semantics = [#tpu.dimension_semantics<parallel>], iteration_bounds = array<i64: 1>, scalar_prefetch = 0 : i64, scratch_operands = 0 : i64, tpu.core_type = #tpu.core_type<tc>, window_params = [{pipeline_mode = #tpu.pipeline_mode<synchronous>, transform_indices = @transform_0, window_bounds = array<i64: 32, 256>}, {transform_indices = @transform_1, window_bounds = array<i64: 256, 128>}, {pipeline_mode = #tpu.pipeline_mode<synchronous>, transform_indices = @transform_2, window_bounds = array<i64: 32, 1>}, {transform_indices = @transform_3, window_bounds = array<i64: 32, 128>}]} {
    %c0 = arith.constant 0 : index
    %c0_0 = arith.constant 0 : index
    %0 = vector.load %arg1[%c0, %c0_0] : memref<32x256xbf16, #tpu.memory_space<vmem>>, vector<32x256xbf16>
    %c0_1 = arith.constant 0 : index
    %c0_2 = arith.constant 0 : index
    %1 = vector.load %arg2[%c0_1, %c0_2] : memref<256x128xbf16, #tpu.memory_space<vmem>>, vector<256x128xbf16>
    %cst = arith.constant dense<0.000000e+00> : vector<32x128xf32>
    %2 = tpu.matmul %0, %1, %cst {dimension_numbers = #tpu.dot_dimension_numbers<[1], [0], [0], [1], [0, 0, 1, 1], [], []>} : vector<32x256xbf16>, vector<256x128xbf16>, vector<32x128xf32> -> vector<32x128xf32>
    %c0_3 = arith.constant 0 : index
    %c0_4 = arith.constant 0 : index
    %3 = vector.load %arg3[%c0_3, %c0_4] : memref<32x1xf32, #tpu.memory_space<vmem>>, vector<32x1xf32>
    %4 = vector.broadcast %3 : vector<32x1xf32> to vector<32x128xf32>
    %5 = arith.addf %2, %4 : vector<32x128xf32>
    %cst_5 = arith.constant 0.000000e+00 : f32
    %6 = vector.broadcast %cst_5 : f32 to vector<32x128xf32>
    %7 = arith.maximumf %5, %6 : vector<32x128xf32>
    %8 = arith.truncf %7 : vector<32x128xf32> to vector<32x128xbf16>
    %c0_6 = arith.constant 0 : index
    %c0_7 = arith.constant 0 : index
    %9 = vector.load %arg4[%c0_6, %c0_7] : memref<32x128xbf16, #tpu.memory_space<vmem>>, vector<32x128xbf16>
    tpu.vector_store %arg4[%c0_6, %c0_7], %8 {strides = array<i32>} : memref<32x128xbf16, #tpu.memory_space<vmem>>, vector<32x128xbf16>,
    return
  }
  func.func @transform_0(%arg0: i32) -> (i32, i32) {
    %c0_i32 = arith.constant 0 : i32
    %c0_i32_0 = arith.constant 0 : i32
    %c0_i32_1 = arith.constant 0 : i32
    return %c0_i32, %c0_i32_0 : i32, i32
  }
  func.func @transform_1(%arg0: i32) -> (i32, i32) {
    %c0_i32 = arith.constant 0 : i32
    %c0_i32_0 = arith.constant 0 : i32
    return %c0_i32, %arg0 : i32, i32
  }
  func.func @transform_2(%arg0: i32) -> (i32, i32) {
    %c0_i32 = arith.constant 0 : i32
    %c0_i32_0 = arith.constant 0 : i32
    %c0_i32_1 = arith.constant 0 : i32
    return %c0_i32, %c0_i32_0 : i32, i32
  }
  func.func @transform_3(%arg0: i32) -> (i32, i32) {
    %c0_i32 = arith.constant 0 : i32
    %c0_i32_0 = arith.constant 0 : i32
    return %c0_i32, %arg0 : i32, i32
  }
}

module attributes {stable_mosaic.version = 11 : i64} {
  func.func @_wmm_bias_act_kernel(%arg0: i32, %arg1: memref<16x64xbf16, #tpu.memory_space<vmem>>, %arg2: memref<64x128xbf16, #tpu.memory_space<vmem>>, %arg3: memref<16x1xf32, #tpu.memory_space<vmem>>, %arg4: memref<16x128xbf16, #tpu.memory_space<vmem>>) attributes {dimension_semantics = [#tpu.dimension_semantics<parallel>], iteration_bounds = array<i64: 1>, scalar_prefetch = 0 : i64, scratch_operands = 0 : i64, tpu.core_type = #tpu.core_type<tc>, window_params = [{pipeline_mode = #tpu.pipeline_mode<synchronous>, transform_indices = @transform_0, window_bounds = array<i64: 16, 64>}, {transform_indices = @transform_1, window_bounds = array<i64: 64, 128>}, {pipeline_mode = #tpu.pipeline_mode<synchronous>, transform_indices = @transform_2, window_bounds = array<i64: 16, 1>}, {transform_indices = @transform_3, window_bounds = array<i64: 16, 128>}]} {
    %c0 = arith.constant 0 : index
    %c0_0 = arith.constant 0 : index
    %0 = vector.load %arg1[%c0, %c0_0] : memref<16x64xbf16, #tpu.memory_space<vmem>>, vector<16x64xbf16>
    %c0_1 = arith.constant 0 : index
    %c0_2 = arith.constant 0 : index
    %1 = vector.load %arg2[%c0_1, %c0_2] : memref<64x128xbf16, #tpu.memory_space<vmem>>, vector<64x128xbf16>
    %cst = arith.constant dense<0.000000e+00> : vector<16x128xf32>
    %2 = tpu.matmul %0, %1, %cst {dimension_numbers = #tpu.dot_dimension_numbers<[1], [0], [0], [1], [0, 0, 1, 1], [], []>} : vector<16x64xbf16>, vector<64x128xbf16>, vector<16x128xf32> -> vector<16x128xf32>
    %c0_3 = arith.constant 0 : index
    %c0_4 = arith.constant 0 : index
    %3 = vector.load %arg3[%c0_3, %c0_4] : memref<16x1xf32, #tpu.memory_space<vmem>>, vector<16x1xf32>
    %4 = vector.broadcast %3 : vector<16x1xf32> to vector<16x128xf32>
    %5 = arith.addf %2, %4 : vector<16x128xf32>
    %cst_5 = arith.constant 0.000000e+00 : f32
    %6 = vector.broadcast %cst_5 : f32 to vector<16x128xf32>
    %7 = arith.maximumf %5, %6 : vector<16x128xf32>
    %8 = arith.truncf %7 : vector<16x128xf32> to vector<16x128xbf16>
    %c0_6 = arith.constant 0 : index
    %c0_7 = arith.constant 0 : index
    %9 = vector.load %arg4[%c0_6, %c0_7] : memref<16x128xbf16, #tpu.memory_space<vmem>>, vector<16x128xbf16>
    tpu.vector_store %arg4[%c0_6, %c0_7], %8 {strides = array<i32>} : memref<16x128xbf16, #tpu.memory_space<vmem>>, vector<16x128xbf16>,
    return
  }
  func.func @transform_0(%arg0: i32) -> (i32, i32) {
    %c0_i32 = arith.constant 0 : i32
    %c0_i32_0 = arith.constant 0 : i32
    %c0_i32_1 = arith.constant 0 : i32
    return %c0_i32, %c0_i32_0 : i32, i32
  }
  func.func @transform_1(%arg0: i32) -> (i32, i32) {
    %c0_i32 = arith.constant 0 : i32
    %c0_i32_0 = arith.constant 0 : i32
    return %c0_i32, %arg0 : i32, i32
  }
  func.func @transform_2(%arg0: i32) -> (i32, i32) {
    %c0_i32 = arith.constant 0 : i32
    %c0_i32_0 = arith.constant 0 : i32
    %c0_i32_1 = arith.constant 0 : i32
    return %c0_i32, %c0_i32_0 : i32, i32
  }
  func.func @transform_3(%arg0: i32) -> (i32, i32) {
    %c0_i32 = arith.constant 0 : i32
    %c0_i32_0 = arith.constant 0 : i32
    return %c0_i32, %arg0 : i32, i32
  }
}

module attributes {stable_mosaic.version = 11 : i64} {
  func.func @_wmm_bias_act_kernel(%arg0: i32, %arg1: memref<16x128xbf16, #tpu.memory_space<vmem>>, %arg2: memref<128x128xbf16, #tpu.memory_space<vmem>>, %arg3: memref<16x1xf32, #tpu.memory_space<vmem>>, %arg4: memref<16x128xbf16, #tpu.memory_space<vmem>>) attributes {dimension_semantics = [#tpu.dimension_semantics<parallel>], iteration_bounds = array<i64: 1>, scalar_prefetch = 0 : i64, scratch_operands = 0 : i64, tpu.core_type = #tpu.core_type<tc>, window_params = [{pipeline_mode = #tpu.pipeline_mode<synchronous>, transform_indices = @transform_0, window_bounds = array<i64: 16, 128>}, {transform_indices = @transform_1, window_bounds = array<i64: 128, 128>}, {pipeline_mode = #tpu.pipeline_mode<synchronous>, transform_indices = @transform_2, window_bounds = array<i64: 16, 1>}, {transform_indices = @transform_3, window_bounds = array<i64: 16, 128>}]} {
    %c0 = arith.constant 0 : index
    %c0_0 = arith.constant 0 : index
    %0 = vector.load %arg1[%c0, %c0_0] : memref<16x128xbf16, #tpu.memory_space<vmem>>, vector<16x128xbf16>
    %c0_1 = arith.constant 0 : index
    %c0_2 = arith.constant 0 : index
    %1 = vector.load %arg2[%c0_1, %c0_2] : memref<128x128xbf16, #tpu.memory_space<vmem>>, vector<128x128xbf16>
    %cst = arith.constant dense<0.000000e+00> : vector<16x128xf32>
    %2 = tpu.matmul %0, %1, %cst {dimension_numbers = #tpu.dot_dimension_numbers<[1], [0], [0], [1], [0, 0, 1, 1], [], []>} : vector<16x128xbf16>, vector<128x128xbf16>, vector<16x128xf32> -> vector<16x128xf32>
    %c0_3 = arith.constant 0 : index
    %c0_4 = arith.constant 0 : index
    %3 = vector.load %arg3[%c0_3, %c0_4] : memref<16x1xf32, #tpu.memory_space<vmem>>, vector<16x1xf32>
    %4 = vector.broadcast %3 : vector<16x1xf32> to vector<16x128xf32>
    %5 = arith.addf %2, %4 : vector<16x128xf32>
    %cst_5 = arith.constant 0.000000e+00 : f32
    %6 = vector.broadcast %cst_5 : f32 to vector<16x128xf32>
    %7 = arith.maximumf %5, %6 : vector<16x128xf32>
    %8 = arith.truncf %7 : vector<16x128xf32> to vector<16x128xbf16>
    %c0_6 = arith.constant 0 : index
    %c0_7 = arith.constant 0 : index
    %9 = vector.load %arg4[%c0_6, %c0_7] : memref<16x128xbf16, #tpu.memory_space<vmem>>, vector<16x128xbf16>
    tpu.vector_store %arg4[%c0_6, %c0_7], %8 {strides = array<i32>} : memref<16x128xbf16, #tpu.memory_space<vmem>>, vector<16x128xbf16>,
    return
  }
  func.func @transform_0(%arg0: i32) -> (i32, i32) {
    %c0_i32 = arith.constant 0 : i32
    %c0_i32_0 = arith.constant 0 : i32
    %c0_i32_1 = arith.constant 0 : i32
    return %c0_i32, %c0_i32_0 : i32, i32
  }
  func.func @transform_1(%arg0: i32) -> (i32, i32) {
    %c0_i32 = arith.constant 0 : i32
    %c0_i32_0 = arith.constant 0 : i32
    return %c0_i32, %arg0 : i32, i32
  }
  func.func @transform_2(%arg0: i32) -> (i32, i32) {
    %c0_i32 = arith.constant 0 : i32
    %c0_i32_0 = arith.constant 0 : i32
    %c0_i32_1 = arith.constant 0 : i32
    return %c0_i32, %c0_i32_0 : i32, i32
  }
  func.func @transform_3(%arg0: i32) -> (i32, i32) {
    %c0_i32 = arith.constant 0 : i32
    %c0_i32_0 = arith.constant 0 : i32
    return %c0_i32, %arg0 : i32, i32
  }
}

module attributes {stable_mosaic.version = 11 : i64} {
  func.func @_wmm_bias_act_kernel(%arg0: i32, %arg1: memref<16x256xbf16, #tpu.memory_space<vmem>>, %arg2: memref<256x128xbf16, #tpu.memory_space<vmem>>, %arg3: memref<16x1xf32, #tpu.memory_space<vmem>>, %arg4: memref<16x128xbf16, #tpu.memory_space<vmem>>) attributes {dimension_semantics = [#tpu.dimension_semantics<parallel>], iteration_bounds = array<i64: 1>, scalar_prefetch = 0 : i64, scratch_operands = 0 : i64, tpu.core_type = #tpu.core_type<tc>, window_params = [{pipeline_mode = #tpu.pipeline_mode<synchronous>, transform_indices = @transform_0, window_bounds = array<i64: 16, 256>}, {transform_indices = @transform_1, window_bounds = array<i64: 256, 128>}, {pipeline_mode = #tpu.pipeline_mode<synchronous>, transform_indices = @transform_2, window_bounds = array<i64: 16, 1>}, {transform_indices = @transform_3, window_bounds = array<i64: 16, 128>}]} {
    %c0 = arith.constant 0 : index
    %c0_0 = arith.constant 0 : index
    %0 = vector.load %arg1[%c0, %c0_0] : memref<16x256xbf16, #tpu.memory_space<vmem>>, vector<16x256xbf16>
    %c0_1 = arith.constant 0 : index
    %c0_2 = arith.constant 0 : index
    %1 = vector.load %arg2[%c0_1, %c0_2] : memref<256x128xbf16, #tpu.memory_space<vmem>>, vector<256x128xbf16>
    %cst = arith.constant dense<0.000000e+00> : vector<16x128xf32>
    %2 = tpu.matmul %0, %1, %cst {dimension_numbers = #tpu.dot_dimension_numbers<[1], [0], [0], [1], [0, 0, 1, 1], [], []>} : vector<16x256xbf16>, vector<256x128xbf16>, vector<16x128xf32> -> vector<16x128xf32>
    %c0_3 = arith.constant 0 : index
    %c0_4 = arith.constant 0 : index
    %3 = vector.load %arg3[%c0_3, %c0_4] : memref<16x1xf32, #tpu.memory_space<vmem>>, vector<16x1xf32>
    %4 = vector.broadcast %3 : vector<16x1xf32> to vector<16x128xf32>
    %5 = arith.addf %2, %4 : vector<16x128xf32>
    %cst_5 = arith.constant 0.000000e+00 : f32
    %6 = vector.broadcast %cst_5 : f32 to vector<16x128xf32>
    %7 = arith.maximumf %5, %6 : vector<16x128xf32>
    %8 = arith.truncf %7 : vector<16x128xf32> to vector<16x128xbf16>
    %c0_6 = arith.constant 0 : index
    %c0_7 = arith.constant 0 : index
    %9 = vector.load %arg4[%c0_6, %c0_7] : memref<16x128xbf16, #tpu.memory_space<vmem>>, vector<16x128xbf16>
    tpu.vector_store %arg4[%c0_6, %c0_7], %8 {strides = array<i32>} : memref<16x128xbf16, #tpu.memory_space<vmem>>, vector<16x128xbf16>,
    return
  }
  func.func @transform_0(%arg0: i32) -> (i32, i32) {
    %c0_i32 = arith.constant 0 : i32
    %c0_i32_0 = arith.constant 0 : i32
    %c0_i32_1 = arith.constant 0 : i32
    return %c0_i32, %c0_i32_0 : i32, i32
  }
  func.func @transform_1(%arg0: i32) -> (i32, i32) {
    %c0_i32 = arith.constant 0 : i32
    %c0_i32_0 = arith.constant 0 : i32
    return %c0_i32, %arg0 : i32, i32
  }
  func.func @transform_2(%arg0: i32) -> (i32, i32) {
    %c0_i32 = arith.constant 0 : i32
    %c0_i32_0 = arith.constant 0 : i32
    %c0_i32_1 = arith.constant 0 : i32
    return %c0_i32, %c0_i32_0 : i32, i32
  }
  func.func @transform_3(%arg0: i32) -> (i32, i32) {
    %c0_i32 = arith.constant 0 : i32
    %c0_i32_0 = arith.constant 0 : i32
    return %c0_i32, %arg0 : i32, i32
  }
}

module attributes {stable_mosaic.version = 11 : i64} {
  func.func @_wmm_bias_act_kernel(%arg0: i32, %arg1: memref<1x2xbf16, #tpu.memory_space<vmem>>, %arg2: memref<2x128xbf16, #tpu.memory_space<vmem>>, %arg3: memref<1x1xf32, #tpu.memory_space<vmem>>, %arg4: memref<1x128xf32, #tpu.memory_space<vmem>>) attributes {dimension_semantics = [#tpu.dimension_semantics<parallel>], iteration_bounds = array<i64: 1>, scalar_prefetch = 0 : i64, scratch_operands = 0 : i64, tpu.core_type = #tpu.core_type<tc>, window_params = [{pipeline_mode = #tpu.pipeline_mode<synchronous>, transform_indices = @transform_0, window_bounds = array<i64: 1, 2>}, {transform_indices = @transform_1, window_bounds = array<i64: 2, 128>}, {pipeline_mode = #tpu.pipeline_mode<synchronous>, transform_indices = @transform_2, window_bounds = array<i64: 1, 1>}, {transform_indices = @transform_3, window_bounds = array<i64: 1, 128>}]} {
    %c0 = arith.constant 0 : index
    %c0_0 = arith.constant 0 : index
    %0 = vector.load %arg1[%c0, %c0_0] : memref<1x2xbf16, #tpu.memory_space<vmem>>, vector<1x2xbf16>
    %c0_1 = arith.constant 0 : index
    %c0_2 = arith.constant 0 : index
    %1 = vector.load %arg2[%c0_1, %c0_2] : memref<2x128xbf16, #tpu.memory_space<vmem>>, vector<2x128xbf16>
    %cst = arith.constant dense<0.000000e+00> : vector<1x128xf32>
    %2 = tpu.matmul %0, %1, %cst {dimension_numbers = #tpu.dot_dimension_numbers<[1], [0], [0], [1], [0, 0, 1, 1], [], []>} : vector<1x2xbf16>, vector<2x128xbf16>, vector<1x128xf32> -> vector<1x128xf32>
    %c0_3 = arith.constant 0 : index
    %c0_4 = arith.constant 0 : index
    %3 = vector.load %arg3[%c0_3, %c0_4] : memref<1x1xf32, #tpu.memory_space<vmem>>, vector<1x1xf32>
    %4 = vector.broadcast %3 : vector<1x1xf32> to vector<1x128xf32>
    %5 = arith.addf %2, %4 : vector<1x128xf32>
    %c0_5 = arith.constant 0 : index
    %c0_6 = arith.constant 0 : index
    %6 = vector.load %arg4[%c0_5, %c0_6] : memref<1x128xf32, #tpu.memory_space<vmem>>, vector<1x128xf32>
    tpu.vector_store %arg4[%c0_5, %c0_6], %5 {strides = array<i32>} : memref<1x128xf32, #tpu.memory_space<vmem>>, vector<1x128xf32>,
    return
  }
  func.func @transform_0(%arg0: i32) -> (i32, i32) {
    %c0_i32 = arith.constant 0 : i32
    %c0_i32_0 = arith.constant 0 : i32
    %c0_i32_1 = arith.constant 0 : i32
    return %c0_i32, %c0_i32_0 : i32, i32
  }
  func.func @transform_1(%arg0: i32) -> (i32, i32) {
    %c0_i32 = arith.constant 0 : i32
    %c0_i32_0 = arith.constant 0 : i32
    return %c0_i32, %arg0 : i32, i32
  }
  func.func @transform_2(%arg0: i32) -> (i32, i32) {
    %c0_i32 = arith.constant 0 : i32
    %c0_i32_0 = arith.constant 0 : i32
    %c0_i32_1 = arith.constant 0 : i32
    return %c0_i32, %c0_i32_0 : i32, i32
  }
  func.func @transform_3(%arg0: i32) -> (i32, i32) {
    %c0_i32 = arith.constant 0 : i32
    %c0_i32_0 = arith.constant 0 : i32
    return %c0_i32, %arg0 : i32, i32
  }
}

module attributes {stable_mosaic.version = 11 : i64} {
  func.func @_convout_cc_kernel(%arg0: i32, %arg1: memref<9x288xbf16, #tpu.memory_space<vmem>>, %arg2: memref<288x256xbf16, #tpu.memory_space<vmem>>, %arg3: memref<9x1xf32, #tpu.memory_space<vmem>>, %arg4: memref<3x256xf32, #tpu.memory_space<vmem>>, %arg5: memref<3x256xf32, #tpu.memory_space<vmem>>) attributes {dimension_semantics = [#tpu.dimension_semantics<parallel>], iteration_bounds = array<i64: 2>, scalar_prefetch = 0 : i64, scratch_operands = 0 : i64, tpu.core_type = #tpu.core_type<tc>, window_params = [{pipeline_mode = #tpu.pipeline_mode<synchronous>, transform_indices = @transform_0, window_bounds = array<i64: 9, 288>}, {transform_indices = @transform_1, window_bounds = array<i64: 288, 256>}, {pipeline_mode = #tpu.pipeline_mode<synchronous>, transform_indices = @transform_2, window_bounds = array<i64: 9, 1>}, {transform_indices = @transform_3, window_bounds = array<i64: 3, 256>}, {transform_indices = @transform_4, window_bounds = array<i64: 3, 256>}]} {
    %c0 = arith.constant 0 : index
    %c0_0 = arith.constant 0 : index
    %0 = vector.load %arg1[%c0, %c0_0] : memref<9x288xbf16, #tpu.memory_space<vmem>>, vector<9x288xbf16>
    %c0_1 = arith.constant 0 : index
    %c0_2 = arith.constant 0 : index
    %1 = vector.load %arg2[%c0_1, %c0_2] : memref<288x256xbf16, #tpu.memory_space<vmem>>, vector<288x256xbf16>
    %cst = arith.constant dense<0.000000e+00> : vector<9x256xf32>
    %2 = tpu.matmul %0, %1, %cst {dimension_numbers = #tpu.dot_dimension_numbers<[1], [0], [0], [1], [0, 0, 1, 1], [], []>} : vector<9x288xbf16>, vector<288x256xbf16>, vector<9x256xf32> -> vector<9x256xf32>
    %c0_3 = arith.constant 0 : index
    %c0_4 = arith.constant 0 : index
    %3 = vector.load %arg3[%c0_3, %c0_4] : memref<9x1xf32, #tpu.memory_space<vmem>>, vector<9x1xf32>
    %4 = vector.broadcast %3 : vector<9x1xf32> to vector<9x256xf32>
    %5 = arith.addf %2, %4 : vector<9x256xf32>
    %cst_5 = arith.constant 0.000000e+00 : f32
    %6 = vector.broadcast %cst_5 : f32 to vector<9x256xf32>
    %7 = arith.maximumf %5, %6 : vector<9x256xf32>
    %c0_6 = arith.constant 0 : index
    %c0_7 = arith.constant 0 : index
    %8 = vector.load %arg4[%c0_6, %c0_7] : memref<3x256xf32, #tpu.memory_space<vmem>>, vector<3x256xf32>
    %9 = vector.extract_strided_slice %8 {offsets = [0, 0], sizes = [1, 256], strides = [1, 1]} : vector<3x256xf32> to vector<1x256xf32>
    %10 = vector.extract_strided_slice %7 {offsets = [0, 0], sizes = [1, 256], strides = [1, 1]} : vector<9x256xf32> to vector<1x256xf32>
    %11 = arith.mulf %9, %10 : vector<1x256xf32>
    %12 = vector.extract_strided_slice %8 {offsets = [1, 0], sizes = [1, 256], strides = [1, 1]} : vector<3x256xf32> to vector<1x256xf32>
    %13 = vector.extract_strided_slice %7 {offsets = [1, 0], sizes = [1, 256], strides = [1, 1]} : vector<9x256xf32> to vector<1x256xf32>
    %14 = arith.mulf %12, %13 : vector<1x256xf32>
    %15 = arith.addf %11, %14 : vector<1x256xf32>
    %16 = vector.extract_strided_slice %8 {offsets = [2, 0], sizes = [1, 256], strides = [1, 1]} : vector<3x256xf32> to vector<1x256xf32>
    %17 = vector.extract_strided_slice %7 {offsets = [2, 0], sizes = [1, 256], strides = [1, 1]} : vector<9x256xf32> to vector<1x256xf32>
    %18 = arith.mulf %16, %17 : vector<1x256xf32>
    %19 = arith.addf %15, %18 : vector<1x256xf32>
    %20 = vector.extract_strided_slice %8 {offsets = [0, 0], sizes = [1, 256], strides = [1, 1]} : vector<3x256xf32> to vector<1x256xf32>
    %21 = vector.extract_strided_slice %7 {offsets = [3, 0], sizes = [1, 256], strides = [1, 1]} : vector<9x256xf32> to vector<1x256xf32>
    %22 = arith.mulf %20, %21 : vector<1x256xf32>
    %23 = vector.extract_strided_slice %8 {offsets = [1, 0], sizes = [1, 256], strides = [1, 1]} : vector<3x256xf32> to vector<1x256xf32>
    %24 = vector.extract_strided_slice %7 {offsets = [4, 0], sizes = [1, 256], strides = [1, 1]} : vector<9x256xf32> to vector<1x256xf32>
    %25 = arith.mulf %23, %24 : vector<1x256xf32>
    %26 = arith.addf %22, %25 : vector<1x256xf32>
    %27 = vector.extract_strided_slice %8 {offsets = [2, 0], sizes = [1, 256], strides = [1, 1]} : vector<3x256xf32> to vector<1x256xf32>
    %28 = vector.extract_strided_slice %7 {offsets = [5, 0], sizes = [1, 256], strides = [1, 1]} : vector<9x256xf32> to vector<1x256xf32>
    %29 = arith.mulf %27, %28 : vector<1x256xf32>
    %30 = arith.addf %26, %29 : vector<1x256xf32>
    %31 = vector.extract_strided_slice %8 {offsets = [0, 0], sizes = [1, 256], strides = [1, 1]} : vector<3x256xf32> to vector<1x256xf32>
    %32 = vector.extract_strided_slice %7 {offsets = [6, 0], sizes = [1, 256], strides = [1, 1]} : vector<9x256xf32> to vector<1x256xf32>
    %33 = arith.mulf %31, %32 : vector<1x256xf32>
    %34 = vector.extract_strided_slice %8 {offsets = [1, 0], sizes = [1, 256], strides = [1, 1]} : vector<3x256xf32> to vector<1x256xf32>
    %35 = vector.extract_strided_slice %7 {offsets = [7, 0], sizes = [1, 256], strides = [1, 1]} : vector<9x256xf32> to vector<1x256xf32>
    %36 = arith.mulf %34, %35 : vector<1x256xf32>
    %37 = arith.addf %33, %36 : vector<1x256xf32>
    %38 = vector.extract_strided_slice %8 {offsets = [2, 0], sizes = [1, 256], strides = [1, 1]} : vector<3x256xf32> to vector<1x256xf32>
    %39 = vector.extract_strided_slice %7 {offsets = [8, 0], sizes = [1, 256], strides = [1, 1]} : vector<9x256xf32> to vector<1x256xf32>
    %40 = arith.mulf %38, %39 : vector<1x256xf32>
    %41 = arith.addf %37, %40 : vector<1x256xf32>
    %42 = tpu.concatenate %19, %30, %41 in 0 : vector<1x256xf32>, vector<1x256xf32>, vector<1x256xf32> -> vector<3x256xf32>
    %c0_8 = arith.constant 0 : index
    %c0_9 = arith.constant 0 : index
    %43 = vector.load %arg5[%c0_8, %c0_9] : memref<3x256xf32, #tpu.memory_space<vmem>>, vector<3x256xf32>
    tpu.vector_store %arg5[%c0_8, %c0_9], %42 {strides = array<i32>} : memref<3x256xf32, #tpu.memory_space<vmem>>, vector<3x256xf32>,
    return
  }
  func.func @transform_0(%arg0: i32) -> (i32, i32) {
    %c0_i32 = arith.constant 0 : i32
    %c0_i32_0 = arith.constant 0 : i32
    %c0_i32_1 = arith.constant 0 : i32
    return %c0_i32, %c0_i32_0 : i32, i32
  }
  func.func @transform_1(%arg0: i32) -> (i32, i32) {
    %c0_i32 = arith.constant 0 : i32
    %c0_i32_0 = arith.constant 0 : i32
    return %c0_i32, %arg0 : i32, i32
  }
  func.func @transform_2(%arg0: i32) -> (i32, i32) {
    %c0_i32 = arith.constant 0 : i32
    %c0_i32_0 = arith.constant 0 : i32
    %c0_i32_1 = arith.constant 0 : i32
    return %c0_i32, %c0_i32_0 : i32, i32
  }
  func.func @transform_3(%arg0: i32) -> (i32, i32) {
    %c0_i32 = arith.constant 0 : i32
    %c0_i32_0 = arith.constant 0 : i32
    return %c0_i32, %arg0 : i32, i32
  }
  func.func @transform_4(%arg0: i32) -> (i32, i32) {
    %c0_i32 = arith.constant 0 : i32
    %c0_i32_0 = arith.constant 0 : i32
    return %c0_i32, %arg0 : i32, i32
  }
}

</mosaic_0001>

<llo_original>
// kernel: rawvsr_forward.15
$region0: #{rawvsr_forward.15}
  #allocation0 [shape = 'u32[]', space=smem, size = 0x4, offset = 0x4, fixed_abs, tag = 'smem constant byte address 0x4 - core index']
  #allocation1 [shape = 'u32[144,128]{1,0:T(1,128)}', space=vmem, size = 0x12000, scoped, tag = 'internal scratch']
  %s0 = inlined_call_operand.vmem [shape: bf16[16,27], index: 0, kind: input, shape index: {}]
  %s1 = inlined_call_operand.vmem [shape: bf16[27,512], index: 1, kind: input, shape index: {}]
  %s2 = inlined_call_operand.vmem [shape: f32[16,1], index: 2, kind: input, shape index: {}]
  %s3 = inlined_call_operand.vmem [shape: bf16[16,512], index: 3, kind: output, shape index: {}]
  %s4 = sld [smem:[#allocation0]]
  $region117: #{rawvsr_forward.15} parent=0
    _
  %s6 = ssub.s32 1, %s4
  %s7 = scalar_select 0, %s6, %s4
  $region1: #{rawvsr_forward.15} parent=0
    #allocation2 [shape = 'u8[32768]{0}', space=vmem, size = 0x8000, scoped, tag = 'input window, operand 1']
    #allocation3 [shape = 'u8[16384]{0}', space=vmem, size = 0x4000, scoped, tag = 'output window, operand 0']
    loop: start=0, step=1, limit=4
    $region2: #{rawvsr_forward.15} parent=1 // loop_pre_header
      _
    $region3: #{rawvsr_forward.15} parent=1 // loop_header
      %s9 = sphi 0, %s13
      %p10 = scmp.ge.s32.totalorder %s9, 4
      %s17 = sphi 0, %s17
      %s19 = sphi 0, %s17
      %s20 = sphi 0, %s19
      %s34 = sphi 0, %s20
      %s40 = sphi 0, %s42
      %s43 = sphi 0, %s40
      %s44 = sphi 0, %s43
      %s60 = sphi 0, %s44
      %s64 = sphi 0, %s64
      %s66 = sphi 0, %s64
      %s67 = sphi 0, %s66
      %s81 = sphi 0, %s67
      %s87 = sphi 0, %s89
      %s90 = sphi 0, %s87
      %s91 = sphi 0, %s90
      %s107 = sphi 0, %s91
    $region4: #{rawvsr_forward.15} parent=1 // loop_header_branch
      %12 = sbr.rel (%p10) target = $region8
    $region5: #{rawvsr_forward.15} parent=1 // loop_body
      %s14 = ssub.s32 %s9, 1
      %s15 = ssub.s32 %s9, 2
      %s16 = sadd.s32 %s9, 1
      %s18 = sadd.s32 %s17, 1
      %p21 = scmp.eq.s32.totalorder %s9, 1
      %p22 = scmp.ne.s32.totalorder %s17, %s19
      %p23 = scmp.eq.s32.totalorder %s9, 0
      %p24 = por %p22, %p23
      %p25 = scmp.ne.s32.totalorder %s17, %s19
      %p26 = scmp.eq.s32.totalorder %s14, 1
      %p27 = por %p25, %p26
      %p28 = scmp.ne.s32.totalorder %s19, %s20
      %p29 = scmp.eq.s32.totalorder %s14, 0
      %p30 = por %p28, %p29
      %p31 = scmp.ne.s32.totalorder %s19, %s20
      %p32 = scmp.eq.s32.totalorder %s15, 1
      %p33 = por %p31, %p32
      %p35 = scmp.ne.s32.totalorder %s20, %s34
      %p36 = scmp.eq.s32.totalorder %s15, 0
      %p37 = por %p35, %p36
      %s38 = ssub.s32 %s9, %s16
      %p39 = scmp.eq.s32.totalorder %s38, 0
      %s41 = sadd.s32 %s40, 1
      %s42 = scalar_select %p39, %s40, %s41
      %p45 = pneg %p39
      %p46 = scmp.eq.s32.totalorder %s9, 1
      %p47 = por %p45, %p46
      %p48 = scmp.ne.s32.totalorder %s40, %s43
      %p49 = scmp.eq.s32.totalorder %s9, 0
      %p50 = por %p48, %p49
      %p51 = scmp.ne.s32.totalorder %s40, %s43
      %p52 = scmp.eq.s32.totalorder %s14, 1
      %p53 = por %p51, %p52
      %p54 = scmp.ne.s32.totalorder %s43, %s44
      %p55 = scmp.eq.s32.totalorder %s14, 0
      %p56 = por %p54, %p55
      %p57 = scmp.ne.s32.totalorder %s43, %s44
      %p58 = scmp.eq.s32.totalorder %s15, 1
      %p59 = por %p57, %p58
      %p61 = scmp.ne.s32.totalorder %s44, %s60
      %p62 = scmp.eq.s32.totalorder %s15, 0
      %p63 = por %p61, %p62
      %s65 = sadd.s32 %s64, 1
      %p68 = scmp.eq.s32.totalorder %s9, 1
      %p69 = scmp.ne.s32.totalorder %s64, %s66
      %p70 = scmp.eq.s32.totalorder %s9, 0
      %p71 = por %p69, %p70
      %p72 = scmp.ne.s32.totalorder %s64, %s66
      %p73 = scmp.eq.s32.totalorder %s14, 1
      %p74 = por %p72, %p73
      %p75 = scmp.ne.s32.totalorder %s66, %s67
      %p76 = scmp.eq.s32.totalorder %s14, 0
      %p77 = por %p75, %p76
      %p78 = scmp.ne.s32.totalorder %s66, %s67
      %p79 = scmp.eq.s32.totalorder %s15, 1
      %p80 = por %p78, %p79
      %p82 = scmp.ne.s32.totalorder %s67, %s81
      %p83 = scmp.eq.s32.totalorder %s15, 0
      %p84 = por %p82, %p83
      %s85 = ssub.s32 %s9, %s16
      %p86 = scmp.eq.s32.totalorder %s85, 0
      %s88 = sadd.s32 %s87, 1
      %s89 = scalar_select %p86, %s87, %s88
      %p92 = pneg %p86
      %p93 = scmp.eq.s32.totalorder %s9, 1
      %p94 = por %p92, %p93
      %p95 = scmp.ne.s32.totalorder %s87, %s90
      %p96 = scmp.eq.s32.totalorder %s9, 0
      %p97 = por %p95, %p96
      %p98 = scmp.ne.s32.totalorder %s87, %s90
      %p99 = scmp.eq.s32.totalorder %s14, 1
      %p100 = por %p98, %p99
      %p101 = scmp.ne.s32.totalorder %s90, %s91
      %p102 = scmp.eq.s32.totalorder %s14, 0
      %p103 = por %p101, %p102
      %p104 = scmp.ne.s32.totalorder %s90, %s91
      %p105 = scmp.eq.s32.totalorder %s15, 1
      %p106 = por %p104, %p105
      %p108 = scmp.ne.s32.totalorder %s91, %s107
      %p109 = scmp.eq.s32.totalorder %s15, 0
      %p110 = por %p108, %p109
      %p111 = scmp.le.s32.totalorder 1, %s9
      %p112 = scmp.lt.s32.totalorder %s9, 3
      %p113 = pnand %p111, %p112
      %p114 = pneg %p113
      // Predicated region
      $region9: #{rawvsr_forward.15} parent=5 // pred_check
        _
      $region10: #{rawvsr_forward.15} parent=5 // pred_check_branch
        %116 = sbr.rel (%p113) target = $region12
      $region11: #{rawvsr_forward.15} parent=5 // pred_region
        %s117 = ssub.s32 %s9, 1
        // Predicated region
        $region13: #{rawvsr_forward.15} parent=11 // pred_check
          %p118 = pneg %p30
        $region14: #{rawvsr_forward.15} parent=11 // pred_check_branch
          %120 = sbr.rel (%p118) target = $region16
        $region15: #{rawvsr_forward.15} parent=11 // pred_region
          _
        $region16: #{rawvsr_forward.15} parent=11 // pred_fallthru
          _
        // Predicated region
        $region17: #{rawvsr_forward.15} parent=11 // pred_check
          %p121 = pneg %p77
        $region18: #{rawvsr_forward.15} parent=11 // pred_check_branch
          %123 = sbr.rel (%p121) target = $region20
        $region19: #{rawvsr_forward.15} parent=11 // pred_region
          _
        $region20: #{rawvsr_forward.15} parent=11 // pred_fallthru
          _
      $region12: #{rawvsr_forward.15} parent=5 // pred_fallthru
        _
      %p124 = scmp.lt.s32.totalorder %s9, 2
      // Predicated region
      $region21: #{rawvsr_forward.15} parent=5 // pred_check
        %p125 = pneg %p124
      $region22: #{rawvsr_forward.15} parent=5 // pred_check_branch
        %127 = sbr.rel (%p125) target = $region24
      $region23: #{rawvsr_forward.15} parent=5 // pred_region
        // Predicated region
        $region25: #{rawvsr_forward.15} parent=23 // pred_check
          %p128 = pneg %p50
        $region26: #{rawvsr_forward.15} parent=23 // pred_check_branch
          %130 = sbr.rel (%p128) target = $region28
        $region27: #{rawvsr_forward.15} parent=23 // pred_region
          %s131 = sand.u32 %s40, 1
          %s132 = sand.u32 %s40, 1
          %s133 = smul.addr %s132, 32
          %s134 = scalar_lea.vmem [#allocation2], %s133
          %s135 = smul.u32 2, %s9
          %s136 = smul.addr %s135, 4
          %s137 = scalar_lea.vmem %s1, %s136
          // Predicated region
          $region29: #{rawvsr_forward.15} parent=27 // pred_check
            _
          $region30: #{rawvsr_forward.15} parent=27 // pred_check_branch
            %139 = sbr.rel (0) target = $region32
          $region31: #{rawvsr_forward.15} parent=27 // pred_region
            // Predicated region
            $region33: #{rawvsr_forward.15} parent=31 // pred_check
              _
            $region34: #{rawvsr_forward.15} parent=31 // pred_check_branch
              %141 = sbr.rel (0) target = $region36
            $region35: #{rawvsr_forward.15} parent=31 // pred_region
              // Predicated region
              $region48: #{rawvsr_forward.15} parent=35 // pred_check
                _
              $region49: #{rawvsr_forward.15} parent=35 // pred_check_branch
                %162 = sbr.rel (0) target = $region51
              $region50: #{rawvsr_forward.15} parent=35 // pred_region
                loop: start=0, step=1, limit=1
                $region52: #{rawvsr_forward.15} parent=50 // loop_pre_header
                  _
                $region53: #{rawvsr_forward.15} parent=50 // loop_header
                  %s164 = sphi 0, %s168
                  %p165 = scmp.ge.s32.totalorder %s164, 1
                  %s169 = sphi %s137, %s137
                  %s170 = sphi %s134, %s134
                $region54: #{rawvsr_forward.15} parent=50 // loop_header_branch
                  %167 = sbr.rel (%p165) target = $region58
                $region55: #{rawvsr_forward.15} parent=50 // loop_body
                  %v171 = vld [vmem:[%s169] sm:$0xff]
                  %172 = vst [vmem:[%s170] sm:$0xff] %v171
                  %v173 = vld [vmem:[%s169 + $0x10] sm:$0xff]
                  %174 = vst [vmem:[%s170 + $0x8] sm:$0xff] %v173
                  %v175 = vld [vmem:[%s169 + $0x20] sm:$0xff]
                  %176 = vst [vmem:[%s170 + $0x10] sm:$0xff] %v175
                  %v177 = vld [vmem:[%s169 + $0x30] sm:$0xff]
                  %178 = vst [vmem:[%s170 + $0x18] sm:$0xff] %v177
                $region56: #{rawvsr_forward.15} parent=50 // loop_footer
                  %s168 = sadd.s32 1, %s164
                $region57: #{rawvsr_forward.15} parent=50 // loop_footer_branch
                  %163 = sbr.rel target = $region53
                $region58: #{rawvsr_forward.15} parent=50 // loop_exit
                  _
              $region51: #{rawvsr_forward.15} parent=35 // pred_fallthru
                _
              // Predicated region
              $region59: #{rawvsr_forward.15} parent=35 // pred_check
                _
              $region60: #{rawvsr_forward.15} parent=35 // pred_check_branch
                %180 = sbr.rel target = $region62
              $region61: #{rawvsr_forward.15} parent=35 // pred_region
                _
              $region62: #{rawvsr_forward.15} parent=35 // pred_fallthru
                _
            $region36: #{rawvsr_forward.15} parent=31 // pred_fallthru
              _
            // Predicated region
            $region37: #{rawvsr_forward.15} parent=31 // pred_check
              _
            $region38: #{rawvsr_forward.15} parent=31 // pred_check_branch
              %143 = sbr.rel target = $region40
            $region39: #{rawvsr_forward.15} parent=31 // pred_region
              loop: start=0, step=1, limit=1
              $region41: #{rawvsr_forward.15} parent=39 // loop_pre_header
                _
              $region42: #{rawvsr_forward.15} parent=39 // loop_header
                %s146 = sphi 0, %s150
                %p147 = scmp.ge.s32.totalorder %s146, 1
                %s151 = sphi %s137, %s137
                %s152 = sphi %s134, %s134
              $region43: #{rawvsr_forward.15} parent=39 // loop_header_branch
                %149 = sbr.rel (%p147) target = $region47
              $region44: #{rawvsr_forward.15} parent=39 // loop_body
                %v153 = vld [vmem:[%s151] sm:$0xff]
                %154 = vst [vmem:[%s152] sm:$0xff] %v153
                %v155 = vld [vmem:[%s151 + $0x10] sm:$0xff]
                %156 = vst [vmem:[%s152 + $0x8] sm:$0xff] %v155
                %v157 = vld [vmem:[%s151 + $0x20] sm:$0xff]
                %158 = vst [vmem:[%s152 + $0x10] sm:$0xff] %v157
                %v159 = vld [vmem:[%s151 + $0x30] sm:$0xff]
                %160 = vst [vmem:[%s152 + $0x18] sm:$0xff] %v159
              $region45: #{rawvsr_forward.15} parent=39 // loop_footer
                %s150 = sadd.s32 1, %s146
              $region46: #{rawvsr_forward.15} parent=39 // loop_footer_branch
                %145 = sbr.rel target = $region42
              $region47: #{rawvsr_forward.15} parent=39 // loop_exit
                _
            $region40: #{rawvsr_forward.15} parent=31 // pred_fallthru
              _
          $region32: #{rawvsr_forward.15} parent=27 // pred_fallthru
            _
          %181 = vnop
        $region28: #{rawvsr_forward.15} parent=23 // pred_fallthru
          _
      $region24: #{rawvsr_forward.15} parent=5 // pred_fallthru
        _
      %p182 = scmp.le.s32.totalorder 1, %s9
      %p183 = scmp.lt.s32.totalorder %s9, 3
      %p184 = pnand %p182, %p183
      %p185 = pneg %p184
      // Predicated region
      $region63: #{rawvsr_forward.15} parent=5 // pred_check
        _
      $region64: #{rawvsr_forward.15} parent=5 // pred_check_branch
        %187 = sbr.rel (%p184) target = $region66
      $region65: #{rawvsr_forward.15} parent=5 // pred_region
        %s188 = ssub.s32 %s9, 1
        %s189 = sand.u32 %s43, 1
        %s190 = sand.u32 %s43, 1
        %s191 = smul.addr %s190, 32
        %s192 = scalar_lea.vmem [#allocation2], %s191
        // Predicated region
        $region67: #{rawvsr_forward.15} parent=65 // pred_check
          %p193 = pneg %p56
        $region68: #{rawvsr_forward.15} parent=65 // pred_check_branch
          %195 = sbr.rel (%p193) target = $region70
        $region69: #{rawvsr_forward.15} parent=65 // pred_region
          _
        $region70: #{rawvsr_forward.15} parent=65 // pred_fallthru
          _
        %p196 = pneg %p30
        %p197 = pneg %p27
        %s198 = sand.u32 %s43, 1
        %s199 = sand.u32 %s43, 1
        %s200 = smul.addr %s199, 32
        %s201 = scalar_lea.vmem [#allocation2], %s200
        %p202 = pneg %p56
        %p203 = pneg %p53
        %p204 = pneg %p77
        %p205 = pneg %p74
        %p206 = pneg %p103
        %p207 = pneg %p100
        %s208 = sand.u32 %s90, 1
        %s209 = sand.u32 %s90, 1
        %s210 = smul.addr %s209, 16
        %s211 = scalar_lea.vmem [#allocation3], %s210
        %s212 = smul.u32 2, %s14
        %s213 = smul.u32 2, %s14
        %v215 = vld [vmem:[%s0] sm:$0xf]
        %v216 = vld [vmem:[%s0 + $0x4] sm:$0xf]
        %v217 = vld [vmem:[%s192] sm:$0xff]
        %v218 = vld [vmem:[%s192 + $0x8] sm:$0xff]
        %v219 = vld [vmem:[%s192 + $0x10] sm:$0xff]
        %v220 = vld [vmem:[%s192 + $0x18] sm:$0x33]
        %v221 = vld [vmem:[%s2] sm:$0xff]
        %v222 = vld [vmem:[%s2 + $0x8] sm:$0xff]
        %224 = vset.pattern.permute.xlu0 0
        %225 = vperm.xlu0 %224, %v221
        %v226 = vpop.permute.xlu0 %225
        %229 = vset.pattern.permute.xlu0 0
        %230 = vperm.xlu0 %229, %v222
        %v231 = vpop.permute.xlu0 %230
        %v235 = vunpack.c.l.b16 %v215
        %v236 = vunpack.c.l.b16 %v216
        %v237 = vpack.c.b16 %v236, %v235
        %v242 = vunpack.c.l.b16 %v217
        %v243 = vunpack.c.h.b16 %v217
        %v244 = vunpack.c.l.b16 %v218
        %v245 = vunpack.c.h.b16 %v218
        %v246 = vunpack.c.l.b16 %v219
        %v247 = vunpack.c.h.b16 %v219
        %v248 = vunpack.c.l.b16 %v220
        %v249 = vunpack.c.h.b16 %v220
        %v250 = vpack.c.b16 %v244, %v242
        %v251 = vpack.c.b16 %v245, %v243
        %v252 = vpack.c.b16 %v248, %v246
        %v253 = vpack.c.b16 %v249, %v247
        %vm256 = vcmask 220160
        %v258 = vsel %vm256, %v237, 0
        %vm260 = vcmask 1044480
        %vm261 = vcmask 1045504
        %v262 = vsel %vm260, 4294967295, 65535
        %v263 = vsel %vm261, %v262, 0
        %v265 = vand.u32 %v252, %v263
        %v268 = vand.u32 %v253, %v263
        %270 = vmatprep.subr.bf16.mxu0 %v251
        %271 = vmatpush1.bf16.msra.mxu0 %v250
        %272 = vmatprep.subr.bf16.mxu0 %v268
        %273 = vmatpush1.bf16.msra.mxu0 %v265
        %274 = vmatprep.subr.bf16.mxu0 0
        %275 = vmatpush1.bf16.msra.mxu0 0
        %276 = vmatprep.subr.bf16.mxu0 0
        %277 = vmatpush1.bf16.msra.mxu0 0
        %278 = vmatprep.subr.bf16.mxu0 0
        %279 = vmatpush1.bf16.msra.mxu0 0
        %280 = vmatprep.subr.bf16.mxu0 0
        %281 = vmatpush1.bf16.msra.mxu0 0
        %282 = vmatprep.subr.bf16.mxu0 0
        %283 = vmatpush1.bf16.msra.mxu0 0
        %284 = vmatprep.subr.bf16.mxu0 0
        %285 = vmatpush1.bf16.msra.mxu0 0
        %286 = vmatprep.subr.bf16.mxu0 0
        %287 = vmatpush1.bf16.msra.mxu0 0
        %288 = vmatprep.subr.bf16.mxu0 0
        %289 = vmatpush1.bf16.msra.mxu0 0
        %290 = vmatprep.subr.bf16.mxu0 0
        %291 = vmatpush1.bf16.msra.mxu0 0
        %292 = vmatprep.subr.bf16.mxu0 0
        %293 = vmatpush1.bf16.msra.mxu0 0
        %294 = vmatprep.subr.bf16.mxu0 0
        %295 = vmatpush1.bf16.msra.mxu0 0
        %296 = vmatprep.subr.bf16.mxu0 0
        %297 = vmatpush1.bf16.msra.mxu0 0
        %298 = vmatprep.subr.bf16.mxu0 0
        %299 = vmatpush1.bf16.msra.mxu0 0
        %300 = vmatprep.subr.bf16.mxu0 0
        %301 = vmatpush1.bf16.msra.mxu0 0
        %302 = vmatprep.mubr.bf16.mxu0 0
        %303 = vmatmul.mubr.bf16.gmra.mrb[0].mxu0 %v258
        %v304 = vpop.f32.mrb[0].mxu0
        %v305 = vadd.f32 %v226, %v304
        %v306 = vpop.f32.mrb[0].mxu0
        %v307 = vadd.f32 %v226, %v306
        %v308 = vpop.f32.mrb[0].mxu0
        %v309 = vadd.f32 %v231, %v308
        %v310 = vpop.f32.mrb[0].mxu0
        %v311 = vadd.f32 %v231, %v310
        %312 = vdwg.mxu0
        %v313 = vmax.f32 %v305, 0.0
        %v314 = vmax.f32 %v307, 0.0
        %v315 = vmax.f32 %v309, 0.0
        %v316 = vmax.f32 %v311, 0.0
        %v317 = vpack.c.bf16 %v315, %v313
        %v318 = vpack.c.bf16 %v316, %v314
        %v321 = vunpack.c.l.b16 %v317
        %v322 = vunpack.c.l.b16 %v318
        %v323 = vunpack.c.h.b16 %v317
        %v324 = vunpack.c.h.b16 %v318
        %v325 = vpack.c.b16 %v322, %v321
        %v326 = vpack.c.b16 %v324, %v323
        %329 = vst [vmem:[%s211] sm:$0xff] %v325
        %330 = vst [vmem:[%s211 + $0x8] sm:$0xff] %v326
        %s331 = sand.u32 %s90, 1
        %s332 = sand.u32 %s90, 1
        %s333 = smul.addr %s332, 16
        %s334 = scalar_lea.vmem [#allocation3], %s333
        // Predicated region
        $region71: #{rawvsr_forward.15} parent=65 // pred_check
          %p335 = pneg %p100
        $region72: #{rawvsr_forward.15} parent=65 // pred_check_branch
          %337 = sbr.rel (%p335) target = $region74
        $region73: #{rawvsr_forward.15} parent=65 // pred_region
          %s338 = smul.u32 2, %s14
          %s339 = smul.addr %s338, 4
          %s340 = scalar_lea.vmem %s3, %s339
          // Predicated region
          $region75: #{rawvsr_forward.15} parent=73 // pred_check
            _
          $region76: #{rawvsr_forward.15} parent=73 // pred_check_branch
            %342 = sbr.rel (0) target = $region78
          $region77: #{rawvsr_forward.15} parent=73 // pred_region
            // Predicated region
            $region79: #{rawvsr_forward.15} parent=77 // pred_check
              _
            $region80: #{rawvsr_forward.15} parent=77 // pred_check_branch
              %344 = sbr.rel (0) target = $region82
            $region81: #{rawvsr_forward.15} parent=77 // pred_region
              // Predicated region
              $region94: #{rawvsr_forward.15} parent=81 // pred_check
                _
              $region95: #{rawvsr_forward.15} parent=81 // pred_check_branch
                %361 = sbr.rel (0) target = $region97
              $region96: #{rawvsr_forward.15} parent=81 // pred_region
                loop: start=0, step=1, limit=1
                $region98: #{rawvsr_forward.15} parent=96 // loop_pre_header
                  _
                $region99: #{rawvsr_forward.15} parent=96 // loop_header
                  %s363 = sphi 0, %s367
                  %p364 = scmp.ge.s32.totalorder %s363, 1
                  %s368 = sphi %s334, %s334
                  %s369 = sphi %s340, %s340
                $region100: #{rawvsr_forward.15} parent=96 // loop_header_branch
                  %366 = sbr.rel (%p364) target = $region104
                $region101: #{rawvsr_forward.15} parent=96 // loop_body
                  %v370 = vld [vmem:[%s368] sm:$0xff]
                  %371 = vst [vmem:[%s369] sm:$0xff] %v370
                  %v372 = vld [vmem:[%s368 + $0x8] sm:$0xff]
                  %373 = vst [vmem:[%s369 + $0x10] sm:$0xff] %v372
                $region102: #{rawvsr_forward.15} parent=96 // loop_footer
                  %s367 = sadd.s32 1, %s363
                $region103: #{rawvsr_forward.15} parent=96 // loop_footer_branch
                  %362 = sbr.rel target = $region99
                $region104: #{rawvsr_forward.15} parent=96 // loop_exit
                  _
              $region97: #{rawvsr_forward.15} parent=81 // pred_fallthru
                _
              // Predicated region
              $region105: #{rawvsr_forward.15} parent=81 // pred_check
                _
              $region106: #{rawvsr_forward.15} parent=81 // pred_check_branch
                %375 = sbr.rel target = $region108
              $region107: #{rawvsr_forward.15} parent=81 // pred_region
                _
              $region108: #{rawvsr_forward.15} parent=81 // pred_fallthru
                _
            $region82: #{rawvsr_forward.15} parent=77 // pred_fallthru
              _
            // Predicated region
            $region83: #{rawvsr_forward.15} parent=77 // pred_check
              _
            $region84: #{rawvsr_forward.15} parent=77 // pred_check_branch
              %346 = sbr.rel target = $region86
            $region85: #{rawvsr_forward.15} parent=77 // pred_region
              loop: start=0, step=1, limit=1
              $region87: #{rawvsr_forward.15} parent=85 // loop_pre_header
                _
              $region88: #{rawvsr_forward.15} parent=85 // loop_header
                %s349 = sphi 0, %s353
                %p350 = scmp.ge.s32.totalorder %s349, 1
                %s354 = sphi %s334, %s334
                %s355 = sphi %s340, %s340
              $region89: #{rawvsr_forward.15} parent=85 // loop_header_branch
                %352 = sbr.rel (%p350) target = $region93
              $region90: #{rawvsr_forward.15} parent=85 // loop_body
                %v356 = vld [vmem:[%s354] sm:$0xff]
                %357 = vst [vmem:[%s355] sm:$0xff] %v356
                %v358 = vld [vmem:[%s354 + $0x8] sm:$0xff]
                %359 = vst [vmem:[%s355 + $0x10] sm:$0xff] %v358
              $region91: #{rawvsr_forward.15} parent=85 // loop_footer
                %s353 = sadd.s32 1, %s349
              $region92: #{rawvsr_forward.15} parent=85 // loop_footer_branch
                %348 = sbr.rel target = $region88
              $region93: #{rawvsr_forward.15} parent=85 // loop_exit
                _
            $region86: #{rawvsr_forward.15} parent=77 // pred_fallthru
              _
          $region78: #{rawvsr_forward.15} parent=73 // pred_fallthru
            _
          %376 = vnop
        $region74: #{rawvsr_forward.15} parent=65 // pred_fallthru
          _
      $region66: #{rawvsr_forward.15} parent=5 // pred_fallthru
        _
      %p377 = scmp.le.s32.totalorder 2, %s9
      // Predicated region
      $region109: #{rawvsr_forward.15} parent=5 // pred_check
        %p378 = pneg %p377
      $region110: #{rawvsr_forward.15} parent=5 // pred_check_branch
        %380 = sbr.rel (%p378) target = $region112
      $region111: #{rawvsr_forward.15} parent=5 // pred_region
        %s381 = ssub.s32 %s9, 2
        // Predicated region
        $region113: #{rawvsr_forward.15} parent=111 // pred_check
          %p382 = pneg %p106
        $region114: #{rawvsr_forward.15} parent=111 // pred_check_branch
          %384 = sbr.rel (%p382) target = $region116
        $region115: #{rawvsr_forward.15} parent=111 // pred_region
          %s385 = sand.u32 %s91, 1
          %s386 = sand.u32 %s91, 1
          %s387 = smul.addr %s386, 16
          %s388 = scalar_lea.vmem [#allocation3], %s387
        $region116: #{rawvsr_forward.15} parent=111 // pred_fallthru
          _
      $region112: #{rawvsr_forward.15} parent=5 // pred_fallthru
        _
    $region6: #{rawvsr_forward.15} parent=1 // loop_footer
      %s13 = sadd.s32 1, %s9
    $region7: #{rawvsr_forward.15} parent=1 // loop_footer_branch
      %8 = sbr.rel target = $region3
    $region8: #{rawvsr_forward.15} parent=1 // loop_exit
      _

// kernel: rawvsr_forward.16
$region0: #{rawvsr_forward.16}
  #allocation0 [shape = 'u32[]', space=smem, size = 0x4, offset = 0x4, fixed_abs, tag = 'smem constant byte address 0x4 - core index']
  #allocation1 [shape = 'u32[144,128]{1,0:T(1,128)}', space=vmem, size = 0x12000, scoped, tag = 'internal scratch']
  %s0 = inlined_call_operand.vmem [shape: bf16[32,144], index: 0, kind: input, shape index: {}]
  %s1 = inlined_call_operand.vmem [shape: bf16[144,128], index: 1, kind: input, shape index: {}]
  %s2 = inlined_call_operand.vmem [shape: f32[32,1], index: 2, kind: input, shape index: {}]
  %s3 = inlined_call_operand.vmem [shape: bf16[32,128], index: 3, kind: output, shape index: {}]
  %s4 = sld [smem:[#allocation0]]
  $region22: #{rawvsr_forward.16} parent=0
    _
  %s6 = ssub.s32 1, %s4
  %s7 = scalar_select 0, %s6, %s4
  // Predicated region
  $region2: #{rawvsr_forward.16} parent=0 // pred_check
    _
  $region3: #{rawvsr_forward.16} parent=0 // pred_check_branch
    %9 = sbr.rel (0) target = $region5
  $region4: #{rawvsr_forward.16} parent=0 // pred_region
    _
  $region5: #{rawvsr_forward.16} parent=0 // pred_fallthru
    _
  // Predicated region
  $region6: #{rawvsr_forward.16} parent=0 // pred_check
    _
  $region7: #{rawvsr_forward.16} parent=0 // pred_check_branch
    %11 = sbr.rel (0) target = $region9
  $region8: #{rawvsr_forward.16} parent=0 // pred_region
    _
  $region9: #{rawvsr_forward.16} parent=0 // pred_fallthru
    _
  // Predicated region
  $region10: #{rawvsr_forward.16} parent=0 // pred_check
    _
  $region11: #{rawvsr_forward.16} parent=0 // pred_check_branch
    %13 = sbr.rel (0) target = $region13
  $region12: #{rawvsr_forward.16} parent=0 // pred_region
    _
  $region13: #{rawvsr_forward.16} parent=0 // pred_fallthru
    _
  %v15 = vld [vmem:[%s0] sm:$0xff]
  %v16 = vld [vmem:[%s0 + $0x8] sm:$0xff]
  %v17 = vld [vmem:[%s0 + $0x10] sm:$0xff]
  %v18 = vld [vmem:[%s0 + $0x18] sm:$0xff]
  %v19 = vld [vmem:[%s1] sm:$0xf]
  %v20 = vld [vmem:[%s1 + $0x4] sm:$0xf]
  %v21 = vld [vmem:[%s1 + $0x8] sm:$0xf]
  %v22 = vld [vmem:[%s1 + $0xc] sm:$0xf]
  %v23 = vld [vmem:[%s1 + $0x10] sm:$0xf]
  %v24 = vld [vmem:[%s1 + $0x14] sm:$0xf]
  %v25 = vld [vmem:[%s1 + $0x18] sm:$0xf]
  %v26 = vld [vmem:[%s1 + $0x1c] sm:$0xf]
  %v27 = vld [vmem:[%s1 + $0x20] sm:$0xf]
  %v28 = vld [vmem:[%s1 + $0x24] sm:$0xf]
  %v29 = vld [vmem:[%s1 + $0x28] sm:$0xf]
  %v30 = vld [vmem:[%s1 + $0x2c] sm:$0xf]
  %v31 = vld [vmem:[%s1 + $0x30] sm:$0xf]
  %v32 = vld [vmem:[%s1 + $0x34] sm:$0xf]
  %v33 = vld [vmem:[%s1 + $0x38] sm:$0xf]
  %v34 = vld [vmem:[%s1 + $0x3c] sm:$0xf]
  %v35 = vld [vmem:[%s1 + $0x40] sm:$0xf]
  %v36 = vld [vmem:[%s1 + $0x44] sm:$0xf]
  %v37 = vld [vmem:[%s2] sm:$0xff]
  %v38 = vld [vmem:[%s2 + $0x8] sm:$0xff]
  %v39 = vld [vmem:[%s2 + $0x10] sm:$0xff]
  %v40 = vld [vmem:[%s2 + $0x18] sm:$0xff]
  %42 = vset.pattern.permute.xlu0 0
  %43 = vperm.xlu0 %42, %v37
  %v44 = vpop.permute.xlu0 %43
  %47 = vset.pattern.permute.xlu0 0
  %48 = vperm.xlu0 %47, %v38
  %v49 = vpop.permute.xlu0 %48
  %52 = vset.pattern.permute.xlu0 0
  %53 = vperm.xlu0 %52, %v39
  %v54 = vpop.permute.xlu0 %53
  %57 = vset.pattern.permute.xlu0 0
  %58 = vperm.xlu0 %57, %v40
  %v59 = vpop.permute.xlu0 %58
  %v65 = vunpack.c.l.b16 %v15
  %v66 = vunpack.c.h.b16 %v15
  %v67 = vunpack.c.l.b16 %v16
  %v68 = vunpack.c.h.b16 %v16
  %v69 = vunpack.c.l.b16 %v17
  %v70 = vunpack.c.h.b16 %v17
  %v71 = vunpack.c.l.b16 %v18
  %v72 = vunpack.c.h.b16 %v18
  %v73 = vpack.c.b16 %v67, %v65
  %v74 = vpack.c.b16 %v68, %v66
  %v75 = vpack.c.b16 %v71, %v69
  %v76 = vpack.c.b16 %v72, %v70
  %v97 = vunpack.c.l.b16 %v19
  %v98 = vunpack.c.l.b16 %v20
  %v99 = vunpack.c.l.b16 %v21
  %v100 = vunpack.c.l.b16 %v22
  %v101 = vunpack.c.l.b16 %v23
  %v102 = vunpack.c.l.b16 %v24
  %v103 = vunpack.c.l.b16 %v25
  %v104 = vunpack.c.l.b16 %v26
  %v105 = vunpack.c.l.b16 %v27
  %v106 = vunpack.c.l.b16 %v28
  %v107 = vunpack.c.l.b16 %v29
  %v108 = vunpack.c.l.b16 %v30
  %v109 = vunpack.c.l.b16 %v31
  %v110 = vunpack.c.l.b16 %v32
  %v111 = vunpack.c.l.b16 %v33
  %v112 = vunpack.c.l.b16 %v34
  %v113 = vunpack.c.l.b16 %v35
  %v114 = vunpack.c.l.b16 %v36
  %v115 = vpack.c.b16 %v98, %v97
  %v116 = vpack.c.b16 %v100, %v99
  %v117 = vpack.c.b16 %v102, %v101
  %v118 = vpack.c.b16 %v104, %v103
  %v119 = vpack.c.b16 %v106, %v105
  %v120 = vpack.c.b16 %v108, %v107
  %v121 = vpack.c.b16 %v110, %v109
  %v122 = vpack.c.b16 %v112, %v111
  %v123 = vpack.c.b16 %v114, %v113
  %vm133 = vcmask 130048
  %v135 = vsel %vm133, %v74, 0
  %v138 = vsel %vm133, %v76, 0
  %140 = vmatprep.subr.bf16.mxu0 0
  %141 = vmatpush1.bf16.msra.mxu0 %v115
  %142 = vmatprep.subr.bf16.mxu0 0
  %143 = vmatpush1.bf16.msra.mxu0 %v116
  %144 = vmatprep.subr.bf16.mxu0 0
  %145 = vmatpush1.bf16.msra.mxu0 %v117
  %146 = vmatprep.subr.bf16.mxu0 0
  %147 = vmatpush1.bf16.msra.mxu0 %v118
  %148 = vmatprep.subr.bf16.mxu0 0
  %149 = vmatpush1.bf16.msra.mxu0 %v119
  %150 = vmatprep.subr.bf16.mxu0 0
  %151 = vmatpush1.bf16.msra.mxu0 %v120
  %152 = vmatprep.subr.bf16.mxu0 0
  %153 = vmatpush1.bf16.msra.mxu0 %v121
  %154 = vmatprep.subr.bf16.mxu0 0
  %155 = vmatpush1.bf16.msra.mxu0 %v122
  %156 = vmatprep.subr.bf16.mxu0 0
  %157 = vmatpush1.bf16.msra.mxu0 %v123
  %158 = vmatprep.subr.bf16.mxu0 0
  %159 = vmatpush1.bf16.msra.mxu0 0
  %160 = vmatprep.subr.bf16.mxu0 0
  %161 = vmatpush1.bf16.msra.mxu0 0
  %162 = vmatprep.subr.bf16.mxu0 0
  %163 = vmatpush1.bf16.msra.mxu0 0
  %164 = vmatprep.subr.bf16.mxu0 0
  %165 = vmatpush1.bf16.msra.mxu0 0
  %166 = vmatprep.subr.bf16.mxu0 0
  %167 = vmatpush1.bf16.msra.mxu0 0
  %168 = vmatprep.subr.bf16.mxu0 0
  %169 = vmatpush1.bf16.msra.mxu0 0
  %170 = vmatprep.subr.bf16.mxu0 0
  %171 = vmatpush1.bf16.msra.mxu0 0
  %172 = vmatprep.mubr.bf16.mxu0 %v135
  %173 = vmatmul.mubr.bf16.gmra.mrb[0].mxu0 %v73
  %v174 = vpop.f32.mrb[0].mxu0
  %v175 = vadd.f32 %v44, %v174
  %v176 = vpop.f32.mrb[0].mxu0
  %v177 = vpop.f32.mrb[0].mxu0
  %v178 = vadd.f32 %v49, %v177
  %v179 = vpop.f32.mrb[0].mxu0
  %180 = vmatprep.mubr.bf16.mxu0 %v138
  %181 = vmatmul.mubr.bf16.gmra.mrb[0].mxu0 %v75
  %v182 = vpop.f32.mrb[0].mxu0
  %v183 = vadd.f32 %v54, %v182
  %v184 = vpop.f32.mrb[0].mxu0
  %v185 = vpop.f32.mrb[0].mxu0
  %v186 = vadd.f32 %v59, %v185
  %v187 = vpop.f32.mrb[0].mxu0
  %188 = vdwg.mxu0
  %v189 = vmax.f32 %v175, 0.0
  %v190 = vmax.f32 %v178, 0.0
  %v191 = vmax.f32 %v183, 0.0
  %v192 = vmax.f32 %v186, 0.0
  %v193 = vpack.c.bf16 %v190, %v189
  %v194 = vpack.c.bf16 %v192, %v191
  %v197 = vunpack.c.l.b16 %v193
  %v198 = vunpack.c.h.b16 %v193
  %v199 = vunpack.c.l.b16 %v194
  %v200 = vunpack.c.h.b16 %v194
  %v201 = vpack.c.b16 %v197, %v197
  %v202 = vpack.c.b16 %v198, %v198
  %v203 = vpack.c.b16 %v199, %v199
  %v204 = vpack.c.b16 %v200, %v200
  %209 = vst [vmem:[%s3] sm:$0xf] %v201
  %210 = vst [vmem:[%s3 + $0x4] sm:$0xf] %v202
  %211 = vst [vmem:[%s3 + $0x8] sm:$0xf] %v203
  %212 = vst [vmem:[%s3 + $0xc] sm:$0xf] %v204
  // Predicated region
  $region14: #{rawvsr_forward.16} parent=0 // pred_check
    _
  $region15: #{rawvsr_forward.16} parent=0 // pred_check_branch
    %214 = sbr.rel (0) target = $region17
  $region16: #{rawvsr_forward.16} parent=0 // pred_region
    _
  $region17: #{rawvsr_forward.16} parent=0 // pred_fallthru
    _
  // Predicated region
  $region18: #{rawvsr_forward.16} parent=0 // pred_check
    _
  $region19: #{rawvsr_forward.16} parent=0 // pred_check_branch
    %216 = sbr.rel (0) target = $region21
  $region20: #{rawvsr_forward.16} parent=0 // pred_region
    _
  $region21: #{rawvsr_forward.16} parent=0 // pred_fallthru
    _

// kernel: rawvsr_forward.17
$region0: #{rawvsr_forward.17}
  #allocation0 [shape = 'u32[]', space=smem, size = 0x4, offset = 0x4, fixed_abs, tag = 'smem constant byte address 0x4 - core index']
  #allocation1 [shape = 'u32[144,128]{1,0:T(1,128)}', space=vmem, size = 0x12000, scoped, tag = 'internal scratch']
  %s0 = inlined_call_operand.vmem [shape: bf16[64,288], index: 0, kind: input, shape index: {}]
  %s1 = inlined_call_operand.vmem [shape: bf16[288,128], index: 1, kind: input, shape index: {}]
  %s2 = inlined_call_operand.vmem [shape: f32[64,1], index: 2, kind: input, shape index: {}]
  %s3 = inlined_call_operand.vmem [shape: bf16[64,128], index: 3, kind: output, shape index: {}]
  %s4 = sld [smem:[#allocation0]]
  $region22: #{rawvsr_forward.17} parent=0
    _
  %s6 = ssub.s32 1, %s4
  %s7 = scalar_select 0, %s6, %s4
  // Predicated region
  $region2: #{rawvsr_forward.17} parent=0 // pred_check
    _
  $region3: #{rawvsr_forward.17} parent=0 // pred_check_branch
    %9 = sbr.rel (0) target = $region5
  $region4: #{rawvsr_forward.17} parent=0 // pred_region
    _
  $region5: #{rawvsr_forward.17} parent=0 // pred_fallthru
    _
  // Predicated region
  $region6: #{rawvsr_forward.17} parent=0 // pred_check
    _
  $region7: #{rawvsr_forward.17} parent=0 // pred_check_branch
    %11 = sbr.rel (0) target = $region9
  $region8: #{rawvsr_forward.17} parent=0 // pred_region
    _
  $region9: #{rawvsr_forward.17} parent=0 // pred_fallthru
    _
  // Predicated region
  $region10: #{rawvsr_forward.17} parent=0 // pred_check
    _
  $region11: #{rawvsr_forward.17} parent=0 // pred_check_branch
    %13 = sbr.rel (0) target = $region13
  $region12: #{rawvsr_forward.17} parent=0 // pred_region
    _
  $region13: #{rawvsr_forward.17} parent=0 // pred_fallthru
    _
  %v15 = vld [vmem:[%s0] sm:$0xff]
  %v16 = vld [vmem:[%s0 + $0x8] sm:$0xf]
  %v17 = vld [vmem:[%s0 + $0xc] sm:$0xff]
  %v18 = vld [vmem:[%s0 + $0x14] sm:$0xf]
  %v19 = vld [vmem:[%s0 + $0x18] sm:$0xff]
  %v20 = vld [vmem:[%s0 + $0x20] sm:$0xf]
  %v21 = vld [vmem:[%s0 + $0x24] sm:$0xff]
  %v22 = vld [vmem:[%s0 + $0x2c] sm:$0xf]
  %v23 = vld [vmem:[%s0 + $0x30] sm:$0xff]
  %v24 = vld [vmem:[%s0 + $0x38] sm:$0xf]
  %v25 = vld [vmem:[%s0 + $0x3c] sm:$0xff]
  %v26 = vld [vmem:[%s0 + $0x44] sm:$0xf]
  %v27 = vld [vmem:[%s0 + $0x48] sm:$0xff]
  %v28 = vld [vmem:[%s0 + $0x50] sm:$0xf]
  %v29 = vld [vmem:[%s0 + $0x54] sm:$0xff]
  %v30 = vld [vmem:[%s0 + $0x5c] sm:$0xf]
  %v31 = vld [vmem:[%s1] sm:$0xf]
  %v32 = vld [vmem:[%s1 + $0x4] sm:$0xf]
  %v33 = vld [vmem:[%s1 + $0x8] sm:$0xf]
  %v34 = vld [vmem:[%s1 + $0xc] sm:$0xf]
  %v35 = vld [vmem:[%s1 + $0x10] sm:$0xf]
  %v36 = vld [vmem:[%s1 + $0x14] sm:$0xf]
  %v37 = vld [vmem:[%s1 + $0x18] sm:$0xf]
  %v38 = vld [vmem:[%s1 + $0x1c] sm:$0xf]
  %v39 = vld [vmem:[%s1 + $0x20] sm:$0xf]
  %v40 = vld [vmem:[%s1 + $0x24] sm:$0xf]
  %v41 = vld [vmem:[%s1 + $0x28] sm:$0xf]
  %v42 = vld [vmem:[%s1 + $0x2c] sm:$0xf]
  %v43 = vld [vmem:[%s1 + $0x30] sm:$0xf]
  %v44 = vld [vmem:[%s1 + $0x34] sm:$0xf]
  %v45 = vld [vmem:[%s1 + $0x38] sm:$0xf]
  %v46 = vld [vmem:[%s1 + $0x3c] sm:$0xf]
  %v47 = vld [vmem:[%s1 + $0x40] sm:$0xf]
  %v48 = vld [vmem:[%s1 + $0x44] sm:$0xf]
  %v49 = vld [vmem:[%s1 + $0x48] sm:$0xf]
  %v50 = vld [vmem:[%s1 + $0x4c] sm:$0xf]
  %v51 = vld [vmem:[%s1 + $0x50] sm:$0xf]
  %v52 = vld [vmem:[%s1 + $0x54] sm:$0xf]
  %v53 = vld [vmem:[%s1 + $0x58] sm:$0xf]
  %v54 = vld [vmem:[%s1 + $0x5c] sm:$0xf]
  %v55 = vld [vmem:[%s1 + $0x60] sm:$0xf]
  %v56 = vld [vmem:[%s1 + $0x64] sm:$0xf]
  %v57 = vld [vmem:[%s1 + $0x68] sm:$0xf]
  %v58 = vld [vmem:[%s1 + $0x6c] sm:$0xf]
  %v59 = vld [vmem:[%s1 + $0x70] sm:$0xf]
  %v60 = vld [vmem:[%s1 + $0x74] sm:$0xf]
  %v61 = vld [vmem:[%s1 + $0x78] sm:$0xf]
  %v62 = vld [vmem:[%s1 + $0x7c] sm:$0xf]
  %v63 = vld [vmem:[%s1 + $0x80] sm:$0xf]
  %v64 = vld [vmem:[%s1 + $0x84] sm:$0xf]
  %v65 = vld [vmem:[%s1 + $0x88] sm:$0xf]
  %v66 = vld [vmem:[%s1 + $0x8c] sm:$0xf]
  %v67 = vld [vmem:[%s2] sm:$0xff]
  %v68 = vld [vmem:[%s2 + $0x8] sm:$0xff]
  %v69 = vld [vmem:[%s2 + $0x10] sm:$0xff]
  %v70 = vld [vmem:[%s2 + $0x18] sm:$0xff]
  %v71 = vld [vmem:[%s2 + $0x20] sm:$0xff]
  %v72 = vld [vmem:[%s2 + $0x28] sm:$0xff]
  %v73 = vld [vmem:[%s2 + $0x30] sm:$0xff]
  %v74 = vld [vmem:[%s2 + $0x38] sm:$0xff]
  %76 = vset.pattern.permute.xlu0 0
  %77 = vperm.xlu0 %76, %v67
  %v78 = vpop.permute.xlu0 %77
  %81 = vset.pattern.permute.xlu0 0
  %82 = vperm.xlu0 %81, %v68
  %v83 = vpop.permute.xlu0 %82
  %86 = vset.pattern.permute.xlu0 0
  %87 = vperm.xlu0 %86, %v69
  %v88 = vpop.permute.xlu0 %87
  %91 = vset.pattern.permute.xlu0 0
  %92 = vperm.xlu0 %91, %v70
  %v93 = vpop.permute.xlu0 %92
  %96 = vset.pattern.permute.xlu0 0
  %97 = vperm.xlu0 %96, %v71
  %v98 = vpop.permute.xlu0 %97
  %101 = vset.pattern.permute.xlu0 0
  %102 = vperm.xlu0 %101, %v72
  %v103 = vpop.permute.xlu0 %102
  %106 = vset.pattern.permute.xlu0 0
  %107 = vperm.xlu0 %106, %v73
  %v108 = vpop.permute.xlu0 %107
  %111 = vset.pattern.permute.xlu0 0
  %112 = vperm.xlu0 %111, %v74
  %v113 = vpop.permute.xlu0 %112
  %v131 = vunpack.c.l.b16 %v15
  %v132 = vunpack.c.h.b16 %v15
  %v133 = vunpack.c.l.b16 %v16
  %v134 = vunpack.c.l.b16 %v17
  %v135 = vunpack.c.h.b16 %v17
  %v136 = vunpack.c.l.b16 %v18
  %v137 = vunpack.c.l.b16 %v19
  %v138 = vunpack.c.h.b16 %v19
  %v139 = vunpack.c.l.b16 %v20
  %v140 = vunpack.c.l.b16 %v21
  %v141 = vunpack.c.h.b16 %v21
  %v142 = vunpack.c.l.b16 %v22
  %v143 = vunpack.c.l.b16 %v23
  %v144 = vunpack.c.h.b16 %v23
  %v145 = vunpack.c.l.b16 %v24
  %v146 = vunpack.c.l.b16 %v25
  %v147 = vunpack.c.h.b16 %v25
  %v148 = vunpack.c.l.b16 %v26
  %v149 = vunpack.c.l.b16 %v27
  %v150 = vunpack.c.h.b16 %v27
  %v151 = vunpack.c.l.b16 %v28
  %v152 = vunpack.c.l.b16 %v29
  %v153 = vunpack.c.h.b16 %v29
  %v154 = vunpack.c.l.b16 %v30
  %v155 = vpack.c.b16 %v134, %v131
  %v156 = vpack.c.b16 %v135, %v132
  %v157 = vpack.c.b16 %v136, %v133
  %v158 = vpack.c.b16 %v140, %v137
  %v159 = vpack.c.b16 %v141, %v138
  %v160 = vpack.c.b16 %v142, %v139
  %v161 = vpack.c.b16 %v146, %v143
  %v162 = vpack.c.b16 %v147, %v144
  %v163 = vpack.c.b16 %v148, %v145
  %v164 = vpack.c.b16 %v152, %v149
  %v165 = vpack.c.b16 %v153, %v150
  %v166 = vpack.c.b16 %v154, %v151
  %v211 = vunpack.c.l.b16 %v31
  %v212 = vunpack.c.l.b16 %v32
  %v213 = vunpack.c.l.b16 %v33
  %v214 = vunpack.c.l.b16 %v34
  %v215 = vunpack.c.l.b16 %v35
  %v216 = vunpack.c.l.b16 %v36
  %v217 = vunpack.c.l.b16 %v37
  %v218 = vunpack.c.l.b16 %v38
  %v219 = vunpack.c.l.b16 %v39
  %v220 = vunpack.c.l.b16 %v40
  %v221 = vunpack.c.l.b16 %v41
  %v222 = vunpack.c.l.b16 %v42
  %v223 = vunpack.c.l.b16 %v43
  %v224 = vunpack.c.l.b16 %v44
  %v225 = vunpack.c.l.b16 %v45
  %v226 = vunpack.c.l.b16 %v46
  %v227 = vunpack.c.l.b16 %v47
  %v228 = vunpack.c.l.b16 %v48
  %v229 = vunpack.c.l.b16 %v49
  %v230 = vunpack.c.l.b16 %v50
  %v231 = vunpack.c.l.b16 %v51
  %v232 = vunpack.c.l.b16 %v52
  %v233 = vunpack.c.l.b16 %v53
  %v234 = vunpack.c.l.b16 %v54
  %v235 = vunpack.c.l.b16 %v55
  %v236 = vunpack.c.l.b16 %v56
  %v237 = vunpack.c.l.b16 %v57
  %v238 = vunpack.c.l.b16 %v58
  %v239 = vunpack.c.l.b16 %v59
  %v240 = vunpack.c.l.b16 %v60
  %v241 = vunpack.c.l.b16 %v61
  %v242 = vunpack.c.l.b16 %v62
  %v243 = vunpack.c.l.b16 %v63
  %v244 = vunpack.c.l.b16 %v64
  %v245 = vunpack.c.l.b16 %v65
  %v246 = vunpack.c.l.b16 %v66
  %v247 = vpack.c.b16 %v212, %v211
  %v248 = vpack.c.b16 %v214, %v213
  %v249 = vpack.c.b16 %v216, %v215
  %v250 = vpack.c.b16 %v218, %v217
  %v251 = vpack.c.b16 %v220, %v219
  %v252 = vpack.c.b16 %v222, %v221
  %v253 = vpack.c.b16 %v224, %v223
  %v254 = vpack.c.b16 %v226, %v225
  %v255 = vpack.c.b16 %v228, %v227
  %v256 = vpack.c.b16 %v230, %v229
  %v257 = vpack.c.b16 %v232, %v231
  %v258 = vpack.c.b16 %v234, %v233
  %v259 = vpack.c.b16 %v236, %v235
  %v260 = vpack.c.b16 %v238, %v237
  %v261 = vpack.c.b16 %v240, %v239
  %v262 = vpack.c.b16 %v242, %v241
  %v263 = vpack.c.b16 %v244, %v243
  %v264 = vpack.c.b16 %v246, %v245
  %vm283 = vcmask 261120
  %v285 = vsel %vm283, %v157, 0
  %v288 = vsel %vm283, %v160, 0
  %v291 = vsel %vm283, %v163, 0
  %v294 = vsel %vm283, %v166, 0
  %296 = vmatprep.subr.bf16.mxu0 0
  %297 = vmatpush1.bf16.msra.mxu0 %v247
  %298 = vmatprep.subr.bf16.mxu0 0
  %299 = vmatpush1.bf16.msra.mxu0 %v248
  %300 = vmatprep.subr.bf16.mxu0 0
  %301 = vmatpush1.bf16.msra.mxu0 %v249
  %302 = vmatprep.subr.bf16.mxu0 0
  %303 = vmatpush1.bf16.msra.mxu0 %v250
  %304 = vmatprep.subr.bf16.mxu0 0
  %305 = vmatpush1.bf16.msra.mxu0 %v251
  %306 = vmatprep.subr.bf16.mxu0 0
  %307 = vmatpush1.bf16.msra.mxu0 %v252
  %308 = vmatprep.subr.bf16.mxu0 0
  %309 = vmatpush1.bf16.msra.mxu0 %v253
  %310 = vmatprep.subr.bf16.mxu0 0
  %311 = vmatpush1.bf16.msra.mxu0 %v254
  %312 = vmatprep.subr.bf16.mxu0 0
  %313 = vmatpush1.bf16.msra.mxu0 %v255
  %314 = vmatprep.subr.bf16.mxu0 0
  %315 = vmatpush1.bf16.msra.mxu0 %v256
  %316 = vmatprep.subr.bf16.mxu0 0
  %317 = vmatpush1.bf16.msra.mxu0 %v257
  %318 = vmatprep.subr.bf16.mxu0 0
  %319 = vmatpush1.bf16.msra.mxu0 %v258
  %320 = vmatprep.subr.bf16.mxu0 0
  %321 = vmatpush1.bf16.msra.mxu0 %v259
  %322 = vmatprep.subr.bf16.mxu0 0
  %323 = vmatpush1.bf16.msra.mxu0 %v260
  %324 = vmatprep.subr.bf16.mxu0 0
  %325 = vmatpush1.bf16.msra.mxu0 %v261
  %326 = vmatprep.subr.bf16.mxu0 0
  %327 = vmatpush1.bf16.msra.mxu0 %v262
  %328 = vmatprep.mubr.bf16.mxu0 %v156
  %329 = vmatmul.mubr.bf16.gmra.mrb[0].mxu0 %v155
  %v330 = vpop.f32.mrb[0].mxu0
  %v331 = vadd.f32 %v78, %v330
  %v332 = vpop.f32.mrb[0].mxu0
  %v333 = vpop.f32.mrb[0].mxu0
  %v334 = vadd.f32 %v83, %v333
  %v335 = vpop.f32.mrb[0].mxu0
  %336 = vmatprep.mubr.bf16.mxu0 %v159
  %337 = vmatmul.mubr.bf16.gmra.mrb[0].mxu0 %v158
  %v338 = vpop.f32.mrb[0].mxu0
  %v339 = vadd.f32 %v88, %v338
  %v340 = vpop.f32.mrb[0].mxu0
  %v341 = vpop.f32.mrb[0].mxu0
  %v342 = vadd.f32 %v93, %v341
  %v343 = vpop.f32.mrb[0].mxu0
  %344 = vmatprep.mubr.bf16.mxu0 %v162
  %345 = vmatmul.mubr.bf16.gmra.mrb[0].mxu0 %v161
  %v346 = vpop.f32.mrb[0].mxu0
  %v347 = vadd.f32 %v98, %v346
  %v348 = vpop.f32.mrb[0].mxu0
  %v349 = vpop.f32.mrb[0].mxu0
  %v350 = vadd.f32 %v103, %v349
  %v351 = vpop.f32.mrb[0].mxu0
  %352 = vmatprep.mubr.bf16.mxu0 %v165
  %353 = vmatmul.mubr.bf16.gmra.mrb[0].mxu0 %v164
  %v354 = vpop.f32.mrb[0].mxu0
  %v355 = vadd.f32 %v108, %v354
  %v356 = vpop.f32.mrb[0].mxu0
  %v357 = vpop.f32.mrb[0].mxu0
  %v358 = vadd.f32 %v113, %v357
  %v359 = vpop.f32.mrb[0].mxu0
  %360 = vdwg.mxu0
  %361 = vmatprep.subr.bf16.mxu0 0
  %362 = vmatpush1.bf16.msra.mxu0 %v263
  %363 = vmatprep.subr.bf16.mxu0 0
  %364 = vmatpush1.bf16.msra.mxu0 %v264
  %365 = vmatprep.subr.bf16.mxu0 0
  %366 = vmatpush1.bf16.msra.mxu0 0
  %367 = vmatprep.subr.bf16.mxu0 0
  %368 = vmatpush1.bf16.msra.mxu0 0
  %369 = vmatprep.subr.bf16.mxu0 0
  %370 = vmatpush1.bf16.msra.mxu0 0
  %371 = vmatprep.subr.bf16.mxu0 0
  %372 = vmatpush1.bf16.msra.mxu0 0
  %373 = vmatprep.subr.bf16.mxu0 0
  %374 = vmatpush1.bf16.msra.mxu0 0
  %375 = vmatprep.subr.bf16.mxu0 0
  %376 = vmatpush1.bf16.msra.mxu0 0
  %377 = vmatprep.subr.bf16.mxu0 0
  %378 = vmatpush1.bf16.msra.mxu0 0
  %379 = vmatprep.subr.bf16.mxu0 0
  %380 = vmatpush1.bf16.msra.mxu0 0
  %381 = vmatprep.subr.bf16.mxu0 0
  %382 = vmatpush1.bf16.msra.mxu0 0
  %383 = vmatprep.subr.bf16.mxu0 0
  %384 = vmatpush1.bf16.msra.mxu0 0
  %385 = vmatprep.subr.bf16.mxu0 0
  %386 = vmatpush1.bf16.msra.mxu0 0
  %387 = vmatprep.subr.bf16.mxu0 0
  %388 = vmatpush1.bf16.msra.mxu0 0
  %389 = vmatprep.subr.bf16.mxu0 0
  %390 = vmatpush1.bf16.msra.mxu0 0
  %391 = vmatprep.subr.bf16.mxu0 0
  %392 = vmatpush1.bf16.msra.mxu0 0
  %393 = vmatprep.mubr.bf16.mxu0 0
  %394 = vmatmul.mubr.bf16.gmra.mrb[0].mxu0 %v285
  %v395 = vpop.f32.mrb[0].mxu0
  %v396 = vadd.f32 %v331, %v395
  %v397 = vpop.f32.mrb[0].mxu0
  %v398 = vpop.f32.mrb[0].mxu0
  %v399 = vadd.f32 %v334, %v398
  %v400 = vpop.f32.mrb[0].mxu0
  %401 = vmatprep.mubr.bf16.mxu0 0
  %402 = vmatmul.mubr.bf16.gmra.mrb[0].mxu0 %v288
  %v403 = vpop.f32.mrb[0].mxu0
  %v404 = vadd.f32 %v339, %v403
  %v405 = vpop.f32.mrb[0].mxu0
  %v406 = vpop.f32.mrb[0].mxu0
  %v407 = vadd.f32 %v342, %v406
  %v408 = vpop.f32.mrb[0].mxu0
  %409 = vmatprep.mubr.bf16.mxu0 0
  %410 = vmatmul.mubr.bf16.gmra.mrb[0].mxu0 %v291
  %v411 = vpop.f32.mrb[0].mxu0
  %v412 = vadd.f32 %v347, %v411
  %v413 = vpop.f32.mrb[0].mxu0
  %v414 = vpop.f32.mrb[0].mxu0
  %v415 = vadd.f32 %v350, %v414
  %v416 = vpop.f32.mrb[0].mxu0
  %417 = vmatprep.mubr.bf16.mxu0 0
  %418 = vmatmul.mubr.bf16.gmra.mrb[0].mxu0 %v294
  %v419 = vpop.f32.mrb[0].mxu0
  %v420 = vadd.f32 %v355, %v419
  %v421 = vpop.f32.mrb[0].mxu0
  %v422 = vpop.f32.mrb[0].mxu0
  %v423 = vadd.f32 %v358, %v422
  %v424 = vpop.f32.mrb[0].mxu0
  %425 = vdwg.mxu0
  %v426 = vmax.f32 %v396, 0.0
  %v427 = vmax.f32 %v399, 0.0
  %v428 = vmax.f32 %v404, 0.0
  %v429 = vmax.f32 %v407, 0.0
  %v430 = vmax.f32 %v412, 0.0
  %v431 = vmax.f32 %v415, 0.0
  %v432 = vmax.f32 %v420, 0.0
  %v433 = vmax.f32 %v423, 0.0
  %v434 = vpack.c.bf16 %v427, %v426
  %v435 = vpack.c.bf16 %v429, %v428
  %v436 = vpack.c.bf16 %v431, %v430
  %v437 = vpack.c.bf16 %v433, %v432
  %v442 = vunpack.c.l.b16 %v434
  %v443 = vunpack.c.h.b16 %v434
  %v444 = vunpack.c.l.b16 %v435
  %v445 = vunpack.c.h.b16 %v435
  %v446 = vunpack.c.l.b16 %v436
  %v447 = vunpack.c.h.b16 %v436
  %v448 = vunpack.c.l.b16 %v437
  %v449 = vunpack.c.h.b16 %v437
  %v450 = vpack.c.b16 %v442, %v442
  %v451 = vpack.c.b16 %v443, %v443
  %v452 = vpack.c.b16 %v444, %v444
  %v453 = vpack.c.b16 %v445, %v445
  %v454 = vpack.c.b16 %v446, %v446
  %v455 = vpack.c.b16 %v447, %v447
  %v456 = vpack.c.b16 %v448, %v448
  %v457 = vpack.c.b16 %v449, %v449
  %466 = vst [vmem:[%s3] sm:$0xf] %v450
  %467 = vst [vmem:[%s3 + $0x4] sm:$0xf] %v451
  %468 = vst [vmem:[%s3 + $0x8] sm:$0xf] %v452
  %469 = vst [vmem:[%s3 + $0xc] sm:$0xf] %v453
  %470 = vst [vmem:[%s3 + $0x10] sm:$0xf] %v454
  %471 = vst [vmem:[%s3 + $0x14] sm:$0xf] %v455
  %472 = vst [vmem:[%s3 + $0x18] sm:$0xf] %v456
  %473 = vst [vmem:[%s3 + $0x1c] sm:$0xf] %v457
  // Predicated region
  $region14: #{rawvsr_forward.17} parent=0 // pred_check
    _
  $region15: #{rawvsr_forward.17} parent=0 // pred_check_branch
    %475 = sbr.rel (0) target = $region17
  $region16: #{rawvsr_forward.17} parent=0 // pred_region
    _
  $region17: #{rawvsr_forward.17} parent=0 // pred_fallthru
    _
  // Predicated region
  $region18: #{rawvsr_forward.17} parent=0 // pred_check
    _
  $region19: #{rawvsr_forward.17} parent=0 // pred_check_branch
    %477 = sbr.rel (0) target = $region21
  $region20: #{rawvsr_forward.17} parent=0 // pred_region
    _
  $region21: #{rawvsr_forward.17} parent=0 // pred_fallthru
    _

// kernel: rawvsr_forward.18
$region0: #{rawvsr_forward.18}
  #allocation0 [shape = 'u32[]', space=smem, size = 0x4, offset = 0x4, fixed_abs, tag = 'smem constant byte address 0x4 - core index']
  #allocation1 [shape = 'u32[144,128]{1,0:T(1,128)}', space=vmem, size = 0x12000, scoped, tag = 'internal scratch']
  %s0 = inlined_call_operand.vmem [shape: bf16[64,576], index: 0, kind: input, shape index: {}]
  %s1 = inlined_call_operand.vmem [shape: bf16[576,128], index: 1, kind: input, shape index: {}]
  %s2 = inlined_call_operand.vmem [shape: f32[64,1], index: 2, kind: input, shape index: {}]
  %s3 = inlined_call_operand.vmem [shape: bf16[64,128], index: 3, kind: output, shape index: {}]
  %s4 = sld [smem:[#allocation0]]
  $region22: #{rawvsr_forward.18} parent=0
    _
  %s6 = ssub.s32 1, %s4
  %s7 = scalar_select 0, %s6, %s4
  // Predicated region
  $region2: #{rawvsr_forward.18} parent=0 // pred_check
    _
  $region3: #{rawvsr_forward.18} parent=0 // pred_check_branch
    %9 = sbr.rel (0) target = $region5
  $region4: #{rawvsr_forward.18} parent=0 // pred_region
    _
  $region5: #{rawvsr_forward.18} parent=0 // pred_fallthru
    _
  // Predicated region
  $region6: #{rawvsr_forward.18} parent=0 // pred_check
    _
  $region7: #{rawvsr_forward.18} parent=0 // pred_check_branch
    %11 = sbr.rel (0) target = $region9
  $region8: #{rawvsr_forward.18} parent=0 // pred_region
    _
  $region9: #{rawvsr_forward.18} parent=0 // pred_fallthru
    _
  // Predicated region
  $region10: #{rawvsr_forward.18} parent=0 // pred_check
    _
  $region11: #{rawvsr_forward.18} parent=0 // pred_check_branch
    %13 = sbr.rel (0) target = $region13
  $region12: #{rawvsr_forward.18} parent=0 // pred_region
    _
  $region13: #{rawvsr_forward.18} parent=0 // pred_fallthru
    _
  %v15 = vld [vmem:[%s0] sm:$0xff]
  %v16 = vld [vmem:[%s0 + $0x8] sm:$0xff]
  %v17 = vld [vmem:[%s0 + $0x10] sm:$0xf]
  %v18 = vld [vmem:[%s0 + $0x14] sm:$0xff]
  %v19 = vld [vmem:[%s0 + $0x1c] sm:$0xff]
  %v20 = vld [vmem:[%s0 + $0x24] sm:$0xf]
  %v21 = vld [vmem:[%s0 + $0x28] sm:$0xff]
  %v22 = vld [vmem:[%s0 + $0x30] sm:$0xff]
  %v23 = vld [vmem:[%s0 + $0x38] sm:$0xf]
  %v24 = vld [vmem:[%s0 + $0x3c] sm:$0xff]
  %v25 = vld [vmem:[%s0 + $0x44] sm:$0xff]
  %v26 = vld [vmem:[%s0 + $0x4c] sm:$0xf]
  %v27 = vld [vmem:[%s0 + $0x50] sm:$0xff]
  %v28 = vld [vmem:[%s0 + $0x58] sm:$0xff]
  %v29 = vld [vmem:[%s0 + $0x60] sm:$0xf]
  %v30 = vld [vmem:[%s0 + $0x64] sm:$0xff]
  %v31 = vld [vmem:[%s0 + $0x6c] sm:$0xff]
  %v32 = vld [vmem:[%s0 + $0x74] sm:$0xf]
  %v33 = vld [vmem:[%s0 + $0x78] sm:$0xff]
  %v34 = vld [vmem:[%s0 + $0x80] sm:$0xff]
  %v35 = vld [vmem:[%s0 + $0x88] sm:$0xf]
  %v36 = vld [vmem:[%s0 + $0x8c] sm:$0xff]
  %v37 = vld [vmem:[%s0 + $0x94] sm:$0xff]
  %v38 = vld [vmem:[%s0 + $0x9c] sm:$0xf]
  %v39 = vld [vmem:[%s1] sm:$0xf]
  %v40 = vld [vmem:[%s1 + $0x4] sm:$0xf]
  %v41 = vld [vmem:[%s1 + $0x8] sm:$0xf]
  %v42 = vld [vmem:[%s1 + $0xc] sm:$0xf]
  %v43 = vld [vmem:[%s1 + $0x10] sm:$0xf]
  %v44 = vld [vmem:[%s1 + $0x14] sm:$0xf]
  %v45 = vld [vmem:[%s1 + $0x18] sm:$0xf]
  %v46 = vld [vmem:[%s1 + $0x1c] sm:$0xf]
  %v47 = vld [vmem:[%s1 + $0x20] sm:$0xf]
  %v48 = vld [vmem:[%s1 + $0x24] sm:$0xf]
  %v49 = vld [vmem:[%s1 + $0x28] sm:$0xf]
  %v50 = vld [vmem:[%s1 + $0x2c] sm:$0xf]
  %v51 = vld [vmem:[%s1 + $0x30] sm:$0xf]
  %v52 = vld [vmem:[%s1 + $0x34] sm:$0xf]
  %v53 = vld [vmem:[%s1 + $0x38] sm:$0xf]
  %v54 = vld [vmem:[%s1 + $0x3c] sm:$0xf]
  %v55 = vld [vmem:[%s1 + $0x40] sm:$0xf]
  %v56 = vld [vmem:[%s1 + $0x44] sm:$0xf]
  %v57 = vld [vmem:[%s1 + $0x48] sm:$0xf]
  %v58 = vld [vmem:[%s1 + $0x4c] sm:$0xf]
  %v59 = vld [vmem:[%s1 + $0x50] sm:$0xf]
  %v60 = vld [vmem:[%s1 + $0x54] sm:$0xf]
  %v61 = vld [vmem:[%s1 + $0x58] sm:$0xf]
  %v62 = vld [vmem:[%s1 + $0x5c] sm:$0xf]
  %v63 = vld [vmem:[%s1 + $0x60] sm:$0xf]
  %v64 = vld [vmem:[%s1 + $0x64] sm:$0xf]
  %v65 = vld [vmem:[%s1 + $0x68] sm:$0xf]
  %v66 = vld [vmem:[%s1 + $0x6c] sm:$0xf]
  %v67 = vld [vmem:[%s1 + $0x70] sm:$0xf]
  %v68 = vld [vmem:[%s1 + $0x74] sm:$0xf]
  %v69 = vld [vmem:[%s1 + $0x78] sm:$0xf]
  %v70 = vld [vmem:[%s1 + $0x7c] sm:$0xf]
  %v71 = vld [vmem:[%s1 + $0x80] sm:$0xf]
  %v72 = vld [vmem:[%s1 + $0x84] sm:$0xf]
  %v73 = vld [vmem:[%s1 + $0x88] sm:$0xf]
  %v74 = vld [vmem:[%s1 + $0x8c] sm:$0xf]
  %v75 = vld [vmem:[%s1 + $0x90] sm:$0xf]
  %v76 = vld [vmem:[%s1 + $0x94] sm:$0xf]
  %v77 = vld [vmem:[%s1 + $0x98] sm:$0xf]
  %v78 = vld [vmem:[%s1 + $0x9c] sm:$0xf]
  %v79 = vld [vmem:[%s1 + $0xa0] sm:$0xf]
  %v80 = vld [vmem:[%s1 + $0xa4] sm:$0xf]
  %v81 = vld [vmem:[%s1 + $0xa8] sm:$0xf]
  %v82 = vld [vmem:[%s1 + $0xac] sm:$0xf]
  %v83 = vld [vmem:[%s1 + $0xb0] sm:$0xf]
  %v84 = vld [vmem:[%s1 + $0xb4] sm:$0xf]
  %v85 = vld [vmem:[%s1 + $0xb8] sm:$0xf]
  %v86 = vld [vmem:[%s1 + $0xbc] sm:$0xf]
  %v87 = vld [vmem:[%s1 + $0xc0] sm:$0xf]
  %v88 = vld [vmem:[%s1 + $0xc4] sm:$0xf]
  %v89 = vld [vmem:[%s1 + $0xc8] sm:$0xf]
  %v90 = vld [vmem:[%s1 + $0xcc] sm:$0xf]
  %v91 = vld [vmem:[%s1 + $0xd0] sm:$0xf]
  %v92 = vld [vmem:[%s1 + $0xd4] sm:$0xf]
  %v93 = vld [vmem:[%s1 + $0xd8] sm:$0xf]
  %v94 = vld [vmem:[%s1 + $0xdc] sm:$0xf]
  %v95 = vld [vmem:[%s1 + $0xe0] sm:$0xf]
  %v96 = vld [vmem:[%s1 + $0xe4] sm:$0xf]
  %v97 = vld [vmem:[%s1 + $0xe8] sm:$0xf]
  %v98 = vld [vmem:[%s1 + $0xec] sm:$0xf]
  %v99 = vld [vmem:[%s1 + $0xf0] sm:$0xf]
  %v100 = vld [vmem:[%s1 + $0xf4] sm:$0xf]
  %v101 = vld [vmem:[%s1 + $0xf8] sm:$0xf]
  %v102 = vld [vmem:[%s1 + $0xfc] sm:$0xf]
  %v103 = vld [vmem:[%s1 + $0x100] sm:$0xf]
  %v104 = vld [vmem:[%s1 + $0x104] sm:$0xf]
  %v105 = vld [vmem:[%s1 + $0x108] sm:$0xf]
  %v106 = vld [vmem:[%s1 + $0x10c] sm:$0xf]
  %v107 = vld [vmem:[%s1 + $0x110] sm:$0xf]
  %v108 = vld [vmem:[%s1 + $0x114] sm:$0xf]
  %v109 = vld [vmem:[%s1 + $0x118] sm:$0xf]
  %v110 = vld [vmem:[%s1 + $0x11c] sm:$0xf]
  %v111 = vld [vmem:[%s2] sm:$0xff]
  %v112 = vld [vmem:[%s2 + $0x8] sm:$0xff]
  %v113 = vld [vmem:[%s2 + $0x10] sm:$0xff]
  %v114 = vld [vmem:[%s2 + $0x18] sm:$0xff]
  %v115 = vld [vmem:[%s2 + $0x20] sm:$0xff]
  %v116 = vld [vmem:[%s2 + $0x28] sm:$0xff]
  %v117 = vld [vmem:[%s2 + $0x30] sm:$0xff]
  %v118 = vld [vmem:[%s2 + $0x38] sm:$0xff]
  %120 = vset.pattern.permute.xlu0 0
  %121 = vperm.xlu0 %120, %v111
  %v122 = vpop.permute.xlu0 %121
  %125 = vset.pattern.permute.xlu0 0
  %126 = vperm.xlu0 %125, %v112
  %v127 = vpop.permute.xlu0 %126
  %130 = vset.pattern.permute.xlu0 0
  %131 = vperm.xlu0 %130, %v113
  %v132 = vpop.permute.xlu0 %131
  %135 = vset.pattern.permute.xlu0 0
  %136 = vperm.xlu0 %135, %v114
  %v137 = vpop.permute.xlu0 %136
  %140 = vset.pattern.permute.xlu0 0
  %141 = vperm.xlu0 %140, %v115
  %v142 = vpop.permute.xlu0 %141
  %145 = vset.pattern.permute.xlu0 0
  %146 = vperm.xlu0 %145, %v116
  %v147 = vpop.permute.xlu0 %146
  %150 = vset.pattern.permute.xlu0 0
  %151 = vperm.xlu0 %150, %v117
  %v152 = vpop.permute.xlu0 %151
  %155 = vset.pattern.permute.xlu0 0
  %156 = vperm.xlu0 %155, %v118
  %v157 = vpop.permute.xlu0 %156
  %v183 = vunpack.c.l.b16 %v15
  %v184 = vunpack.c.h.b16 %v15
  %v185 = vunpack.c.l.b16 %v16
  %v186 = vunpack.c.h.b16 %v16
  %v187 = vunpack.c.l.b16 %v17
  %v188 = vunpack.c.l.b16 %v18
  %v189 = vunpack.c.h.b16 %v18
  %v190 = vunpack.c.l.b16 %v19
  %v191 = vunpack.c.h.b16 %v19
  %v192 = vunpack.c.l.b16 %v20
  %v193 = vunpack.c.l.b16 %v21
  %v194 = vunpack.c.h.b16 %v21
  %v195 = vunpack.c.l.b16 %v22
  %v196 = vunpack.c.h.b16 %v22
  %v197 = vunpack.c.l.b16 %v23
  %v198 = vunpack.c.l.b16 %v24
  %v199 = vunpack.c.h.b16 %v24
  %v200 = vunpack.c.l.b16 %v25
  %v201 = vunpack.c.h.b16 %v25
  %v202 = vunpack.c.l.b16 %v26
  %v203 = vunpack.c.l.b16 %v27
  %v204 = vunpack.c.h.b16 %v27
  %v205 = vunpack.c.l.b16 %v28
  %v206 = vunpack.c.h.b16 %v28
  %v207 = vunpack.c.l.b16 %v29
  %v208 = vunpack.c.l.b16 %v30
  %v209 = vunpack.c.h.b16 %v30
  %v210 = vunpack.c.l.b16 %v31
  %v211 = vunpack.c.h.b16 %v31
  %v212 = vunpack.c.l.b16 %v32
  %v213 = vunpack.c.l.b16 %v33
  %v214 = vunpack.c.h.b16 %v33
  %v215 = vunpack.c.l.b16 %v34
  %v216 = vunpack.c.h.b16 %v34
  %v217 = vunpack.c.l.b16 %v35
  %v218 = vunpack.c.l.b16 %v36
  %v219 = vunpack.c.h.b16 %v36
  %v220 = vunpack.c.l.b16 %v37
  %v221 = vunpack.c.h.b16 %v37
  %v222 = vunpack.c.l.b16 %v38
  %v223 = vpack.c.b16 %v188, %v183
  %v224 = vpack.c.b16 %v189, %v184
  %v225 = vpack.c.b16 %v190, %v185
  %v226 = vpack.c.b16 %v191, %v186
  %v227 = vpack.c.b16 %v192, %v187
  %v228 = vpack.c.b16 %v198, %v193
  %v229 = vpack.c.b16 %v199, %v194
  %v230 = vpack.c.b16 %v200, %v195
  %v231 = vpack.c.b16 %v201, %v196
  %v232 = vpack.c.b16 %v202, %v197
  %v233 = vpack.c.b16 %v208, %v203
  %v234 = vpack.c.b16 %v209, %v204
  %v235 = vpack.c.b16 %v210, %v205
  %v236 = vpack.c.b16 %v211, %v206
  %v237 = vpack.c.b16 %v212, %v207
  %v238 = vpack.c.b16 %v218, %v213
  %v239 = vpack.c.b16 %v219, %v214
  %v240 = vpack.c.b16 %v220, %v215
  %v241 = vpack.c.b16 %v221, %v216
  %v242 = vpack.c.b16 %v222, %v217
  %v331 = vunpack.c.l.b16 %v39
  %v332 = vunpack.c.l.b16 %v40
  %v333 = vunpack.c.l.b16 %v41
  %v334 = vunpack.c.l.b16 %v42
  %v335 = vunpack.c.l.b16 %v43
  %v336 = vunpack.c.l.b16 %v44
  %v337 = vunpack.c.l.b16 %v45
  %v338 = vunpack.c.l.b16 %v46
  %v339 = vunpack.c.l.b16 %v47
  %v340 = vunpack.c.l.b16 %v48
  %v341 = vunpack.c.l.b16 %v49
  %v342 = vunpack.c.l.b16 %v50
  %v343 = vunpack.c.l.b16 %v51
  %v344 = vunpack.c.l.b16 %v52
  %v345 = vunpack.c.l.b16 %v53
  %v346 = vunpack.c.l.b16 %v54
  %v347 = vunpack.c.l.b16 %v55
  %v348 = vunpack.c.l.b16 %v56
  %v349 = vunpack.c.l.b16 %v57
  %v350 = vunpack.c.l.b16 %v58
  %v351 = vunpack.c.l.b16 %v59
  %v352 = vunpack.c.l.b16 %v60
  %v353 = vunpack.c.l.b16 %v61
  %v354 = vunpack.c.l.b16 %v62
  %v355 = vunpack.c.l.b16 %v63
  %v356 = vunpack.c.l.b16 %v64
  %v357 = vunpack.c.l.b16 %v65
  %v358 = vunpack.c.l.b16 %v66
  %v359 = vunpack.c.l.b16 %v67
  %v360 = vunpack.c.l.b16 %v68
  %v361 = vunpack.c.l.b16 %v69
  %v362 = vunpack.c.l.b16 %v70
  %v363 = vunpack.c.l.b16 %v71
  %v364 = vunpack.c.l.b16 %v72
  %v365 = vunpack.c.l.b16 %v73
  %v366 = vunpack.c.l.b16 %v74
  %v367 = vunpack.c.l.b16 %v75
  %v368 = vunpack.c.l.b16 %v76
  %v369 = vunpack.c.l.b16 %v77
  %v370 = vunpack.c.l.b16 %v78
  %v371 = vunpack.c.l.b16 %v79
  %v372 = vunpack.c.l.b16 %v80
  %v373 = vunpack.c.l.b16 %v81
  %v374 = vunpack.c.l.b16 %v82
  %v375 = vunpack.c.l.b16 %v83
  %v376 = vunpack.c.l.b16 %v84
  %v377 = vunpack.c.l.b16 %v85
  %v378 = vunpack.c.l.b16 %v86
  %v379 = vunpack.c.l.b16 %v87
  %v380 = vunpack.c.l.b16 %v88
  %v381 = vunpack.c.l.b16 %v89
  %v382 = vunpack.c.l.b16 %v90
  %v383 = vunpack.c.l.b16 %v91
  %v384 = vunpack.c.l.b16 %v92
  %v385 = vunpack.c.l.b16 %v93
  %v386 = vunpack.c.l.b16 %v94
  %v387 = vunpack.c.l.b16 %v95
  %v388 = vunpack.c.l.b16 %v96
  %v389 = vunpack.c.l.b16 %v97
  %v390 = vunpack.c.l.b16 %v98
  %v391 = vunpack.c.l.b16 %v99
  %v392 = vunpack.c.l.b16 %v100
  %v393 = vunpack.c.l.b16 %v101
  %v394 = vunpack.c.l.b16 %v102
  %v395 = vunpack.c.l.b16 %v103
  %v396 = vunpack.c.l.b16 %v104
  %v397 = vunpack.c.l.b16 %v105
  %v398 = vunpack.c.l.b16 %v106
  %v399 = vunpack.c.l.b16 %v107
  %v400 = vunpack.c.l.b16 %v108
  %v401 = vunpack.c.l.b16 %v109
  %v402 = vunpack.c.l.b16 %v110
  %v403 = vpack.c.b16 %v332, %v331
  %v404 = vpack.c.b16 %v334, %v333
  %v405 = vpack.c.b16 %v336, %v335
  %v406 = vpack.c.b16 %v338, %v337
  %v407 = vpack.c.b16 %v340, %v339
  %v408 = vpack.c.b16 %v342, %v341
  %v409 = vpack.c.b16 %v344, %v343
  %v410 = vpack.c.b16 %v346, %v345
  %v411 = vpack.c.b16 %v348, %v347
  %v412 = vpack.c.b16 %v350, %v349
  %v413 = vpack.c.b16 %v352, %v351
  %v414 = vpack.c.b16 %v354, %v353
  %v415 = vpack.c.b16 %v356, %v355
  %v416 = vpack.c.b16 %v358, %v357
  %v417 = vpack.c.b16 %v360, %v359
  %v418 = vpack.c.b16 %v362, %v361
  %v419 = vpack.c.b16 %v364, %v363
  %v420 = vpack.c.b16 %v366, %v365
  %v421 = vpack.c.b16 %v368, %v367
  %v422 = vpack.c.b16 %v370, %v369
  %v423 = vpack.c.b16 %v372, %v371
  %v424 = vpack.c.b16 %v374, %v373
  %v425 = vpack.c.b16 %v376, %v375
  %v426 = vpack.c.b16 %v378, %v377
  %v427 = vpack.c.b16 %v380, %v379
  %v428 = vpack.c.b16 %v382, %v381
  %v429 = vpack.c.b16 %v384, %v383
  %v430 = vpack.c.b16 %v386, %v385
  %v431 = vpack.c.b16 %v388, %v387
  %v432 = vpack.c.b16 %v390, %v389
  %v433 = vpack.c.b16 %v392, %v391
  %v434 = vpack.c.b16 %v394, %v393
  %v435 = vpack.c.b16 %v396, %v395
  %v436 = vpack.c.b16 %v398, %v397
  %v437 = vpack.c.b16 %v400, %v399
  %v438 = vpack.c.b16 %v402, %v401
  %vm475 = vcmask 523264
  %v477 = vsel %vm475, %v227, 0
  %v480 = vsel %vm475, %v232, 0
  %v483 = vsel %vm475, %v237, 0
  %v486 = vsel %vm475, %v242, 0
  %488 = vmatprep.subr.bf16.mxu0 0
  %489 = vmatpush1.bf16.msra.mxu0 %v403
  %490 = vmatprep.subr.bf16.mxu0 0
  %491 = vmatpush1.bf16.msra.mxu0 %v404
  %492 = vmatprep.subr.bf16.mxu0 0
  %493 = vmatpush1.bf16.msra.mxu0 %v405
  %494 = vmatprep.subr.bf16.mxu0 0
  %495 = vmatpush1.bf16.msra.mxu0 %v406
  %496 = vmatprep.subr.bf16.mxu0 0
  %497 = vmatpush1.bf16.msra.mxu0 %v407
  %498 = vmatprep.subr.bf16.mxu0 0
  %499 = vmatpush1.bf16.msra.mxu0 %v408
  %500 = vmatprep.subr.bf16.mxu0 0
  %501 = vmatpush1.bf16.msra.mxu0 %v409
  %502 = vmatprep.subr.bf16.mxu0 0
  %503 = vmatpush1.bf16.msra.mxu0 %v410
  %504 = vmatprep.subr.bf16.mxu0 0
  %505 = vmatpush1.bf16.msra.mxu0 %v411
  %506 = vmatprep.subr.bf16.mxu0 0
  %507 = vmatpush1.bf16.msra.mxu0 %v412
  %508 = vmatprep.subr.bf16.mxu0 0
  %509 = vmatpush1.bf16.msra.mxu0 %v413
  %510 = vmatprep.subr.bf16.mxu0 0
  %511 = vmatpush1.bf16.msra.mxu0 %v414
  %512 = vmatprep.subr.bf16.mxu0 0
  %513 = vmatpush1.bf16.msra.mxu0 %v415
  %514 = vmatprep.subr.bf16.mxu0 0
  %515 = vmatpush1.bf16.msra.mxu0 %v416
  %516 = vmatprep.subr.bf16.mxu0 0
  %517 = vmatpush1.bf16.msra.mxu0 %v417
  %518 = vmatprep.subr.bf16.mxu0 0
  %519 = vmatpush1.bf16.msra.mxu0 %v418
  %520 = vmatprep.mubr.bf16.mxu0 %v224
  %521 = vmatmul.mubr.bf16.gmra.mrb[0].mxu0 %v223
  %v522 = vpop.f32.mrb[0].mxu0
  %v523 = vadd.f32 %v122, %v522
  %v524 = vpop.f32.mrb[0].mxu0
  %v525 = vpop.f32.mrb[0].mxu0
  %v526 = vadd.f32 %v127, %v525
  %v527 = vpop.f32.mrb[0].mxu0
  %528 = vmatprep.mubr.bf16.mxu0 %v229
  %529 = vmatmul.mubr.bf16.gmra.mrb[0].mxu0 %v228
  %v530 = vpop.f32.mrb[0].mxu0
  %v531 = vadd.f32 %v132, %v530
  %v532 = vpop.f32.mrb[0].mxu0
  %v533 = vpop.f32.mrb[0].mxu0
  %v534 = vadd.f32 %v137, %v533
  %v535 = vpop.f32.mrb[0].mxu0
  %536 = vmatprep.mubr.bf16.mxu0 %v234
  %537 = vmatmul.mubr.bf16.gmra.mrb[0].mxu0 %v233
  %v538 = vpop.f32.mrb[0].mxu0
  %v539 = vadd.f32 %v142, %v538
  %v540 = vpop.f32.mrb[0].mxu0
  %v541 = vpop.f32.mrb[0].mxu0
  %v542 = vadd.f32 %v147, %v541
  %v543 = vpop.f32.mrb[0].mxu0
  %544 = vmatprep.mubr.bf16.mxu0 %v239
  %545 = vmatmul.mubr.bf16.gmra.mrb[0].mxu0 %v238
  %v546 = vpop.f32.mrb[0].mxu0
  %v547 = vadd.f32 %v152, %v546
  %v548 = vpop.f32.mrb[0].mxu0
  %v549 = vpop.f32.mrb[0].mxu0
  %v550 = vadd.f32 %v157, %v549
  %v551 = vpop.f32.mrb[0].mxu0
  %552 = vdwg.mxu0
  %553 = vmatprep.subr.bf16.mxu0 0
  %554 = vmatpush1.bf16.msra.mxu0 %v419
  %555 = vmatprep.subr.bf16.mxu0 0
  %556 = vmatpush1.bf16.msra.mxu0 %v420
  %557 = vmatprep.subr.bf16.mxu0 0
  %558 = vmatpush1.bf16.msra.mxu0 %v421
  %559 = vmatprep.subr.bf16.mxu0 0
  %560 = vmatpush1.bf16.msra.mxu0 %v422
  %561 = vmatprep.subr.bf16.mxu0 0
  %562 = vmatpush1.bf16.msra.mxu0 %v423
  %563 = vmatprep.subr.bf16.mxu0 0
  %564 = vmatpush1.bf16.msra.mxu0 %v424
  %565 = vmatprep.subr.bf16.mxu0 0
  %566 = vmatpush1.bf16.msra.mxu0 %v425
  %567 = vmatprep.subr.bf16.mxu0 0
  %568 = vmatpush1.bf16.msra.mxu0 %v426
  %569 = vmatprep.subr.bf16.mxu0 0
  %570 = vmatpush1.bf16.msra.mxu0 %v427
  %571 = vmatprep.subr.bf16.mxu0 0
  %572 = vmatpush1.bf16.msra.mxu0 %v428
  %573 = vmatprep.subr.bf16.mxu0 0
  %574 = vmatpush1.bf16.msra.mxu0 %v429
  %575 = vmatprep.subr.bf16.mxu0 0
  %576 = vmatpush1.bf16.msra.mxu0 %v430
  %577 = vmatprep.subr.bf16.mxu0 0
  %578 = vmatpush1.bf16.msra.mxu0 %v431
  %579 = vmatprep.subr.bf16.mxu0 0
  %580 = vmatpush1.bf16.msra.mxu0 %v432
  %581 = vmatprep.subr.bf16.mxu0 0
  %582 = vmatpush1.bf16.msra.mxu0 %v433
  %583 = vmatprep.subr.bf16.mxu0 0
  %584 = vmatpush1.bf16.msra.mxu0 %v434
  %585 = vmatprep.mubr.bf16.mxu0 %v226
  %586 = vmatmul.mubr.bf16.gmra.mrb[0].mxu0 %v225
  %v587 = vpop.f32.mrb[0].mxu0
  %v588 = vadd.f32 %v523, %v587
  %v589 = vpop.f32.mrb[0].mxu0
  %v590 = vpop.f32.mrb[0].mxu0
  %v591 = vadd.f32 %v526, %v590
  %v592 = vpop.f32.mrb[0].mxu0
  %593 = vmatprep.mubr.bf16.mxu0 %v231
  %594 = vmatmul.mubr.bf16.gmra.mrb[0].mxu0 %v230
  %v595 = vpop.f32.mrb[0].mxu0
  %v596 = vadd.f32 %v531, %v595
  %v597 = vpop.f32.mrb[0].mxu0
  %v598 = vpop.f32.mrb[0].mxu0
  %v599 = vadd.f32 %v534, %v598
  %v600 = vpop.f32.mrb[0].mxu0
  %601 = vmatprep.mubr.bf16.mxu0 %v236
  %602 = vmatmul.mubr.bf16.gmra.mrb[0].mxu0 %v235
  %v603 = vpop.f32.mrb[0].mxu0
  %v604 = vadd.f32 %v539, %v603
  %v605 = vpop.f32.mrb[0].mxu0
  %v606 = vpop.f32.mrb[0].mxu0
  %v607 = vadd.f32 %v542, %v606
  %v608 = vpop.f32.mrb[0].mxu0
  %609 = vmatprep.mubr.bf16.mxu0 %v241
  %610 = vmatmul.mubr.bf16.gmra.mrb[0].mxu0 %v240
  %v611 = vpop.f32.mrb[0].mxu0
  %v612 = vadd.f32 %v547, %v611
  %v613 = vpop.f32.mrb[0].mxu0
  %v614 = vpop.f32.mrb[0].mxu0
  %v615 = vadd.f32 %v550, %v614
  %v616 = vpop.f32.mrb[0].mxu0
  %617 = vdwg.mxu0
  %618 = vmatprep.subr.bf16.mxu0 0
  %619 = vmatpush1.bf16.msra.mxu0 %v435
  %620 = vmatprep.subr.bf16.mxu0 0
  %621 = vmatpush1.bf16.msra.mxu0 %v436
  %622 = vmatprep.subr.bf16.mxu0 0
  %623 = vmatpush1.bf16.msra.mxu0 %v437
  %624 = vmatprep.subr.bf16.mxu0 0
  %625 = vmatpush1.bf16.msra.mxu0 %v438
  %626 = vmatprep.subr.bf16.mxu0 0
  %627 = vmatpush1.bf16.msra.mxu0 0
  %628 = vmatprep.subr.bf16.mxu0 0
  %629 = vmatpush1.bf16.msra.mxu0 0
  %630 = vmatprep.subr.bf16.mxu0 0
  %631 = vmatpush1.bf16.msra.mxu0 0
  %632 = vmatprep.subr.bf16.mxu0 0
  %633 = vmatpush1.bf16.msra.mxu0 0
  %634 = vmatprep.subr.bf16.mxu0 0
  %635 = vmatpush1.bf16.msra.mxu0 0
  %636 = vmatprep.subr.bf16.mxu0 0
  %637 = vmatpush1.bf16.msra.mxu0 0
  %638 = vmatprep.subr.bf16.mxu0 0
  %639 = vmatpush1.bf16.msra.mxu0 0
  %640 = vmatprep.subr.bf16.mxu0 0
  %641 = vmatpush1.bf16.msra.mxu0 0
  %642 = vmatprep.subr.bf16.mxu0 0
  %643 = vmatpush1.bf16.msra.mxu0 0
  %644 = vmatprep.subr.bf16.mxu0 0
  %645 = vmatpush1.bf16.msra.mxu0 0
  %646 = vmatprep.subr.bf16.mxu0 0
  %647 = vmatpush1.bf16.msra.mxu0 0
  %648 = vmatprep.subr.bf16.mxu0 0
  %649 = vmatpush1.bf16.msra.mxu0 0
  %650 = vmatprep.mubr.bf16.mxu0 0
  %651 = vmatmul.mubr.bf16.gmra.mrb[0].mxu0 %v477
  %v652 = vpop.f32.mrb[0].mxu0
  %v653 = vadd.f32 %v588, %v652
  %v654 = vpop.f32.mrb[0].mxu0
  %v655 = vpop.f32.mrb[0].mxu0
  %v656 = vadd.f32 %v591, %v655
  %v657 = vpop.f32.mrb[0].mxu0
  %658 = vmatprep.mubr.bf16.mxu0 0
  %659 = vmatmul.mubr.bf16.gmra.mrb[0].mxu0 %v480
  %v660 = vpop.f32.mrb[0].mxu0
  %v661 = vadd.f32 %v596, %v660
  %v662 = vpop.f32.mrb[0].mxu0
  %v663 = vpop.f32.mrb[0].mxu0
  %v664 = vadd.f32 %v599, %v663
  %v665 = vpop.f32.mrb[0].mxu0
  %666 = vmatprep.mubr.bf16.mxu0 0
  %667 = vmatmul.mubr.bf16.gmra.mrb[0].mxu0 %v483
  %v668 = vpop.f32.mrb[0].mxu0
  %v669 = vadd.f32 %v604, %v668
  %v670 = vpop.f32.mrb[0].mxu0
  %v671 = vpop.f32.mrb[0].mxu0
  %v672 = vadd.f32 %v607, %v671
  %v673 = vpop.f32.mrb[0].mxu0
  %674 = vmatprep.mubr.bf16.mxu0 0
  %675 = vmatmul.mubr.bf16.gmra.mrb[0].mxu0 %v486
  %v676 = vpop.f32.mrb[0].mxu0
  %v677 = vadd.f32 %v612, %v676
  %v678 = vpop.f32.mrb[0].mxu0
  %v679 = vpop.f32.mrb[0].mxu0
  %v680 = vadd.f32 %v615, %v679
  %v681 = vpop.f32.mrb[0].mxu0
  %682 = vdwg.mxu0
  %v683 = vmax.f32 %v653, 0.0
  %v684 = vmax.f32 %v656, 0.0
  %v685 = vmax.f32 %v661, 0.0
  %v686 = vmax.f32 %v664, 0.0
  %v687 = vmax.f32 %v669, 0.0
  %v688 = vmax.f32 %v672, 0.0
  %v689 = vmax.f32 %v677, 0.0
  %v690 = vmax.f32 %v680, 0.0
  %v691 = vpack.c.bf16 %v684, %v683
  %v692 = vpack.c.bf16 %v686, %v685
  %v693 = vpack.c.bf16 %v688, %v687
  %v694 = vpack.c.bf16 %v690, %v689
  %v699 = vunpack.c.l.b16 %v691
  %v700 = vunpack.c.h.b16 %v691
  %v701 = vunpack.c.l.b16 %v692
  %v702 = vunpack.c.h.b16 %v692
  %v703 = vunpack.c.l.b16 %v693
  %v704 = vunpack.c.h.b16 %v693
  %v705 = vunpack.c.l.b16 %v694
  %v706 = vunpack.c.h.b16 %v694
  %v707 = vpack.c.b16 %v699, %v699
  %v708 = vpack.c.b16 %v700, %v700
  %v709 = vpack.c.b16 %v701, %v701
  %v710 = vpack.c.b16 %v702, %v702
  %v711 = vpack.c.b16 %v703, %v703
  %v712 = vpack.c.b16 %v704, %v704
  %v713 = vpack.c.b16 %v705, %v705
  %v714 = vpack.c.b16 %v706, %v706
  %723 = vst [vmem:[%s3] sm:$0xf] %v707
  %724 = vst [vmem:[%s3 + $0x4] sm:$0xf] %v708
  %725 = vst [vmem:[%s3 + $0x8] sm:$0xf] %v709
  %726 = vst [vmem:[%s3 + $0xc] sm:$0xf] %v710
  %727 = vst [vmem:[%s3 + $0x10] sm:$0xf] %v711
  %728 = vst [vmem:[%s3 + $0x14] sm:$0xf] %v712
  %729 = vst [vmem:[%s3 + $0x18] sm:$0xf] %v713
  %730 = vst [vmem:[%s3 + $0x1c] sm:$0xf] %v714
  // Predicated region
  $region14: #{rawvsr_forward.18} parent=0 // pred_check
    _
  $region15: #{rawvsr_forward.18} parent=0 // pred_check_branch
    %732 = sbr.rel (0) target = $region17
  $region16: #{rawvsr_forward.18} parent=0 // pred_region
    _
  $region17: #{rawvsr_forward.18} parent=0 // pred_fallthru
    _
  // Predicated region
  $region18: #{rawvsr_forward.18} parent=0 // pred_check
    _
  $region19: #{rawvsr_forward.18} parent=0 // pred_check_branch
    %734 = sbr.rel (0) target = $region21
  $region20: #{rawvsr_forward.18} parent=0 // pred_region
    _
  $region21: #{rawvsr_forward.18} parent=0 // pred_fallthru
    _

// kernel: rawvsr_forward.20
$region0: #{rawvsr_forward.20}
  #allocation0 [shape = 'u32[]', space=smem, size = 0x4, offset = 0x4, fixed_abs, tag = 'smem constant byte address 0x4 - core index']
  #allocation1 [shape = 'u32[144,128]{1,0:T(1,128)}', space=vmem, size = 0x12000, scoped, tag = 'internal scratch']
  %s0 = inlined_call_operand.vmem [shape: bf16[32,128], index: 0, kind: input, shape index: {}]
  %s1 = inlined_call_operand.vmem [shape: bf16[128,128], index: 1, kind: input, shape index: {}]
  %s2 = inlined_call_operand.vmem [shape: f32[32,1], index: 2, kind: input, shape index: {}]
  %s3 = inlined_call_operand.vmem [shape: bf16[32,128], index: 3, kind: output, shape index: {}]
  %s4 = sld [smem:[#allocation0]]
  $region22: #{rawvsr_forward.20} parent=0
    _
  %s6 = ssub.s32 1, %s4
  %s7 = scalar_select 0, %s6, %s4
  // Predicated region
  $region2: #{rawvsr_forward.20} parent=0 // pred_check
    _
  $region3: #{rawvsr_forward.20} parent=0 // pred_check_branch
    %9 = sbr.rel (0) target = $region5
  $region4: #{rawvsr_forward.20} parent=0 // pred_region
    _
  $region5: #{rawvsr_forward.20} parent=0 // pred_fallthru
    _
  // Predicated region
  $region6: #{rawvsr_forward.20} parent=0 // pred_check
    _
  $region7: #{rawvsr_forward.20} parent=0 // pred_check_branch
    %11 = sbr.rel (0) target = $region9
  $region8: #{rawvsr_forward.20} parent=0 // pred_region
    _
  $region9: #{rawvsr_forward.20} parent=0 // pred_fallthru
    _
  // Predicated region
  $region10: #{rawvsr_forward.20} parent=0 // pred_check
    _
  $region11: #{rawvsr_forward.20} parent=0 // pred_check_branch
    %13 = sbr.rel (0) target = $region13
  $region12: #{rawvsr_forward.20} parent=0 // pred_region
    _
  $region13: #{rawvsr_forward.20} parent=0 // pred_fallthru
    _
  %v15 = vld [vmem:[%s0] sm:$0xf]
  %v16 = vld [vmem:[%s0 + $0x4] sm:$0xf]
  %v17 = vld [vmem:[%s0 + $0x8] sm:$0xf]
  %v18 = vld [vmem:[%s0 + $0xc] sm:$0xf]
  %v19 = vld [vmem:[%s1] sm:$0xf]
  %v20 = vld [vmem:[%s1 + $0x4] sm:$0xf]
  %v21 = vld [vmem:[%s1 + $0x8] sm:$0xf]
  %v22 = vld [vmem:[%s1 + $0xc] sm:$0xf]
  %v23 = vld [vmem:[%s1 + $0x10] sm:$0xf]
  %v24 = vld [vmem:[%s1 + $0x14] sm:$0xf]
  %v25 = vld [vmem:[%s1 + $0x18] sm:$0xf]
  %v26 = vld [vmem:[%s1 + $0x1c] sm:$0xf]
  %v27 = vld [vmem:[%s1 + $0x20] sm:$0xf]
  %v28 = vld [vmem:[%s1 + $0x24] sm:$0xf]
  %v29 = vld [vmem:[%s1 + $0x28] sm:$0xf]
  %v30 = vld [vmem:[%s1 + $0x2c] sm:$0xf]
  %v31 = vld [vmem:[%s1 + $0x30] sm:$0xf]
  %v32 = vld [vmem:[%s1 + $0x34] sm:$0xf]
  %v33 = vld [vmem:[%s1 + $0x38] sm:$0xf]
  %v34 = vld [vmem:[%s1 + $0x3c] sm:$0xf]
  %v35 = vld [vmem:[%s2] sm:$0xff]
  %v36 = vld [vmem:[%s2 + $0x8] sm:$0xff]
  %v37 = vld [vmem:[%s2 + $0x10] sm:$0xff]
  %v38 = vld [vmem:[%s2 + $0x18] sm:$0xff]
  %40 = vset.pattern.permute.xlu0 0
  %41 = vperm.xlu0 %40, %v35
  %v42 = vpop.permute.xlu0 %41
  %45 = vset.pattern.permute.xlu0 0
  %46 = vperm.xlu0 %45, %v36
  %v47 = vpop.permute.xlu0 %46
  %50 = vset.pattern.permute.xlu0 0
  %51 = vperm.xlu0 %50, %v37
  %v52 = vpop.permute.xlu0 %51
  %55 = vset.pattern.permute.xlu0 0
  %56 = vperm.xlu0 %55, %v38
  %v57 = vpop.permute.xlu0 %56
  %v63 = vunpack.c.l.b16 %v15
  %v64 = vunpack.c.l.b16 %v16
  %v65 = vunpack.c.l.b16 %v17
  %v66 = vunpack.c.l.b16 %v18
  %v67 = vpack.c.b16 %v64, %v63
  %v68 = vpack.c.b16 %v66, %v65
  %v87 = vunpack.c.l.b16 %v19
  %v88 = vunpack.c.l.b16 %v20
  %v89 = vunpack.c.l.b16 %v21
  %v90 = vunpack.c.l.b16 %v22
  %v91 = vunpack.c.l.b16 %v23
  %v92 = vunpack.c.l.b16 %v24
  %v93 = vunpack.c.l.b16 %v25
  %v94 = vunpack.c.l.b16 %v26
  %v95 = vunpack.c.l.b16 %v27
  %v96 = vunpack.c.l.b16 %v28
  %v97 = vunpack.c.l.b16 %v29
  %v98 = vunpack.c.l.b16 %v30
  %v99 = vunpack.c.l.b16 %v31
  %v100 = vunpack.c.l.b16 %v32
  %v101 = vunpack.c.l.b16 %v33
  %v102 = vunpack.c.l.b16 %v34
  %v103 = vpack.c.b16 %v88, %v87
  %v104 = vpack.c.b16 %v90, %v89
  %v105 = vpack.c.b16 %v92, %v91
  %v106 = vpack.c.b16 %v94, %v93
  %v107 = vpack.c.b16 %v96, %v95
  %v108 = vpack.c.b16 %v98, %v97
  %v109 = vpack.c.b16 %v100, %v99
  %v110 = vpack.c.b16 %v102, %v101
  %119 = vmatprep.subr.bf16.mxu0 0
  %120 = vmatpush1.bf16.msra.mxu0 %v103
  %121 = vmatprep.subr.bf16.mxu0 0
  %122 = vmatpush1.bf16.msra.mxu0 %v104
  %123 = vmatprep.subr.bf16.mxu0 0
  %124 = vmatpush1.bf16.msra.mxu0 %v105
  %125 = vmatprep.subr.bf16.mxu0 0
  %126 = vmatpush1.bf16.msra.mxu0 %v106
  %127 = vmatprep.subr.bf16.mxu0 0
  %128 = vmatpush1.bf16.msra.mxu0 %v107
  %129 = vmatprep.subr.bf16.mxu0 0
  %130 = vmatpush1.bf16.msra.mxu0 %v108
  %131 = vmatprep.subr.bf16.mxu0 0
  %132 = vmatpush1.bf16.msra.mxu0 %v109
  %133 = vmatprep.subr.bf16.mxu0 0
  %134 = vmatpush1.bf16.msra.mxu0 %v110
  %135 = vmatprep.subr.bf16.mxu0 0
  %136 = vmatpush1.bf16.msra.mxu0 0
  %137 = vmatprep.subr.bf16.mxu0 0
  %138 = vmatpush1.bf16.msra.mxu0 0
  %139 = vmatprep.subr.bf16.mxu0 0
  %140 = vmatpush1.bf16.msra.mxu0 0
  %141 = vmatprep.subr.bf16.mxu0 0
  %142 = vmatpush1.bf16.msra.mxu0 0
  %143 = vmatprep.subr.bf16.mxu0 0
  %144 = vmatpush1.bf16.msra.mxu0 0
  %145 = vmatprep.subr.bf16.mxu0 0
  %146 = vmatpush1.bf16.msra.mxu0 0
  %147 = vmatprep.subr.bf16.mxu0 0
  %148 = vmatpush1.bf16.msra.mxu0 0
  %149 = vmatprep.subr.bf16.mxu0 0
  %150 = vmatpush1.bf16.msra.mxu0 0
  %151 = vmatprep.mubr.bf16.mxu0 0
  %152 = vmatmul.mubr.bf16.gmra.mrb[0].mxu0 %v67
  %v153 = vpop.f32.mrb[0].mxu0
  %v154 = vadd.f32 %v42, %v153
  %v155 = vpop.f32.mrb[0].mxu0
  %v156 = vpop.f32.mrb[0].mxu0
  %v157 = vadd.f32 %v47, %v156
  %v158 = vpop.f32.mrb[0].mxu0
  %159 = vmatprep.mubr.bf16.mxu0 0
  %160 = vmatmul.mubr.bf16.gmra.mrb[0].mxu0 %v68
  %v161 = vpop.f32.mrb[0].mxu0
  %v162 = vadd.f32 %v52, %v161
  %v163 = vpop.f32.mrb[0].mxu0
  %v164 = vpop.f32.mrb[0].mxu0
  %v165 = vadd.f32 %v57, %v164
  %v166 = vpop.f32.mrb[0].mxu0
  %167 = vdwg.mxu0
  %v168 = vmax.f32 %v154, 0.0
  %v169 = vmax.f32 %v157, 0.0
  %v170 = vmax.f32 %v162, 0.0
  %v171 = vmax.f32 %v165, 0.0
  %v172 = vpack.c.bf16 %v169, %v168
  %v173 = vpack.c.bf16 %v171, %v170
  %v176 = vunpack.c.l.b16 %v172
  %v177 = vunpack.c.h.b16 %v172
  %v178 = vunpack.c.l.b16 %v173
  %v179 = vunpack.c.h.b16 %v173
  %v180 = vpack.c.b16 %v176, %v176
  %v181 = vpack.c.b16 %v177, %v177
  %v182 = vpack.c.b16 %v178, %v178
  %v183 = vpack.c.b16 %v179, %v179
  %188 = vst [vmem:[%s3] sm:$0xf] %v180
  %189 = vst [vmem:[%s3 + $0x4] sm:$0xf] %v181
  %190 = vst [vmem:[%s3 + $0x8] sm:$0xf] %v182
  %191 = vst [vmem:[%s3 + $0xc] sm:$0xf] %v183
  // Predicated region
  $region14: #{rawvsr_forward.20} parent=0 // pred_check
    _
  $region15: #{rawvsr_forward.20} parent=0 // pred_check_branch
    %193 = sbr.rel (0) target = $region17
  $region16: #{rawvsr_forward.20} parent=0 // pred_region
    _
  $region17: #{rawvsr_forward.20} parent=0 // pred_fallthru
    _
  // Predicated region
  $region18: #{rawvsr_forward.20} parent=0 // pred_check
    _
  $region19: #{rawvsr_forward.20} parent=0 // pred_check_branch
    %195 = sbr.rel (0) target = $region21
  $region20: #{rawvsr_forward.20} parent=0 // pred_region
    _
  $region21: #{rawvsr_forward.20} parent=0 // pred_fallthru
    _

// kernel: rawvsr_forward.19
$region0: #{rawvsr_forward.19}
  #allocation0 [shape = 'u32[]', space=smem, size = 0x4, offset = 0x4, fixed_abs, tag = 'smem constant byte address 0x4 - core index']
  #allocation1 [shape = 'u32[144,128]{1,0:T(1,128)}', space=vmem, size = 0x12000, scoped, tag = 'internal scratch']
  %s0 = inlined_call_operand.vmem [shape: bf16[32,64], index: 0, kind: input, shape index: {}]
  %s1 = inlined_call_operand.vmem [shape: bf16[64,128], index: 1, kind: input, shape index: {}]
  %s2 = inlined_call_operand.vmem [shape: f32[32,1], index: 2, kind: input, shape index: {}]
  %s3 = inlined_call_operand.vmem [shape: bf16[32,128], index: 3, kind: output, shape index: {}]
  %s4 = sld [smem:[#allocation0]]
  $region22: #{rawvsr_forward.19} parent=0
    _
  %s6 = ssub.s32 1, %s4
  %s7 = scalar_select 0, %s6, %s4
  // Predicated region
  $region2: #{rawvsr_forward.19} parent=0 // pred_check
    _
  $region3: #{rawvsr_forward.19} parent=0 // pred_check_branch
    %9 = sbr.rel (0) target = $region5
  $region4: #{rawvsr_forward.19} parent=0 // pred_region
    _
  $region5: #{rawvsr_forward.19} parent=0 // pred_fallthru
    _
  // Predicated region
  $region6: #{rawvsr_forward.19} parent=0 // pred_check
    _
  $region7: #{rawvsr_forward.19} parent=0 // pred_check_branch
    %11 = sbr.rel (0) target = $region9
  $region8: #{rawvsr_forward.19} parent=0 // pred_region
    _
  $region9: #{rawvsr_forward.19} parent=0 // pred_fallthru
    _
  // Predicated region
  $region10: #{rawvsr_forward.19} parent=0 // pred_check
    _
  $region11: #{rawvsr_forward.19} parent=0 // pred_check_branch
    %13 = sbr.rel (0) target = $region13
  $region12: #{rawvsr_forward.19} parent=0 // pred_region
    _
  $region13: #{rawvsr_forward.19} parent=0 // pred_fallthru
    _
  %v15 = vld [vmem:[%s0] sm:$0xf]
  %v16 = vld [vmem:[%s0 + $0x4] sm:$0xf]
  %v17 = vld [vmem:[%s0 + $0x8] sm:$0xf]
  %v18 = vld [vmem:[%s0 + $0xc] sm:$0xf]
  %v19 = vld [vmem:[%s1] sm:$0xf]
  %v20 = vld [vmem:[%s1 + $0x4] sm:$0xf]
  %v21 = vld [vmem:[%s1 + $0x8] sm:$0xf]
  %v22 = vld [vmem:[%s1 + $0xc] sm:$0xf]
  %v23 = vld [vmem:[%s1 + $0x10] sm:$0xf]
  %v24 = vld [vmem:[%s1 + $0x14] sm:$0xf]
  %v25 = vld [vmem:[%s1 + $0x18] sm:$0xf]
  %v26 = vld [vmem:[%s1 + $0x1c] sm:$0xf]
  %v27 = vld [vmem:[%s2] sm:$0xff]
  %v28 = vld [vmem:[%s2 + $0x8] sm:$0xff]
  %v29 = vld [vmem:[%s2 + $0x10] sm:$0xff]
  %v30 = vld [vmem:[%s2 + $0x18] sm:$0xff]
  %32 = vset.pattern.permute.xlu0 0
  %33 = vperm.xlu0 %32, %v27
  %v34 = vpop.permute.xlu0 %33
  %37 = vset.pattern.permute.xlu0 0
  %38 = vperm.xlu0 %37, %v28
  %v39 = vpop.permute.xlu0 %38
  %42 = vset.pattern.permute.xlu0 0
  %43 = vperm.xlu0 %42, %v29
  %v44 = vpop.permute.xlu0 %43
  %47 = vset.pattern.permute.xlu0 0
  %48 = vperm.xlu0 %47, %v30
  %v49 = vpop.permute.xlu0 %48
  %v55 = vunpack.c.l.b16 %v15
  %v56 = vunpack.c.l.b16 %v16
  %v57 = vunpack.c.l.b16 %v17
  %v58 = vunpack.c.l.b16 %v18
  %v59 = vpack.c.b16 %v56, %v55
  %v60 = vpack.c.b16 %v58, %v57
  %v69 = vunpack.c.l.b16 %v19
  %v70 = vunpack.c.l.b16 %v20
  %v71 = vunpack.c.l.b16 %v21
  %v72 = vunpack.c.l.b16 %v22
  %v73 = vunpack.c.l.b16 %v23
  %v74 = vunpack.c.l.b16 %v24
  %v75 = vunpack.c.l.b16 %v25
  %v76 = vunpack.c.l.b16 %v26
  %v77 = vpack.c.b16 %v70, %v69
  %v78 = vpack.c.b16 %v72, %v71
  %v79 = vpack.c.b16 %v74, %v73
  %v80 = vpack.c.b16 %v76, %v75
  %vm85 = vcmask 523264
  %v87 = vsel %vm85, %v59, 0
  %v90 = vsel %vm85, %v60, 0
  %92 = vmatprep.subr.bf16.mxu0 0
  %93 = vmatpush1.bf16.msra.mxu0 %v77
  %94 = vmatprep.subr.bf16.mxu0 0
  %95 = vmatpush1.bf16.msra.mxu0 %v78
  %96 = vmatprep.subr.bf16.mxu0 0
  %97 = vmatpush1.bf16.msra.mxu0 %v79
  %98 = vmatprep.subr.bf16.mxu0 0
  %99 = vmatpush1.bf16.msra.mxu0 %v80
  %100 = vmatprep.subr.bf16.mxu0 0
  %101 = vmatpush1.bf16.msra.mxu0 0
  %102 = vmatprep.subr.bf16.mxu0 0
  %103 = vmatpush1.bf16.msra.mxu0 0
  %104 = vmatprep.subr.bf16.mxu0 0
  %105 = vmatpush1.bf16.msra.mxu0 0
  %106 = vmatprep.subr.bf16.mxu0 0
  %107 = vmatpush1.bf16.msra.mxu0 0
  %108 = vmatprep.subr.bf16.mxu0 0
  %109 = vmatpush1.bf16.msra.mxu0 0
  %110 = vmatprep.subr.bf16.mxu0 0
  %111 = vmatpush1.bf16.msra.mxu0 0
  %112 = vmatprep.subr.bf16.mxu0 0
  %113 = vmatpush1.bf16.msra.mxu0 0
  %114 = vmatprep.subr.bf16.mxu0 0
  %115 = vmatpush1.bf16.msra.mxu0 0
  %116 = vmatprep.subr.bf16.mxu0 0
  %117 = vmatpush1.bf16.msra.mxu0 0
  %118 = vmatprep.subr.bf16.mxu0 0
  %119 = vmatpush1.bf16.msra.mxu0 0
  %120 = vmatprep.subr.bf16.mxu0 0
  %121 = vmatpush1.bf16.msra.mxu0 0
  %122 = vmatprep.subr.bf16.mxu0 0
  %123 = vmatpush1.bf16.msra.mxu0 0
  %124 = vmatprep.mubr.bf16.mxu0 0
  %125 = vmatmul.mubr.bf16.gmra.mrb[0].mxu0 %v87
  %v126 = vpop.f32.mrb[0].mxu0
  %v127 = vadd.f32 %v34, %v126
  %v128 = vpop.f32.mrb[0].mxu0
  %v129 = vpop.f32.mrb[0].mxu0
  %v130 = vadd.f32 %v39, %v129
  %v131 = vpop.f32.mrb[0].mxu0
  %132 = vmatprep.mubr.bf16.mxu0 0
  %133 = vmatmul.mubr.bf16.gmra.mrb[0].mxu0 %v90
  %v134 = vpop.f32.mrb[0].mxu0
  %v135 = vadd.f32 %v44, %v134
  %v136 = vpop.f32.mrb[0].mxu0
  %v137 = vpop.f32.mrb[0].mxu0
  %v138 = vadd.f32 %v49, %v137
  %v139 = vpop.f32.mrb[0].mxu0
  %140 = vdwg.mxu0
  %v141 = vmax.f32 %v127, 0.0
  %v142 = vmax.f32 %v130, 0.0
  %v143 = vmax.f32 %v135, 0.0
  %v144 = vmax.f32 %v138, 0.0
  %v145 = vpack.c.bf16 %v142, %v141
  %v146 = vpack.c.bf16 %v144, %v143
  %v149 = vunpack.c.l.b16 %v145
  %v150 = vunpack.c.h.b16 %v145
  %v151 = vunpack.c.l.b16 %v146
  %v152 = vunpack.c.h.b16 %v146
  %v153 = vpack.c.b16 %v149, %v149
  %v154 = vpack.c.b16 %v150, %v150
  %v155 = vpack.c.b16 %v151, %v151
  %v156 = vpack.c.b16 %v152, %v152
  %161 = vst [vmem:[%s3] sm:$0xf] %v153
  %162 = vst [vmem:[%s3 + $0x4] sm:$0xf] %v154
  %163 = vst [vmem:[%s3 + $0x8] sm:$0xf] %v155
  %164 = vst [vmem:[%s3 + $0xc] sm:$0xf] %v156
  // Predicated region
  $region14: #{rawvsr_forward.19} parent=0 // pred_check
    _
  $region15: #{rawvsr_forward.19} parent=0 // pred_check_branch
    %166 = sbr.rel (0) target = $region17
  $region16: #{rawvsr_forward.19} parent=0 // pred_region
    _
  $region17: #{rawvsr_forward.19} parent=0 // pred_fallthru
    _
  // Predicated region
  $region18: #{rawvsr_forward.19} parent=0 // pred_check
    _
  $region19: #{rawvsr_forward.19} parent=0 // pred_check_branch
    %168 = sbr.rel (0) target = $region21
  $region20: #{rawvsr_forward.19} parent=0 // pred_region
    _
  $region21: #{rawvsr_forward.19} parent=0 // pred_fallthru
    _

// kernel: rawvsr_forward.22
$region0: #{rawvsr_forward.22}
  #allocation0 [shape = 'u32[]', space=smem, size = 0x4, offset = 0x4, fixed_abs, tag = 'smem constant byte address 0x4 - core index']
  #allocation1 [shape = 'u32[144,128]{1,0:T(1,128)}', space=vmem, size = 0x12000, scoped, tag = 'internal scratch']
  %s0 = inlined_call_operand.vmem [shape: bf16[32,256], index: 0, kind: input, shape index: {}]
  %s1 = inlined_call_operand.vmem [shape: bf16[256,128], index: 1, kind: input, shape index: {}]
  %s2 = inlined_call_operand.vmem [shape: f32[32,1], index: 2, kind: input, shape index: {}]
  %s3 = inlined_call_operand.vmem [shape: bf16[32,128], index: 3, kind: output, shape index: {}]
  %s4 = sld [smem:[#allocation0]]
  $region22: #{rawvsr_forward.22} parent=0
    _
  %s6 = ssub.s32 1, %s4
  %s7 = scalar_select 0, %s6, %s4
  // Predicated region
  $region2: #{rawvsr_forward.22} parent=0 // pred_check
    _
  $region3: #{rawvsr_forward.22} parent=0 // pred_check_branch
    %9 = sbr.rel (0) target = $region5
  $region4: #{rawvsr_forward.22} parent=0 // pred_region
    _
  $region5: #{rawvsr_forward.22} parent=0 // pred_fallthru
    _
  // Predicated region
  $region6: #{rawvsr_forward.22} parent=0 // pred_check
    _
  $region7: #{rawvsr_forward.22} parent=0 // pred_check_branch
    %11 = sbr.rel (0) target = $region9
  $region8: #{rawvsr_forward.22} parent=0 // pred_region
    _
  $region9: #{rawvsr_forward.22} parent=0 // pred_fallthru
    _
  // Predicated region
  $region10: #{rawvsr_forward.22} parent=0 // pred_check
    _
  $region11: #{rawvsr_forward.22} parent=0 // pred_check_branch
    %13 = sbr.rel (0) target = $region13
  $region12: #{rawvsr_forward.22} parent=0 // pred_region
    _
  $region13: #{rawvsr_forward.22} parent=0 // pred_fallthru
    _
  %v15 = vld [vmem:[%s0] sm:$0xff]
  %v16 = vld [vmem:[%s0 + $0x8] sm:$0xff]
  %v17 = vld [vmem:[%s0 + $0x10] sm:$0xff]
  %v18 = vld [vmem:[%s0 + $0x18] sm:$0xff]
  %v19 = vld [vmem:[%s1] sm:$0xf]
  %v20 = vld [vmem:[%s1 + $0x4] sm:$0xf]
  %v21 = vld [vmem:[%s1 + $0x8] sm:$0xf]
  %v22 = vld [vmem:[%s1 + $0xc] sm:$0xf]
  %v23 = vld [vmem:[%s1 + $0x10] sm:$0xf]
  %v24 = vld [vmem:[%s1 + $0x14] sm:$0xf]
  %v25 = vld [vmem:[%s1 + $0x18] sm:$0xf]
  %v26 = vld [vmem:[%s1 + $0x1c] sm:$0xf]
  %v27 = vld [vmem:[%s1 + $0x20] sm:$0xf]
  %v28 = vld [vmem:[%s1 + $0x24] sm:$0xf]
  %v29 = vld [vmem:[%s1 + $0x28] sm:$0xf]
  %v30 = vld [vmem:[%s1 + $0x2c] sm:$0xf]
  %v31 = vld [vmem:[%s1 + $0x30] sm:$0xf]
  %v32 = vld [vmem:[%s1 + $0x34] sm:$0xf]
  %v33 = vld [vmem:[%s1 + $0x38] sm:$0xf]
  %v34 = vld [vmem:[%s1 + $0x3c] sm:$0xf]
  %v35 = vld [vmem:[%s1 + $0x40] sm:$0xf]
  %v36 = vld [vmem:[%s1 + $0x44] sm:$0xf]
  %v37 = vld [vmem:[%s1 + $0x48] sm:$0xf]
  %v38 = vld [vmem:[%s1 + $0x4c] sm:$0xf]
  %v39 = vld [vmem:[%s1 + $0x50] sm:$0xf]
  %v40 = vld [vmem:[%s1 + $0x54] sm:$0xf]
  %v41 = vld [vmem:[%s1 + $0x58] sm:$0xf]
  %v42 = vld [vmem:[%s1 + $0x5c] sm:$0xf]
  %v43 = vld [vmem:[%s1 + $0x60] sm:$0xf]
  %v44 = vld [vmem:[%s1 + $0x64] sm:$0xf]
  %v45 = vld [vmem:[%s1 + $0x68] sm:$0xf]
  %v46 = vld [vmem:[%s1 + $0x6c] sm:$0xf]
  %v47 = vld [vmem:[%s1 + $0x70] sm:$0xf]
  %v48 = vld [vmem:[%s1 + $0x74] sm:$0xf]
  %v49 = vld [vmem:[%s1 + $0x78] sm:$0xf]
  %v50 = vld [vmem:[%s1 + $0x7c] sm:$0xf]
  %v51 = vld [vmem:[%s2] sm:$0xff]
  %v52 = vld [vmem:[%s2 + $0x8] sm:$0xff]
  %v53 = vld [vmem:[%s2 + $0x10] sm:$0xff]
  %v54 = vld [vmem:[%s2 + $0x18] sm:$0xff]
  %56 = vset.pattern.permute.xlu0 0
  %57 = vperm.xlu0 %56, %v51
  %v58 = vpop.permute.xlu0 %57
  %61 = vset.pattern.permute.xlu0 0
  %62 = vperm.xlu0 %61, %v52
  %v63 = vpop.permute.xlu0 %62
  %66 = vset.pattern.permute.xlu0 0
  %67 = vperm.xlu0 %66, %v53
  %v68 = vpop.permute.xlu0 %67
  %71 = vset.pattern.permute.xlu0 0
  %72 = vperm.xlu0 %71, %v54
  %v73 = vpop.permute.xlu0 %72
  %v79 = vunpack.c.l.b16 %v15
  %v80 = vunpack.c.h.b16 %v15
  %v81 = vunpack.c.l.b16 %v16
  %v82 = vunpack.c.h.b16 %v16
  %v83 = vunpack.c.l.b16 %v17
  %v84 = vunpack.c.h.b16 %v17
  %v85 = vunpack.c.l.b16 %v18
  %v86 = vunpack.c.h.b16 %v18
  %v87 = vpack.c.b16 %v81, %v79
  %v88 = vpack.c.b16 %v82, %v80
  %v89 = vpack.c.b16 %v85, %v83
  %v90 = vpack.c.b16 %v86, %v84
  %v127 = vunpack.c.l.b16 %v19
  %v128 = vunpack.c.l.b16 %v20
  %v129 = vunpack.c.l.b16 %v21
  %v130 = vunpack.c.l.b16 %v22
  %v131 = vunpack.c.l.b16 %v23
  %v132 = vunpack.c.l.b16 %v24
  %v133 = vunpack.c.l.b16 %v25
  %v134 = vunpack.c.l.b16 %v26
  %v135 = vunpack.c.l.b16 %v27
  %v136 = vunpack.c.l.b16 %v28
  %v137 = vunpack.c.l.b16 %v29
  %v138 = vunpack.c.l.b16 %v30
  %v139 = vunpack.c.l.b16 %v31
  %v140 = vunpack.c.l.b16 %v32
  %v141 = vunpack.c.l.b16 %v33
  %v142 = vunpack.c.l.b16 %v34
  %v143 = vunpack.c.l.b16 %v35
  %v144 = vunpack.c.l.b16 %v36
  %v145 = vunpack.c.l.b16 %v37
  %v146 = vunpack.c.l.b16 %v38
  %v147 = vunpack.c.l.b16 %v39
  %v148 = vunpack.c.l.b16 %v40
  %v149 = vunpack.c.l.b16 %v41
  %v150 = vunpack.c.l.b16 %v42
  %v151 = vunpack.c.l.b16 %v43
  %v152 = vunpack.c.l.b16 %v44
  %v153 = vunpack.c.l.b16 %v45
  %v154 = vunpack.c.l.b16 %v46
  %v155 = vunpack.c.l.b16 %v47
  %v156 = vunpack.c.l.b16 %v48
  %v157 = vunpack.c.l.b16 %v49
  %v158 = vunpack.c.l.b16 %v50
  %v159 = vpack.c.b16 %v128, %v127
  %v160 = vpack.c.b16 %v130, %v129
  %v161 = vpack.c.b16 %v132, %v131
  %v162 = vpack.c.b16 %v134, %v133
  %v163 = vpack.c.b16 %v136, %v135
  %v164 = vpack.c.b16 %v138, %v137
  %v165 = vpack.c.b16 %v140, %v139
  %v166 = vpack.c.b16 %v142, %v141
  %v167 = vpack.c.b16 %v144, %v143
  %v168 = vpack.c.b16 %v146, %v145
  %v169 = vpack.c.b16 %v148, %v147
  %v170 = vpack.c.b16 %v150, %v149
  %v171 = vpack.c.b16 %v152, %v151
  %v172 = vpack.c.b16 %v154, %v153
  %v173 = vpack.c.b16 %v156, %v155
  %v174 = vpack.c.b16 %v158, %v157
  %191 = vmatprep.subr.bf16.mxu0 0
  %192 = vmatpush1.bf16.msra.mxu0 %v159
  %193 = vmatprep.subr.bf16.mxu0 0
  %194 = vmatpush1.bf16.msra.mxu0 %v160
  %195 = vmatprep.subr.bf16.mxu0 0
  %196 = vmatpush1.bf16.msra.mxu0 %v161
  %197 = vmatprep.subr.bf16.mxu0 0
  %198 = vmatpush1.bf16.msra.mxu0 %v162
  %199 = vmatprep.subr.bf16.mxu0 0
  %200 = vmatpush1.bf16.msra.mxu0 %v163
  %201 = vmatprep.subr.bf16.mxu0 0
  %202 = vmatpush1.bf16.msra.mxu0 %v164
  %203 = vmatprep.subr.bf16.mxu0 0
  %204 = vmatpush1.bf16.msra.mxu0 %v165
  %205 = vmatprep.subr.bf16.mxu0 0
  %206 = vmatpush1.bf16.msra.mxu0 %v166
  %207 = vmatprep.subr.bf16.mxu0 0
  %208 = vmatpush1.bf16.msra.mxu0 %v167
  %209 = vmatprep.subr.bf16.mxu0 0
  %210 = vmatpush1.bf16.msra.mxu0 %v168
  %211 = vmatprep.subr.bf16.mxu0 0
  %212 = vmatpush1.bf16.msra.mxu0 %v169
  %213 = vmatprep.subr.bf16.mxu0 0
  %214 = vmatpush1.bf16.msra.mxu0 %v170
  %215 = vmatprep.subr.bf16.mxu0 0
  %216 = vmatpush1.bf16.msra.mxu0 %v171
  %217 = vmatprep.subr.bf16.mxu0 0
  %218 = vmatpush1.bf16.msra.mxu0 %v172
  %219 = vmatprep.subr.bf16.mxu0 0
  %220 = vmatpush1.bf16.msra.mxu0 %v173
  %221 = vmatprep.subr.bf16.mxu0 0
  %222 = vmatpush1.bf16.msra.mxu0 %v174
  %223 = vmatprep.mubr.bf16.mxu0 %v88
  %224 = vmatmul.mubr.bf16.gmra.mrb[0].mxu0 %v87
  %v225 = vpop.f32.mrb[0].mxu0
  %v226 = vadd.f32 %v58, %v225
  %v227 = vpop.f32.mrb[0].mxu0
  %v228 = vpop.f32.mrb[0].mxu0
  %v229 = vadd.f32 %v63, %v228
  %v230 = vpop.f32.mrb[0].mxu0
  %231 = vmatprep.mubr.bf16.mxu0 %v90
  %232 = vmatmul.mubr.bf16.gmra.mrb[0].mxu0 %v89
  %v233 = vpop.f32.mrb[0].mxu0
  %v234 = vadd.f32 %v68, %v233
  %v235 = vpop.f32.mrb[0].mxu0
  %v236 = vpop.f32.mrb[0].mxu0
  %v237 = vadd.f32 %v73, %v236
  %v238 = vpop.f32.mrb[0].mxu0
  %239 = vdwg.mxu0
  %v240 = vmax.f32 %v226, 0.0
  %v241 = vmax.f32 %v229, 0.0
  %v242 = vmax.f32 %v234, 0.0
  %v243 = vmax.f32 %v237, 0.0
  %v244 = vpack.c.bf16 %v241, %v240
  %v245 = vpack.c.bf16 %v243, %v242
  %v248 = vunpack.c.l.b16 %v244
  %v249 = vunpack.c.h.b16 %v244
  %v250 = vunpack.c.l.b16 %v245
  %v251 = vunpack.c.h.b16 %v245
  %v252 = vpack.c.b16 %v248, %v248
  %v253 = vpack.c.b16 %v249, %v249
  %v254 = vpack.c.b16 %v250, %v250
  %v255 = vpack.c.b16 %v251, %v251
  %260 = vst [vmem:[%s3] sm:$0xf] %v252
  %261 = vst [vmem:[%s3 + $0x4] sm:$0xf] %v253
  %262 = vst [vmem:[%s3 + $0x8] sm:$0xf] %v254
  %263 = vst [vmem:[%s3 + $0xc] sm:$0xf] %v255
  // Predicated region
  $region14: #{rawvsr_forward.22} parent=0 // pred_check
    _
  $region15: #{rawvsr_forward.22} parent=0 // pred_check_branch
    %265 = sbr.rel (0) target = $region17
  $region16: #{rawvsr_forward.22} parent=0 // pred_region
    _
  $region17: #{rawvsr_forward.22} parent=0 // pred_fallthru
    _
  // Predicated region
  $region18: #{rawvsr_forward.22} parent=0 // pred_check
    _
  $region19: #{rawvsr_forward.22} parent=0 // pred_check_branch
    %267 = sbr.rel (0) target = $region21
  $region20: #{rawvsr_forward.22} parent=0 // pred_region
    _
  $region21: #{rawvsr_forward.22} parent=0 // pred_fallthru
    _

// kernel: rawvsr_forward.23
$region0: #{rawvsr_forward.23}
  #allocation0 [shape = 'u32[]', space=smem, size = 0x4, offset = 0x4, fixed_abs, tag = 'smem constant byte address 0x4 - core index']
  #allocation1 [shape = 'u32[144,128]{1,0:T(1,128)}', space=vmem, size = 0x12000, scoped, tag = 'internal scratch']
  %s0 = inlined_call_operand.vmem [shape: bf16[16,64], index: 0, kind: input, shape index: {}]
  %s1 = inlined_call_operand.vmem [shape: bf16[64,128], index: 1, kind: input, shape index: {}]
  %s2 = inlined_call_operand.vmem [shape: f32[16,1], index: 2, kind: input, shape index: {}]
  %s3 = inlined_call_operand.vmem [shape: bf16[16,128], index: 3, kind: output, shape index: {}]
  %s4 = sld [smem:[#allocation0]]
  $region22: #{rawvsr_forward.23} parent=0
    _
  %s6 = ssub.s32 1, %s4
  %s7 = scalar_select 0, %s6, %s4
  // Predicated region
  $region2: #{rawvsr_forward.23} parent=0 // pred_check
    _
  $region3: #{rawvsr_forward.23} parent=0 // pred_check_branch
    %9 = sbr.rel (0) target = $region5
  $region4: #{rawvsr_forward.23} parent=0 // pred_region
    _
  $region5: #{rawvsr_forward.23} parent=0 // pred_fallthru
    _
  // Predicated region
  $region6: #{rawvsr_forward.23} parent=0 // pred_check
    _
  $region7: #{rawvsr_forward.23} parent=0 // pred_check_branch
    %11 = sbr.rel (0) target = $region9
  $region8: #{rawvsr_forward.23} parent=0 // pred_region
    _
  $region9: #{rawvsr_forward.23} parent=0 // pred_fallthru
    _
  // Predicated region
  $region10: #{rawvsr_forward.23} parent=0 // pred_check
    _
  $region11: #{rawvsr_forward.23} parent=0 // pred_check_branch
    %13 = sbr.rel (0) target = $region13
  $region12: #{rawvsr_forward.23} parent=0 // pred_region
    _
  $region13: #{rawvsr_forward.23} parent=0 // pred_fallthru
    _
  %v15 = vld [vmem:[%s0] sm:$0xf]
  %v16 = vld [vmem:[%s0 + $0x4] sm:$0xf]
  %v17 = vld [vmem:[%s1] sm:$0xf]
  %v18 = vld [vmem:[%s1 + $0x4] sm:$0xf]
  %v19 = vld [vmem:[%s1 + $0x8] sm:$0xf]
  %v20 = vld [vmem:[%s1 + $0xc] sm:$0xf]
  %v21 = vld [vmem:[%s1 + $0x10] sm:$0xf]
  %v22 = vld [vmem:[%s1 + $0x14] sm:$0xf]
  %v23 = vld [vmem:[%s1 + $0x18] sm:$0xf]
  %v24 = vld [vmem:[%s1 + $0x1c] sm:$0xf]
  %v25 = vld [vmem:[%s2] sm:$0xff]
  %v26 = vld [vmem:[%s2 + $0x8] sm:$0xff]
  %28 = vset.pattern.permute.xlu0 0
  %29 = vperm.xlu0 %28, %v25
  %v30 = vpop.permute.xlu0 %29
  %33 = vset.pattern.permute.xlu0 0
  %34 = vperm.xlu0 %33, %v26
  %v35 = vpop.permute.xlu0 %34
  %v39 = vunpack.c.l.b16 %v15
  %v40 = vunpack.c.l.b16 %v16
  %v41 = vpack.c.b16 %v40, %v39
  %v50 = vunpack.c.l.b16 %v17
  %v51 = vunpack.c.l.b16 %v18
  %v52 = vunpack.c.l.b16 %v19
  %v53 = vunpack.c.l.b16 %v20
  %v54 = vunpack.c.l.b16 %v21
  %v55 = vunpack.c.l.b16 %v22
  %v56 = vunpack.c.l.b16 %v23
  %v57 = vunpack.c.l.b16 %v24
  %v58 = vpack.c.b16 %v51, %v50
  %v59 = vpack.c.b16 %v53, %v52
  %v60 = vpack.c.b16 %v55, %v54
  %v61 = vpack.c.b16 %v57, %v56
  %vm66 = vcmask 523264
  %v68 = vsel %vm66, %v41, 0
  %70 = vmatprep.subr.bf16.mxu0 0
  %71 = vmatpush1.bf16.msra.mxu0 %v58
  %72 = vmatprep.subr.bf16.mxu0 0
  %73 = vmatpush1.bf16.msra.mxu0 %v59
  %74 = vmatprep.subr.bf16.mxu0 0
  %75 = vmatpush1.bf16.msra.mxu0 %v60
  %76 = vmatprep.subr.bf16.mxu0 0
  %77 = vmatpush1.bf16.msra.mxu0 %v61
  %78 = vmatprep.subr.bf16.mxu0 0
  %79 = vmatpush1.bf16.msra.mxu0 0
  %80 = vmatprep.subr.bf16.mxu0 0
  %81 = vmatpush1.bf16.msra.mxu0 0
  %82 = vmatprep.subr.bf16.mxu0 0
  %83 = vmatpush1.bf16.msra.mxu0 0
  %84 = vmatprep.subr.bf16.mxu0 0
  %85 = vmatpush1.bf16.msra.mxu0 0
  %86 = vmatprep.subr.bf16.mxu0 0
  %87 = vmatpush1.bf16.msra.mxu0 0
  %88 = vmatprep.subr.bf16.mxu0 0
  %89 = vmatpush1.bf16.msra.mxu0 0
  %90 = vmatprep.subr.bf16.mxu0 0
  %91 = vmatpush1.bf16.msra.mxu0 0
  %92 = vmatprep.subr.bf16.mxu0 0
  %93 = vmatpush1.bf16.msra.mxu0 0
  %94 = vmatprep.subr.bf16.mxu0 0
  %95 = vmatpush1.bf16.msra.mxu0 0
  %96 = vmatprep.subr.bf16.mxu0 0
  %97 = vmatpush1.bf16.msra.mxu0 0
  %98 = vmatprep.subr.bf16.mxu0 0
  %99 = vmatpush1.bf16.msra.mxu0 0
  %100 = vmatprep.subr.bf16.mxu0 0
  %101 = vmatpush1.bf16.msra.mxu0 0
  %102 = vmatprep.mubr.bf16.mxu0 0
  %103 = vmatmul.mubr.bf16.gmra.mrb[0].mxu0 %v68
  %v104 = vpop.f32.mrb[0].mxu0
  %v105 = vadd.f32 %v30, %v104
  %v106 = vpop.f32.mrb[0].mxu0
  %v107 = vpop.f32.mrb[0].mxu0
  %v108 = vadd.f32 %v35, %v107
  %v109 = vpop.f32.mrb[0].mxu0
  %110 = vdwg.mxu0
  %v111 = vmax.f32 %v105, 0.0
  %v112 = vmax.f32 %v108, 0.0
  %v113 = vpack.c.bf16 %v112, %v111
  %v115 = vunpack.c.l.b16 %v113
  %v116 = vunpack.c.h.b16 %v113
  %v117 = vpack.c.b16 %v115, %v115
  %v118 = vpack.c.b16 %v116, %v116
  %121 = vst [vmem:[%s3] sm:$0xf] %v117
  %122 = vst [vmem:[%s3 + $0x4] sm:$0xf] %v118
  // Predicated region
  $region14: #{rawvsr_forward.23} parent=0 // pred_check
    _
  $region15: #{rawvsr_forward.23} parent=0 // pred_check_branch
    %124 = sbr.rel (0) target = $region17
  $region16: #{rawvsr_forward.23} parent=0 // pred_region
    _
  $region17: #{rawvsr_forward.23} parent=0 // pred_fallthru
    _
  // Predicated region
  $region18: #{rawvsr_forward.23} parent=0 // pred_check
    _
  $region19: #{rawvsr_forward.23} parent=0 // pred_check_branch
    %126 = sbr.rel (0) target = $region21
  $region20: #{rawvsr_forward.23} parent=0 // pred_region
    _
  $region21: #{rawvsr_forward.23} parent=0 // pred_fallthru
    _

// kernel: rawvsr_forward.24
$region0: #{rawvsr_forward.24}
  #allocation0 [shape = 'u32[]', space=smem, size = 0x4, offset = 0x4, fixed_abs, tag = 'smem constant byte address 0x4 - core index']
  #allocation1 [shape = 'u32[144,128]{1,0:T(1,128)}', space=vmem, size = 0x12000, scoped, tag = 'internal scratch']
  %s0 = inlined_call_operand.vmem [shape: bf16[16,128], index: 0, kind: input, shape index: {}]
  %s1 = inlined_call_operand.vmem [shape: bf16[128,128], index: 1, kind: input, shape index: {}]
  %s2 = inlined_call_operand.vmem [shape: f32[16,1], index: 2, kind: input, shape index: {}]
  %s3 = inlined_call_operand.vmem [shape: bf16[16,128], index: 3, kind: output, shape index: {}]
  %s4 = sld [smem:[#allocation0]]
  $region22: #{rawvsr_forward.24} parent=0
    _
  %s6 = ssub.s32 1, %s4
  %s7 = scalar_select 0, %s6, %s4
  // Predicated region
  $region2: #{rawvsr_forward.24} parent=0 // pred_check
    _
  $region3: #{rawvsr_forward.24} parent=0 // pred_check_branch
    %9 = sbr.rel (0) target = $region5
  $region4: #{rawvsr_forward.24} parent=0 // pred_region
    _
  $region5: #{rawvsr_forward.24} parent=0 // pred_fallthru
    _
  // Predicated region
  $region6: #{rawvsr_forward.24} parent=0 // pred_check
    _
  $region7: #{rawvsr_forward.24} parent=0 // pred_check_branch
    %11 = sbr.rel (0) target = $region9
  $region8: #{rawvsr_forward.24} parent=0 // pred_region
    _
  $region9: #{rawvsr_forward.24} parent=0 // pred_fallthru
    _
  // Predicated region
  $region10: #{rawvsr_forward.24} parent=0 // pred_check
    _
  $region11: #{rawvsr_forward.24} parent=0 // pred_check_branch
    %13 = sbr.rel (0) target = $region13
  $region12: #{rawvsr_forward.24} parent=0 // pred_region
    _
  $region13: #{rawvsr_forward.24} parent=0 // pred_fallthru
    _
  %v15 = vld [vmem:[%s0] sm:$0xf]
  %v16 = vld [vmem:[%s0 + $0x4] sm:$0xf]
  %v17 = vld [vmem:[%s1] sm:$0xf]
  %v18 = vld [vmem:[%s1 + $0x4] sm:$0xf]
  %v19 = vld [vmem:[%s1 + $0x8] sm:$0xf]
  %v20 = vld [vmem:[%s1 + $0xc] sm:$0xf]
  %v21 = vld [vmem:[%s1 + $0x10] sm:$0xf]
  %v22 = vld [vmem:[%s1 + $0x14] sm:$0xf]
  %v23 = vld [vmem:[%s1 + $0x18] sm:$0xf]
  %v24 = vld [vmem:[%s1 + $0x1c] sm:$0xf]
  %v25 = vld [vmem:[%s1 + $0x20] sm:$0xf]
  %v26 = vld [vmem:[%s1 + $0x24] sm:$0xf]
  %v27 = vld [vmem:[%s1 + $0x28] sm:$0xf]
  %v28 = vld [vmem:[%s1 + $0x2c] sm:$0xf]
  %v29 = vld [vmem:[%s1 + $0x30] sm:$0xf]
  %v30 = vld [vmem:[%s1 + $0x34] sm:$0xf]
  %v31 = vld [vmem:[%s1 + $0x38] sm:$0xf]
  %v32 = vld [vmem:[%s1 + $0x3c] sm:$0xf]
  %v33 = vld [vmem:[%s2] sm:$0xff]
  %v34 = vld [vmem:[%s2 + $0x8] sm:$0xff]
  %36 = vset.pattern.permute.xlu0 0
  %37 = vperm.xlu0 %36, %v33
  %v38 = vpop.permute.xlu0 %37
  %41 = vset.pattern.permute.xlu0 0
  %42 = vperm.xlu0 %41, %v34
  %v43 = vpop.permute.xlu0 %42
  %v47 = vunpack.c.l.b16 %v15
  %v48 = vunpack.c.l.b16 %v16
  %v49 = vpack.c.b16 %v48, %v47
  %v67 = vunpack.c.l.b16 %v17
  %v68 = vunpack.c.l.b16 %v18
  %v69 = vunpack.c.l.b16 %v19
  %v70 = vunpack.c.l.b16 %v20
  %v71 = vunpack.c.l.b16 %v21
  %v72 = vunpack.c.l.b16 %v22
  %v73 = vunpack.c.l.b16 %v23
  %v74 = vunpack.c.l.b16 %v24
  %v75 = vunpack.c.l.b16 %v25
  %v76 = vunpack.c.l.b16 %v26
  %v77 = vunpack.c.l.b16 %v27
  %v78 = vunpack.c.l.b16 %v28
  %v79 = vunpack.c.l.b16 %v29
  %v80 = vunpack.c.l.b16 %v30
  %v81 = vunpack.c.l.b16 %v31
  %v82 = vunpack.c.l.b16 %v32
  %v83 = vpack.c.b16 %v68, %v67
  %v84 = vpack.c.b16 %v70, %v69
  %v85 = vpack.c.b16 %v72, %v71
  %v86 = vpack.c.b16 %v74, %v73
  %v87 = vpack.c.b16 %v76, %v75
  %v88 = vpack.c.b16 %v78, %v77
  %v89 = vpack.c.b16 %v80, %v79
  %v90 = vpack.c.b16 %v82, %v81
  %99 = vmatprep.subr.bf16.mxu0 0
  %100 = vmatpush1.bf16.msra.mxu0 %v83
  %101 = vmatprep.subr.bf16.mxu0 0
  %102 = vmatpush1.bf16.msra.mxu0 %v84
  %103 = vmatprep.subr.bf16.mxu0 0
  %104 = vmatpush1.bf16.msra.mxu0 %v85
  %105 = vmatprep.subr.bf16.mxu0 0
  %106 = vmatpush1.bf16.msra.mxu0 %v86
  %107 = vmatprep.subr.bf16.mxu0 0
  %108 = vmatpush1.bf16.msra.mxu0 %v87
  %109 = vmatprep.subr.bf16.mxu0 0
  %110 = vmatpush1.bf16.msra.mxu0 %v88
  %111 = vmatprep.subr.bf16.mxu0 0
  %112 = vmatpush1.bf16.msra.mxu0 %v89
  %113 = vmatprep.subr.bf16.mxu0 0
  %114 = vmatpush1.bf16.msra.mxu0 %v90
  %115 = vmatprep.subr.bf16.mxu0 0
  %116 = vmatpush1.bf16.msra.mxu0 0
  %117 = vmatprep.subr.bf16.mxu0 0
  %118 = vmatpush1.bf16.msra.mxu0 0
  %119 = vmatprep.subr.bf16.mxu0 0
  %120 = vmatpush1.bf16.msra.mxu0 0
  %121 = vmatprep.subr.bf16.mxu0 0
  %122 = vmatpush1.bf16.msra.mxu0 0
  %123 = vmatprep.subr.bf16.mxu0 0
  %124 = vmatpush1.bf16.msra.mxu0 0
  %125 = vmatprep.subr.bf16.mxu0 0
  %126 = vmatpush1.bf16.msra.mxu0 0
  %127 = vmatprep.subr.bf16.mxu0 0
  %128 = vmatpush1.bf16.msra.mxu0 0
  %129 = vmatprep.subr.bf16.mxu0 0
  %130 = vmatpush1.bf16.msra.mxu0 0
  %131 = vmatprep.mubr.bf16.mxu0 0
  %132 = vmatmul.mubr.bf16.gmra.mrb[0].mxu0 %v49
  %v133 = vpop.f32.mrb[0].mxu0
  %v134 = vadd.f32 %v38, %v133
  %v135 = vpop.f32.mrb[0].mxu0
  %v136 = vpop.f32.mrb[0].mxu0
  %v137 = vadd.f32 %v43, %v136
  %v138 = vpop.f32.mrb[0].mxu0
  %139 = vdwg.mxu0
  %v140 = vmax.f32 %v134, 0.0
  %v141 = vmax.f32 %v137, 0.0
  %v142 = vpack.c.bf16 %v141, %v140
  %v144 = vunpack.c.l.b16 %v142
  %v145 = vunpack.c.h.b16 %v142
  %v146 = vpack.c.b16 %v144, %v144
  %v147 = vpack.c.b16 %v145, %v145
  %150 = vst [vmem:[%s3] sm:$0xf] %v146
  %151 = vst [vmem:[%s3 + $0x4] sm:$0xf] %v147
  // Predicated region
  $region14: #{rawvsr_forward.24} parent=0 // pred_check
    _
  $region15: #{rawvsr_forward.24} parent=0 // pred_check_branch
    %153 = sbr.rel (0) target = $region17
  $region16: #{rawvsr_forward.24} parent=0 // pred_region
    _
  $region17: #{rawvsr_forward.24} parent=0 // pred_fallthru
    _
  // Predicated region
  $region18: #{rawvsr_forward.24} parent=0 // pred_check
    _
  $region19: #{rawvsr_forward.24} parent=0 // pred_check_branch
    %155 = sbr.rel (0) target = $region21
  $region20: #{rawvsr_forward.24} parent=0 // pred_region
    _
  $region21: #{rawvsr_forward.24} parent=0 // pred_fallthru
    _

// kernel: rawvsr_forward.26
$region0: #{rawvsr_forward.26}
  #allocation0 [shape = 'u32[]', space=smem, size = 0x4, offset = 0x4, fixed_abs, tag = 'smem constant byte address 0x4 - core index']
  #allocation1 [shape = 'u32[144,128]{1,0:T(1,128)}', space=vmem, size = 0x12000, scoped, tag = 'internal scratch']
  %s0 = inlined_call_operand.vmem [shape: bf16[16,256], index: 0, kind: input, shape index: {}]
  %s1 = inlined_call_operand.vmem [shape: bf16[256,128], index: 1, kind: input, shape index: {}]
  %s2 = inlined_call_operand.vmem [shape: f32[16,1], index: 2, kind: input, shape index: {}]
  %s3 = inlined_call_operand.vmem [shape: bf16[16,128], index: 3, kind: output, shape index: {}]
  %s4 = sld [smem:[#allocation0]]
  $region22: #{rawvsr_forward.26} parent=0
    _
  %s6 = ssub.s32 1, %s4
  %s7 = scalar_select 0, %s6, %s4
  // Predicated region
  $region2: #{rawvsr_forward.26} parent=0 // pred_check
    _
  $region3: #{rawvsr_forward.26} parent=0 // pred_check_branch
    %9 = sbr.rel (0) target = $region5
  $region4: #{rawvsr_forward.26} parent=0 // pred_region
    _
  $region5: #{rawvsr_forward.26} parent=0 // pred_fallthru
    _
  // Predicated region
  $region6: #{rawvsr_forward.26} parent=0 // pred_check
    _
  $region7: #{rawvsr_forward.26} parent=0 // pred_check_branch
    %11 = sbr.rel (0) target = $region9
  $region8: #{rawvsr_forward.26} parent=0 // pred_region
    _
  $region9: #{rawvsr_forward.26} parent=0 // pred_fallthru
    _
  // Predicated region
  $region10: #{rawvsr_forward.26} parent=0 // pred_check
    _
  $region11: #{rawvsr_forward.26} parent=0 // pred_check_branch
    %13 = sbr.rel (0) target = $region13
  $region12: #{rawvsr_forward.26} parent=0 // pred_region
    _
  $region13: #{rawvsr_forward.26} parent=0 // pred_fallthru
    _
  %v15 = vld [vmem:[%s0] sm:$0xff]
  %v16 = vld [vmem:[%s0 + $0x8] sm:$0xff]
  %v17 = vld [vmem:[%s1] sm:$0xf]
  %v18 = vld [vmem:[%s1 + $0x4] sm:$0xf]
  %v19 = vld [vmem:[%s1 + $0x8] sm:$0xf]
  %v20 = vld [vmem:[%s1 + $0xc] sm:$0xf]
  %v21 = vld [vmem:[%s1 + $0x10] sm:$0xf]
  %v22 = vld [vmem:[%s1 + $0x14] sm:$0xf]
  %v23 = vld [vmem:[%s1 + $0x18] sm:$0xf]
  %v24 = vld [vmem:[%s1 + $0x1c] sm:$0xf]
  %v25 = vld [vmem:[%s1 + $0x20] sm:$0xf]
  %v26 = vld [vmem:[%s1 + $0x24] sm:$0xf]
  %v27 = vld [vmem:[%s1 + $0x28] sm:$0xf]
  %v28 = vld [vmem:[%s1 + $0x2c] sm:$0xf]
  %v29 = vld [vmem:[%s1 + $0x30] sm:$0xf]
  %v30 = vld [vmem:[%s1 + $0x34] sm:$0xf]
  %v31 = vld [vmem:[%s1 + $0x38] sm:$0xf]
  %v32 = vld [vmem:[%s1 + $0x3c] sm:$0xf]
  %v33 = vld [vmem:[%s1 + $0x40] sm:$0xf]
  %v34 = vld [vmem:[%s1 + $0x44] sm:$0xf]
  %v35 = vld [vmem:[%s1 + $0x48] sm:$0xf]
  %v36 = vld [vmem:[%s1 + $0x4c] sm:$0xf]
  %v37 = vld [vmem:[%s1 + $0x50] sm:$0xf]
  %v38 = vld [vmem:[%s1 + $0x54] sm:$0xf]
  %v39 = vld [vmem:[%s1 + $0x58] sm:$0xf]
  %v40 = vld [vmem:[%s1 + $0x5c] sm:$0xf]
  %v41 = vld [vmem:[%s1 + $0x60] sm:$0xf]
  %v42 = vld [vmem:[%s1 + $0x64] sm:$0xf]
  %v43 = vld [vmem:[%s1 + $0x68] sm:$0xf]
  %v44 = vld [vmem:[%s1 + $0x6c] sm:$0xf]
  %v45 = vld [vmem:[%s1 + $0x70] sm:$0xf]
  %v46 = vld [vmem:[%s1 + $0x74] sm:$0xf]
  %v47 = vld [vmem:[%s1 + $0x78] sm:$0xf]
  %v48 = vld [vmem:[%s1 + $0x7c] sm:$0xf]
  %v49 = vld [vmem:[%s2] sm:$0xff]
  %v50 = vld [vmem:[%s2 + $0x8] sm:$0xff]
  %52 = vset.pattern.permute.xlu0 0
  %53 = vperm.xlu0 %52, %v49
  %v54 = vpop.permute.xlu0 %53
  %57 = vset.pattern.permute.xlu0 0
  %58 = vperm.xlu0 %57, %v50
  %v59 = vpop.permute.xlu0 %58
  %v63 = vunpack.c.l.b16 %v15
  %v64 = vunpack.c.h.b16 %v15
  %v65 = vunpack.c.l.b16 %v16
  %v66 = vunpack.c.h.b16 %v16
  %v67 = vpack.c.b16 %v65, %v63
  %v68 = vpack.c.b16 %v66, %v64
  %v103 = vunpack.c.l.b16 %v17
  %v104 = vunpack.c.l.b16 %v18
  %v105 = vunpack.c.l.b16 %v19
  %v106 = vunpack.c.l.b16 %v20
  %v107 = vunpack.c.l.b16 %v21
  %v108 = vunpack.c.l.b16 %v22
  %v109 = vunpack.c.l.b16 %v23
  %v110 = vunpack.c.l.b16 %v24
  %v111 = vunpack.c.l.b16 %v25
  %v112 = vunpack.c.l.b16 %v26
  %v113 = vunpack.c.l.b16 %v27
  %v114 = vunpack.c.l.b16 %v28
  %v115 = vunpack.c.l.b16 %v29
  %v116 = vunpack.c.l.b16 %v30
  %v117 = vunpack.c.l.b16 %v31
  %v118 = vunpack.c.l.b16 %v32
  %v119 = vunpack.c.l.b16 %v33
  %v120 = vunpack.c.l.b16 %v34
  %v121 = vunpack.c.l.b16 %v35
  %v122 = vunpack.c.l.b16 %v36
  %v123 = vunpack.c.l.b16 %v37
  %v124 = vunpack.c.l.b16 %v38
  %v125 = vunpack.c.l.b16 %v39
  %v126 = vunpack.c.l.b16 %v40
  %v127 = vunpack.c.l.b16 %v41
  %v128 = vunpack.c.l.b16 %v42
  %v129 = vunpack.c.l.b16 %v43
  %v130 = vunpack.c.l.b16 %v44
  %v131 = vunpack.c.l.b16 %v45
  %v132 = vunpack.c.l.b16 %v46
  %v133 = vunpack.c.l.b16 %v47
  %v134 = vunpack.c.l.b16 %v48
  %v135 = vpack.c.b16 %v104, %v103
  %v136 = vpack.c.b16 %v106, %v105
  %v137 = vpack.c.b16 %v108, %v107
  %v138 = vpack.c.b16 %v110, %v109
  %v139 = vpack.c.b16 %v112, %v111
  %v140 = vpack.c.b16 %v114, %v113
  %v141 = vpack.c.b16 %v116, %v115
  %v142 = vpack.c.b16 %v118, %v117
  %v143 = vpack.c.b16 %v120, %v119
  %v144 = vpack.c.b16 %v122, %v121
  %v145 = vpack.c.b16 %v124, %v123
  %v146 = vpack.c.b16 %v126, %v125
  %v147 = vpack.c.b16 %v128, %v127
  %v148 = vpack.c.b16 %v130, %v129
  %v149 = vpack.c.b16 %v132, %v131
  %v150 = vpack.c.b16 %v134, %v133
  %167 = vmatprep.subr.bf16.mxu0 0
  %168 = vmatpush1.bf16.msra.mxu0 %v135
  %169 = vmatprep.subr.bf16.mxu0 0
  %170 = vmatpush1.bf16.msra.mxu0 %v136
  %171 = vmatprep.subr.bf16.mxu0 0
  %172 = vmatpush1.bf16.msra.mxu0 %v137
  %173 = vmatprep.subr.bf16.mxu0 0
  %174 = vmatpush1.bf16.msra.mxu0 %v138
  %175 = vmatprep.subr.bf16.mxu0 0
  %176 = vmatpush1.bf16.msra.mxu0 %v139
  %177 = vmatprep.subr.bf16.mxu0 0
  %178 = vmatpush1.bf16.msra.mxu0 %v140
  %179 = vmatprep.subr.bf16.mxu0 0
  %180 = vmatpush1.bf16.msra.mxu0 %v141
  %181 = vmatprep.subr.bf16.mxu0 0
  %182 = vmatpush1.bf16.msra.mxu0 %v142
  %183 = vmatprep.subr.bf16.mxu0 0
  %184 = vmatpush1.bf16.msra.mxu0 %v143
  %185 = vmatprep.subr.bf16.mxu0 0
  %186 = vmatpush1.bf16.msra.mxu0 %v144
  %187 = vmatprep.subr.bf16.mxu0 0
  %188 = vmatpush1.bf16.msra.mxu0 %v145
  %189 = vmatprep.subr.bf16.mxu0 0
  %190 = vmatpush1.bf16.msra.mxu0 %v146
  %191 = vmatprep.subr.bf16.mxu0 0
  %192 = vmatpush1.bf16.msra.mxu0 %v147
  %193 = vmatprep.subr.bf16.mxu0 0
  %194 = vmatpush1.bf16.msra.mxu0 %v148
  %195 = vmatprep.subr.bf16.mxu0 0
  %196 = vmatpush1.bf16.msra.mxu0 %v149
  %197 = vmatprep.subr.bf16.mxu0 0
  %198 = vmatpush1.bf16.msra.mxu0 %v150
  %199 = vmatprep.mubr.bf16.mxu0 %v68
  %200 = vmatmul.mubr.bf16.gmra.mrb[0].mxu0 %v67
  %v201 = vpop.f32.mrb[0].mxu0
  %v202 = vadd.f32 %v54, %v201
  %v203 = vpop.f32.mrb[0].mxu0
  %v204 = vpop.f32.mrb[0].mxu0
  %v205 = vadd.f32 %v59, %v204
  %v206 = vpop.f32.mrb[0].mxu0
  %207 = vdwg.mxu0
  %v208 = vmax.f32 %v202, 0.0
  %v209 = vmax.f32 %v205, 0.0
  %v210 = vpack.c.bf16 %v209, %v208
  %v212 = vunpack.c.l.b16 %v210
  %v213 = vunpack.c.h.b16 %v210
  %v214 = vpack.c.b16 %v212, %v212
  %v215 = vpack.c.b16 %v213, %v213
  %218 = vst [vmem:[%s3] sm:$0xf] %v214
  %219 = vst [vmem:[%s3 + $0x4] sm:$0xf] %v215
  // Predicated region
  $region14: #{rawvsr_forward.26} parent=0 // pred_check
    _
  $region15: #{rawvsr_forward.26} parent=0 // pred_check_branch
    %221 = sbr.rel (0) target = $region17
  $region16: #{rawvsr_forward.26} parent=0 // pred_region
    _
  $region17: #{rawvsr_forward.26} parent=0 // pred_fallthru
    _
  // Predicated region
  $region18: #{rawvsr_forward.26} parent=0 // pred_check
    _
  $region19: #{rawvsr_forward.26} parent=0 // pred_check_branch
    %223 = sbr.rel (0) target = $region21
  $region20: #{rawvsr_forward.26} parent=0 // pred_region
    _
  $region21: #{rawvsr_forward.26} parent=0 // pred_fallthru
    _

// kernel: rawvsr_forward.14
$region0: #{rawvsr_forward.14}
  #allocation0 [shape = 'u32[]', space=smem, size = 0x4, offset = 0x4, fixed_abs, tag = 'smem constant byte address 0x4 - core index']
  #allocation1 [shape = 'u32[144,128]{1,0:T(1,128)}', space=vmem, size = 0x12000, scoped, tag = 'internal scratch']
  #allocation2 [shape = 'f32[1,1]{1,0:T(1,128)S(1)}', space=vmem, size = 0x200, scoped, tag = 'scoped memory for rawvsr_forward.14']
  %s0 = inlined_call_operand.vmem [shape: bf16[1,2], index: 0, kind: input, shape index: {}]
  %s1 = inlined_call_operand.vmem [shape: bf16[2,128], index: 1, kind: input, shape index: {}]
  %s2 = inlined_call_operand.<no memory space> [shape: f32[1,1], index: 2, kind: input, shape index: {}]
  %s3 = inlined_call_operand.vmem [shape: f32[1,128], index: 3, kind: output, shape index: {}]
  %s4 = sld [smem:[#allocation0]]
  $region22: #{rawvsr_forward.14} parent=0
    _
  %s6 = ssub.s32 1, %s4
  %s7 = scalar_select 0, %s6, %s4
  %v8 = vstv %s2
  %9 = vst [vmem:[#allocation2] sm:$0x1] %v8
  // Predicated region
  $region2: #{rawvsr_forward.14} parent=0 // pred_check
    _
  $region3: #{rawvsr_forward.14} parent=0 // pred_check_branch
    %11 = sbr.rel (0) target = $region5
  $region4: #{rawvsr_forward.14} parent=0 // pred_region
    _
  $region5: #{rawvsr_forward.14} parent=0 // pred_fallthru
    _
  // Predicated region
  $region6: #{rawvsr_forward.14} parent=0 // pred_check
    _
  $region7: #{rawvsr_forward.14} parent=0 // pred_check_branch
    %13 = sbr.rel (0) target = $region9
  $region8: #{rawvsr_forward.14} parent=0 // pred_region
    _
  $region9: #{rawvsr_forward.14} parent=0 // pred_fallthru
    _
  // Predicated region
  $region10: #{rawvsr_forward.14} parent=0 // pred_check
    _
  $region11: #{rawvsr_forward.14} parent=0 // pred_check_branch
    %15 = sbr.rel (0) target = $region13
  $region12: #{rawvsr_forward.14} parent=0 // pred_region
    _
  $region13: #{rawvsr_forward.14} parent=0 // pred_fallthru
    _
  %v17 = vld [vmem:[%s0] sm:$0x1]
  %v18 = vld [vmem:[%s1] sm:$0x1]
  %v19 = vld [vmem:[#allocation2] sm:$0x1]
  %21 = vset.pattern.permute.xlu0 0
  %22 = vperm.xlu0 %21, %v19
  %v23 = vpop.permute.xlu0 %22
  %v25 = vlaneseq
  %v26 = vshrl.u32 %v25, 7
  %v27 = vsub.s32 0, %v26
  %v28 = vrot.slane %v23, %v27
  %vm29 = vcmask 15360
  %v31 = vsel %vm29, %v17, 0
  %vm33 = vcmask 1040384
  %v35 = vsel %vm33, %v18, 0
  %37 = vmatprep.subr.bf16.mxu0 0
  %38 = vmatpush1.bf16.msra.mxu0 %v35
  %39 = vmatprep.subr.bf16.mxu0 0
  %40 = vmatpush1.bf16.msra.mxu0 0
  %41 = vmatprep.subr.bf16.mxu0 0
  %42 = vmatpush1.bf16.msra.mxu0 0
  %43 = vmatprep.subr.bf16.mxu0 0
  %44 = vmatpush1.bf16.msra.mxu0 0
  %45 = vmatprep.subr.bf16.mxu0 0
  %46 = vmatpush1.bf16.msra.mxu0 0
  %47 = vmatprep.subr.bf16.mxu0 0
  %48 = vmatpush1.bf16.msra.mxu0 0
  %49 = vmatprep.subr.bf16.mxu0 0
  %50 = vmatpush1.bf16.msra.mxu0 0
  %51 = vmatprep.subr.bf16.mxu0 0
  %52 = vmatpush1.bf16.msra.mxu0 0
  %53 = vmatprep.subr.bf16.mxu0 0
  %54 = vmatpush1.bf16.msra.mxu0 0
  %55 = vmatprep.subr.bf16.mxu0 0
  %56 = vmatpush1.bf16.msra.mxu0 0
  %57 = vmatprep.subr.bf16.mxu0 0
  %58 = vmatpush1.bf16.msra.mxu0 0
  %59 = vmatprep.subr.bf16.mxu0 0
  %60 = vmatpush1.bf16.msra.mxu0 0
  %61 = vmatprep.subr.bf16.mxu0 0
  %62 = vmatpush1.bf16.msra.mxu0 0
  %63 = vmatprep.subr.bf16.mxu0 0
  %64 = vmatpush1.bf16.msra.mxu0 0
  %65 = vmatprep.subr.bf16.mxu0 0
  %66 = vmatpush1.bf16.msra.mxu0 0
  %67 = vmatprep.subr.bf16.mxu0 0
  %68 = vmatpush1.bf16.msra.mxu0 0
  %69 = vmatprep.mubr.bf16.mxu0 0
  %70 = vmatmul.mubr.bf16.gmra.mrb[0].mxu0 %v31
  %v71 = vpop.f32.mrb[0].mxu0
  %v72 = vadd.f32 %v28, %v71
  %v73 = vpop.f32.mrb[0].mxu0
  %v74 = vpop.f32.mrb[0].mxu0
  %v75 = vpop.f32.mrb[0].mxu0
  %76 = vdwg.mxu0
  %77 = vst [vmem:[%s3] sm:$0x1] %v72
  // Predicated region
  $region14: #{rawvsr_forward.14} parent=0 // pred_check
    _
  $region15: #{rawvsr_forward.14} parent=0 // pred_check_branch
    %79 = sbr.rel (0) target = $region17
  $region16: #{rawvsr_forward.14} parent=0 // pred_region
    _
  $region17: #{rawvsr_forward.14} parent=0 // pred_fallthru
    _
  // Predicated region
  $region18: #{rawvsr_forward.14} parent=0 // pred_check
    _
  $region19: #{rawvsr_forward.14} parent=0 // pred_check_branch
    %81 = sbr.rel (0) target = $region21
  $region20: #{rawvsr_forward.14} parent=0 // pred_region
    _
  $region21: #{rawvsr_forward.14} parent=0 // pred_fallthru
    _

// kernel: rawvsr_forward.27
$region0: #{rawvsr_forward.27}
  #allocation0 [shape = 'u32[]', space=smem, size = 0x4, offset = 0x4, fixed_abs, tag = 'smem constant byte address 0x4 - core index']
  #allocation1 [shape = 'u32[144,128]{1,0:T(1,128)}', space=vmem, size = 0x12000, scoped, tag = 'internal scratch']
  %s0 = inlined_call_operand.vmem [shape: bf16[9,288], index: 0, kind: input, shape index: {}]
  %s1 = inlined_call_operand.vmem [shape: bf16[288,512], index: 1, kind: input, shape index: {}]
  %s2 = inlined_call_operand.vmem [shape: f32[9,1], index: 2, kind: input, shape index: {}]
  %s3 = inlined_call_operand.vmem [shape: f32[3,512], index: 3, kind: input, shape index: {}]
  %s4 = inlined_call_operand.vmem [shape: f32[3,512], index: 4, kind: output, shape index: {}]
  %s5 = sld [smem:[#allocation0]]
  $region87: #{rawvsr_forward.27} parent=0
    _
  %s7 = ssub.s32 1, %s5
  %s8 = scalar_select 0, %s7, %s5
  $region1: #{rawvsr_forward.27} parent=0
    #allocation2 [shape = 'u8[294912]{0}', space=vmem, size = 0x48000, scoped, tag = 'input window, operand 1']
    loop: start=0, step=1, limit=4
    $region2: #{rawvsr_forward.27} parent=1 // loop_pre_header
      _
    $region3: #{rawvsr_forward.27} parent=1 // loop_header
      %s10 = sphi 0, %s14
      %p11 = scmp.ge.s32.totalorder %s10, 4
      %s18 = sphi 0, %s18
      %s20 = sphi 0, %s18
      %s21 = sphi 0, %s20
      %s35 = sphi 0, %s21
      %s41 = sphi 0, %s43
      %s44 = sphi 0, %s41
      %s45 = sphi 0, %s44
      %s61 = sphi 0, %s45
      %s65 = sphi 0, %s65
      %s67 = sphi 0, %s65
      %s68 = sphi 0, %s67
      %s82 = sphi 0, %s68
      %s88 = sphi 0, %s90
      %s91 = sphi 0, %s88
      %s92 = sphi 0, %s91
      %s108 = sphi 0, %s92
      %s114 = sphi 0, %s116
      %s117 = sphi 0, %s114
      %s118 = sphi 0, %s117
      %s134 = sphi 0, %s118
    $region4: #{rawvsr_forward.27} parent=1 // loop_header_branch
      %13 = sbr.rel (%p11) target = $region8
    $region5: #{rawvsr_forward.27} parent=1 // loop_body
      %s15 = ssub.s32 %s10, 1
      %s16 = ssub.s32 %s10, 2
      %s17 = sadd.s32 %s10, 1
      %s19 = sadd.s32 %s18, 1
      %p22 = scmp.eq.s32.totalorder %s10, 1
      %p23 = scmp.ne.s32.totalorder %s18, %s20
      %p24 = scmp.eq.s32.totalorder %s10, 0
      %p25 = por %p23, %p24
      %p26 = scmp.ne.s32.totalorder %s18, %s20
      %p27 = scmp.eq.s32.totalorder %s15, 1
      %p28 = por %p26, %p27
      %p29 = scmp.ne.s32.totalorder %s20, %s21
      %p30 = scmp.eq.s32.totalorder %s15, 0
      %p31 = por %p29, %p30
      %p32 = scmp.ne.s32.totalorder %s20, %s21
      %p33 = scmp.eq.s32.totalorder %s16, 1
      %p34 = por %p32, %p33
      %p36 = scmp.ne.s32.totalorder %s21, %s35
      %p37 = scmp.eq.s32.totalorder %s16, 0
      %p38 = por %p36, %p37
      %s39 = ssub.s32 %s10, %s17
      %p40 = scmp.eq.s32.totalorder %s39, 0
      %s42 = sadd.s32 %s41, 1
      %s43 = scalar_select %p40, %s41, %s42
      %p46 = pneg %p40
      %p47 = scmp.eq.s32.totalorder %s10, 1
      %p48 = por %p46, %p47
      %p49 = scmp.ne.s32.totalorder %s41, %s44
      %p50 = scmp.eq.s32.totalorder %s10, 0
      %p51 = por %p49, %p50
      %p52 = scmp.ne.s32.totalorder %s41, %s44
      %p53 = scmp.eq.s32.totalorder %s15, 1
      %p54 = por %p52, %p53
      %p55 = scmp.ne.s32.totalorder %s44, %s45
      %p56 = scmp.eq.s32.totalorder %s15, 0
      %p57 = por %p55, %p56
      %p58 = scmp.ne.s32.totalorder %s44, %s45
      %p59 = scmp.eq.s32.totalorder %s16, 1
      %p60 = por %p58, %p59
      %p62 = scmp.ne.s32.totalorder %s45, %s61
      %p63 = scmp.eq.s32.totalorder %s16, 0
      %p64 = por %p62, %p63
      %s66 = sadd.s32 %s65, 1
      %p69 = scmp.eq.s32.totalorder %s10, 1
      %p70 = scmp.ne.s32.totalorder %s65, %s67
      %p71 = scmp.eq.s32.totalorder %s10, 0
      %p72 = por %p70, %p71
      %p73 = scmp.ne.s32.totalorder %s65, %s67
      %p74 = scmp.eq.s32.totalorder %s15, 1
      %p75 = por %p73, %p74
      %p76 = scmp.ne.s32.totalorder %s67, %s68
      %p77 = scmp.eq.s32.totalorder %s15, 0
      %p78 = por %p76, %p77
      %p79 = scmp.ne.s32.totalorder %s67, %s68
      %p80 = scmp.eq.s32.totalorder %s16, 1
      %p81 = por %p79, %p80
      %p83 = scmp.ne.s32.totalorder %s68, %s82
      %p84 = scmp.eq.s32.totalorder %s16, 0
      %p85 = por %p83, %p84
      %s86 = ssub.s32 %s10, %s17
      %p87 = scmp.eq.s32.totalorder %s86, 0
      %s89 = sadd.s32 %s88, 1
      %s90 = scalar_select %p87, %s88, %s89
      %p93 = pneg %p87
      %p94 = scmp.eq.s32.totalorder %s10, 1
      %p95 = por %p93, %p94
      %p96 = scmp.ne.s32.totalorder %s88, %s91
      %p97 = scmp.eq.s32.totalorder %s10, 0
      %p98 = por %p96, %p97
      %p99 = scmp.ne.s32.totalorder %s88, %s91
      %p100 = scmp.eq.s32.totalorder %s15, 1
      %p101 = por %p99, %p100
      %p102 = scmp.ne.s32.totalorder %s91, %s92
      %p103 = scmp.eq.s32.totalorder %s15, 0
      %p104 = por %p102, %p103
      %p105 = scmp.ne.s32.totalorder %s91, %s92
      %p106 = scmp.eq.s32.totalorder %s16, 1
      %p107 = por %p105, %p106
      %p109 = scmp.ne.s32.totalorder %s92, %s108
      %p110 = scmp.eq.s32.totalorder %s16, 0
      %p111 = por %p109, %p110
      %s112 = ssub.s32 %s10, %s17
      %p113 = scmp.eq.s32.totalorder %s112, 0
      %s115 = sadd.s32 %s114, 1
      %s116 = scalar_select %p113, %s114, %s115
      %p119 = pneg %p113
      %p120 = scmp.eq.s32.totalorder %s10, 1
      %p121 = por %p119, %p120
      %p122 = scmp.ne.s32.totalorder %s114, %s117
      %p123 = scmp.eq.s32.totalorder %s10, 0
      %p124 = por %p122, %p123
      %p125 = scmp.ne.s32.totalorder %s114, %s117
      %p126 = scmp.eq.s32.totalorder %s15, 1
      %p127 = por %p125, %p126
      %p128 = scmp.ne.s32.totalorder %s117, %s118
      %p129 = scmp.eq.s32.totalorder %s15, 0
      %p130 = por %p128, %p129
      %p131 = scmp.ne.s32.totalorder %s117, %s118
      %p132 = scmp.eq.s32.totalorder %s16, 1
      %p133 = por %p131, %p132
      %p135 = scmp.ne.s32.totalorder %s118, %s134
      %p136 = scmp.eq.s32.totalorder %s16, 0
      %p137 = por %p135, %p136
      %p138 = scmp.le.s32.totalorder 1, %s10
      %p139 = scmp.lt.s32.totalorder %s10, 3
      %p140 = pnand %p138, %p139
      %p141 = pneg %p140
      // Predicated region
      $region9: #{rawvsr_forward.27} parent=5 // pred_check
        _
      $region10: #{rawvsr_forward.27} parent=5 // pred_check_branch
        %143 = sbr.rel (%p140) target = $region12
      $region11: #{rawvsr_forward.27} parent=5 // pred_region
        %s144 = ssub.s32 %s10, 1
        // Predicated region
        $region13: #{rawvsr_forward.27} parent=11 // pred_check
          %p145 = pneg %p31
        $region14: #{rawvsr_forward.27} parent=11 // pred_check_branch
          %147 = sbr.rel (%p145) target = $region16
        $region15: #{rawvsr_forward.27} parent=11 // pred_region
          _
        $region16: #{rawvsr_forward.27} parent=11 // pred_fallthru
          _
        // Predicated region
        $region17: #{rawvsr_forward.27} parent=11 // pred_check
          %p148 = pneg %p78
        $region18: #{rawvsr_forward.27} parent=11 // pred_check_branch
          %150 = sbr.rel (%p148) target = $region20
        $region19: #{rawvsr_forward.27} parent=11 // pred_region
          _
        $region20: #{rawvsr_forward.27} parent=11 // pred_fallthru
          _
      $region12: #{rawvsr_forward.27} parent=5 // pred_fallthru
        _
      %p151 = scmp.lt.s32.totalorder %s10, 2
      // Predicated region
      $region21: #{rawvsr_forward.27} parent=5 // pred_check
        %p152 = pneg %p151
      $region22: #{rawvsr_forward.27} parent=5 // pred_check_branch
        %154 = sbr.rel (%p152) target = $region24
      $region23: #{rawvsr_forward.27} parent=5 // pred_region
        // Predicated region
        $region25: #{rawvsr_forward.27} parent=23 // pred_check
          %p155 = pneg %p51
        $region26: #{rawvsr_forward.27} parent=23 // pred_check_branch
          %157 = sbr.rel (%p155) target = $region28
        $region27: #{rawvsr_forward.27} parent=23 // pred_region
          %s158 = sand.u32 %s41, 1
          %s159 = sand.u32 %s41, 1
          %s160 = smul.addr %s159, 288
          %s161 = scalar_lea.vmem [#allocation2], %s160
          %s162 = smul.u32 2, %s10
          %s163 = smul.addr %s162, 4
          %s164 = scalar_lea.vmem %s1, %s163
          // Predicated region
          $region29: #{rawvsr_forward.27} parent=27 // pred_check
            _
          $region30: #{rawvsr_forward.27} parent=27 // pred_check_branch
            %166 = sbr.rel (0) target = $region32
          $region31: #{rawvsr_forward.27} parent=27 // pred_region
            // Predicated region
            $region33: #{rawvsr_forward.27} parent=31 // pred_check
              _
            $region34: #{rawvsr_forward.27} parent=31 // pred_check_branch
              %168 = sbr.rel (0) target = $region36
            $region35: #{rawvsr_forward.27} parent=31 // pred_region
              // Predicated region
              $region48: #{rawvsr_forward.27} parent=35 // pred_check
                _
              $region49: #{rawvsr_forward.27} parent=35 // pred_check_branch
                %253 = sbr.rel (0) target = $region51
              $region50: #{rawvsr_forward.27} parent=35 // pred_region
                loop: start=0, step=1, limit=1
                $region52: #{rawvsr_forward.27} parent=50 // loop_pre_header
                  _
                $region53: #{rawvsr_forward.27} parent=50 // loop_header
                  %s255 = sphi 0, %s259
                  %p256 = scmp.ge.s32.totalorder %s255, 1
                  %s260 = sphi %s164, %s164
                  %s261 = sphi %s161, %s161
                $region54: #{rawvsr_forward.27} parent=50 // loop_header_branch
                  %258 = sbr.rel (%p256) target = $region58
                $region55: #{rawvsr_forward.27} parent=50 // loop_body
                  %v262 = vld [vmem:[%s260] sm:$0xff]
                  %263 = vst [vmem:[%s261] sm:$0xff] %v262
                  %v264 = vld [vmem:[%s260 + $0x10] sm:$0xff]
                  %265 = vst [vmem:[%s261 + $0x8] sm:$0xff] %v264
                  %v266 = vld [vmem:[%s260 + $0x20] sm:$0xff]
                  %267 = vst [vmem:[%s261 + $0x10] sm:$0xff] %v266
                  %v268 = vld [vmem:[%s260 + $0x30] sm:$0xff]
                  %269 = vst [vmem:[%s261 + $0x18] sm:$0xff] %v268
                  %v270 = vld [vmem:[%s260 + $0x40] sm:$0xff]
                  %271 = vst [vmem:[%s261 + $0x20] sm:$0xff] %v270
                  %v272 = vld [vmem:[%s260 + $0x50] sm:$0xff]
                  %273 = vst [vmem:[%s261 + $0x28] sm:$0xff] %v272
                  %v274 = vld [vmem:[%s260 + $0x60] sm:$0xff]
                  %275 = vst [vmem:[%s261 + $0x30] sm:$0xff] %v274
                  %v276 = vld [vmem:[%s260 + $0x70] sm:$0xff]
                  %277 = vst [vmem:[%s261 + $0x38] sm:$0xff] %v276
                  %v278 = vld [vmem:[%s260 + $0x80] sm:$0xff]
                  %279 = vst [vmem:[%s261 + $0x40] sm:$0xff] %v278
                  %v280 = vld [vmem:[%s260 + $0x90] sm:$0xff]
                  %281 = vst [vmem:[%s261 + $0x48] sm:$0xff] %v280
                  %v282 = vld [vmem:[%s260 + $0xa0] sm:$0xff]
                  %283 = vst [vmem:[%s261 + $0x50] sm:$0xff] %v282
                  %v284 = vld [vmem:[%s260 + $0xb0] sm:$0xff]
                  %285 = vst [vmem:[%s261 + $0x58] sm:$0xff] %v284
                  %v286 = vld [vmem:[%s260 + $0xc0] sm:$0xff]
                  %287 = vst [vmem:[%s261 + $0x60] sm:$0xff] %v286
                  %v288 = vld [vmem:[%s260 + $0xd0] sm:$0xff]
                  %289 = vst [vmem:[%s261 + $0x68] sm:$0xff] %v288
                  %v290 = vld [vmem:[%s260 + $0xe0] sm:$0xff]
                  %291 = vst [vmem:[%s261 + $0x70] sm:$0xff] %v290
                  %v292 = vld [vmem:[%s260 + $0xf0] sm:$0xff]
                  %293 = vst [vmem:[%s261 + $0x78] sm:$0xff] %v292
                  %v294 = vld [vmem:[%s260 + $0x100] sm:$0xff]
                  %295 = vst [vmem:[%s261 + $0x80] sm:$0xff] %v294
                  %v296 = vld [vmem:[%s260 + $0x110] sm:$0xff]
                  %297 = vst [vmem:[%s261 + $0x88] sm:$0xff] %v296
                  %v298 = vld [vmem:[%s260 + $0x120] sm:$0xff]
                  %299 = vst [vmem:[%s261 + $0x90] sm:$0xff] %v298
                  %v300 = vld [vmem:[%s260 + $0x130] sm:$0xff]
                  %301 = vst [vmem:[%s261 + $0x98] sm:$0xff] %v300
                  %v302 = vld [vmem:[%s260 + $0x140] sm:$0xff]
                  %303 = vst [vmem:[%s261 + $0xa0] sm:$0xff] %v302
                  %v304 = vld [vmem:[%s260 + $0x150] sm:$0xff]
                  %305 = vst [vmem:[%s261 + $0xa8] sm:$0xff] %v304
                  %v306 = vld [vmem:[%s260 + $0x160] sm:$0xff]
                  %307 = vst [vmem:[%s261 + $0xb0] sm:$0xff] %v306
                  %v308 = vld [vmem:[%s260 + $0x170] sm:$0xff]
                  %309 = vst [vmem:[%s261 + $0xb8] sm:$0xff] %v308
                  %v310 = vld [vmem:[%s260 + $0x180] sm:$0xff]
                  %311 = vst [vmem:[%s261 + $0xc0] sm:$0xff] %v310
                  %v312 = vld [vmem:[%s260 + $0x190] sm:$0xff]
                  %313 = vst [vmem:[%s261 + $0xc8] sm:$0xff] %v312
                  %v314 = vld [vmem:[%s260 + $0x1a0] sm:$0xff]
                  %315 = vst [vmem:[%s261 + $0xd0] sm:$0xff] %v314
                  %v316 = vld [vmem:[%s260 + $0x1b0] sm:$0xff]
                  %317 = vst [vmem:[%s261 + $0xd8] sm:$0xff] %v316
                  %v318 = vld [vmem:[%s260 + $0x1c0] sm:$0xff]
                  %319 = vst [vmem:[%s261 + $0xe0] sm:$0xff] %v318
                  %v320 = vld [vmem:[%s260 + $0x1d0] sm:$0xff]
                  %321 = vst [vmem:[%s261 + $0xe8] sm:$0xff] %v320
                  %v322 = vld [vmem:[%s260 + $0x1e0] sm:$0xff]
                  %323 = vst [vmem:[%s261 + $0xf0] sm:$0xff] %v322
                  %v324 = vld [vmem:[%s260 + $0x1f0] sm:$0xff]
                  %325 = vst [vmem:[%s261 + $0xf8] sm:$0xff] %v324
                  %v326 = vld [vmem:[%s260 + $0x200] sm:$0xff]
                  %327 = vst [vmem:[%s261 + $0x100] sm:$0xff] %v326
                  %v328 = vld [vmem:[%s260 + $0x210] sm:$0xff]
                  %329 = vst [vmem:[%s261 + $0x108] sm:$0xff] %v328
                  %v330 = vld [vmem:[%s260 + $0x220] sm:$0xff]
                  %331 = vst [vmem:[%s261 + $0x110] sm:$0xff] %v330
                  %v332 = vld [vmem:[%s260 + $0x230] sm:$0xff]
                  %333 = vst [vmem:[%s261 + $0x118] sm:$0xff] %v332
                $region56: #{rawvsr_forward.27} parent=50 // loop_footer
                  %s259 = sadd.s32 1, %s255
                $region57: #{rawvsr_forward.27} parent=50 // loop_footer_branch
                  %254 = sbr.rel target = $region53
                $region58: #{rawvsr_forward.27} parent=50 // loop_exit
                  _
              $region51: #{rawvsr_forward.27} parent=35 // pred_fallthru
                _
              // Predicated region
              $region59: #{rawvsr_forward.27} parent=35 // pred_check
                _
              $region60: #{rawvsr_forward.27} parent=35 // pred_check_branch
                %335 = sbr.rel target = $region62
              $region61: #{rawvsr_forward.27} parent=35 // pred_region
                _
              $region62: #{rawvsr_forward.27} parent=35 // pred_fallthru
                _
            $region36: #{rawvsr_forward.27} parent=31 // pred_fallthru
              _
            // Predicated region
            $region37: #{rawvsr_forward.27} parent=31 // pred_check
              _
            $region38: #{rawvsr_forward.27} parent=31 // pred_check_branch
              %170 = sbr.rel target = $region40
            $region39: #{rawvsr_forward.27} parent=31 // pred_region
              loop: start=0, step=1, limit=1
              $region41: #{rawvsr_forward.27} parent=39 // loop_pre_header
                _
              $region42: #{rawvsr_forward.27} parent=39 // loop_header
                %s173 = sphi 0, %s177
                %p174 = scmp.ge.s32.totalorder %s173, 1
                %s178 = sphi %s164, %s164
                %s179 = sphi %s161, %s161
              $region43: #{rawvsr_forward.27} parent=39 // loop_header_branch
                %176 = sbr.rel (%p174) target = $region47
              $region44: #{rawvsr_forward.27} parent=39 // loop_body
                %v180 = vld [vmem:[%s178] sm:$0xff]
                %181 = vst [vmem:[%s179] sm:$0xff] %v180
                %v182 = vld [vmem:[%s178 + $0x10] sm:$0xff]
                %183 = vst [vmem:[%s179 + $0x8] sm:$0xff] %v182
                %v184 = vld [vmem:[%s178 + $0x20] sm:$0xff]
                %185 = vst [vmem:[%s179 + $0x10] sm:$0xff] %v184
                %v186 = vld [vmem:[%s178 + $0x30] sm:$0xff]
                %187 = vst [vmem:[%s179 + $0x18] sm:$0xff] %v186
                %v188 = vld [vmem:[%s178 + $0x40] sm:$0xff]
                %189 = vst [vmem:[%s179 + $0x20] sm:$0xff] %v188
                %v190 = vld [vmem:[%s178 + $0x50] sm:$0xff]
                %191 = vst [vmem:[%s179 + $0x28] sm:$0xff] %v190
                %v192 = vld [vmem:[%s178 + $0x60] sm:$0xff]
                %193 = vst [vmem:[%s179 + $0x30] sm:$0xff] %v192
                %v194 = vld [vmem:[%s178 + $0x70] sm:$0xff]
                %195 = vst [vmem:[%s179 + $0x38] sm:$0xff] %v194
                %v196 = vld [vmem:[%s178 + $0x80] sm:$0xff]
                %197 = vst [vmem:[%s179 + $0x40] sm:$0xff] %v196
                %v198 = vld [vmem:[%s178 + $0x90] sm:$0xff]
                %199 = vst [vmem:[%s179 + $0x48] sm:$0xff] %v198
                %v200 = vld [vmem:[%s178 + $0xa0] sm:$0xff]
                %201 = vst [vmem:[%s179 + $0x50] sm:$0xff] %v200
                %v202 = vld [vmem:[%s178 + $0xb0] sm:$0xff]
                %203 = vst [vmem:[%s179 + $0x58] sm:$0xff] %v202
                %v204 = vld [vmem:[%s178 + $0xc0] sm:$0xff]
                %205 = vst [vmem:[%s179 + $0x60] sm:$0xff] %v204
                %v206 = vld [vmem:[%s178 + $0xd0] sm:$0xff]
                %207 = vst [vmem:[%s179 + $0x68] sm:$0xff] %v206
                %v208 = vld [vmem:[%s178 + $0xe0] sm:$0xff]
                %209 = vst [vmem:[%s179 + $0x70] sm:$0xff] %v208
                %v210 = vld [vmem:[%s178 + $0xf0] sm:$0xff]
                %211 = vst [vmem:[%s179 + $0x78] sm:$0xff] %v210
                %v212 = vld [vmem:[%s178 + $0x100] sm:$0xff]
                %213 = vst [vmem:[%s179 + $0x80] sm:$0xff] %v212
                %v214 = vld [vmem:[%s178 + $0x110] sm:$0xff]
                %215 = vst [vmem:[%s179 + $0x88] sm:$0xff] %v214
                %v216 = vld [vmem:[%s178 + $0x120] sm:$0xff]
                %217 = vst [vmem:[%s179 + $0x90] sm:$0xff] %v216
                %v218 = vld [vmem:[%s178 + $0x130] sm:$0xff]
                %219 = vst [vmem:[%s179 + $0x98] sm:$0xff] %v218
                %v220 = vld [vmem:[%s178 + $0x140] sm:$0xff]
                %221 = vst [vmem:[%s179 + $0xa0] sm:$0xff] %v220
                %v222 = vld [vmem:[%s178 + $0x150] sm:$0xff]
                %223 = vst [vmem:[%s179 + $0xa8] sm:$0xff] %v222
                %v224 = vld [vmem:[%s178 + $0x160] sm:$0xff]
                %225 = vst [vmem:[%s179 + $0xb0] sm:$0xff] %v224
                %v226 = vld [vmem:[%s178 + $0x170] sm:$0xff]
                %227 = vst [vmem:[%s179 + $0xb8] sm:$0xff] %v226
                %v228 = vld [vmem:[%s178 + $0x180] sm:$0xff]
                %229 = vst [vmem:[%s179 + $0xc0] sm:$0xff] %v228
                %v230 = vld [vmem:[%s178 + $0x190] sm:$0xff]
                %231 = vst [vmem:[%s179 + $0xc8] sm:$0xff] %v230
                %v232 = vld [vmem:[%s178 + $0x1a0] sm:$0xff]
                %233 = vst [vmem:[%s179 + $0xd0] sm:$0xff] %v232
                %v234 = vld [vmem:[%s178 + $0x1b0] sm:$0xff]
                %235 = vst [vmem:[%s179 + $0xd8] sm:$0xff] %v234
                %v236 = vld [vmem:[%s178 + $0x1c0] sm:$0xff]
                %237 = vst [vmem:[%s179 + $0xe0] sm:$0xff] %v236
                %v238 = vld [vmem:[%s178 + $0x1d0] sm:$0xff]
                %239 = vst [vmem:[%s179 + $0xe8] sm:$0xff] %v238
                %v240 = vld [vmem:[%s178 + $0x1e0] sm:$0xff]
                %241 = vst [vmem:[%s179 + $0xf0] sm:$0xff] %v240
                %v242 = vld [vmem:[%s178 + $0x1f0] sm:$0xff]
                %243 = vst [vmem:[%s179 + $0xf8] sm:$0xff] %v242
                %v244 = vld [vmem:[%s178 + $0x200] sm:$0xff]
                %245 = vst [vmem:[%s179 + $0x100] sm:$0xff] %v244
                %v246 = vld [vmem:[%s178 + $0x210] sm:$0xff]
                %247 = vst [vmem:[%s179 + $0x108] sm:$0xff] %v246
                %v248 = vld [vmem:[%s178 + $0x220] sm:$0xff]
                %249 = vst [vmem:[%s179 + $0x110] sm:$0xff] %v248
                %v250 = vld [vmem:[%s178 + $0x230] sm:$0xff]
                %251 = vst [vmem:[%s179 + $0x118] sm:$0xff] %v250
              $region45: #{rawvsr_forward.27} parent=39 // loop_footer
                %s177 = sadd.s32 1, %s173
              $region46: #{rawvsr_forward.27} parent=39 // loop_footer_branch
                %172 = sbr.rel target = $region42
              $region47: #{rawvsr_forward.27} parent=39 // loop_exit
                _
            $region40: #{rawvsr_forward.27} parent=31 // pred_fallthru
              _
          $region32: #{rawvsr_forward.27} parent=27 // pred_fallthru
            _
          %336 = vnop
        $region28: #{rawvsr_forward.27} parent=23 // pred_fallthru
          _
        // Predicated region
        $region63: #{rawvsr_forward.27} parent=23 // pred_check
          %p337 = pneg %p98
        $region64: #{rawvsr_forward.27} parent=23 // pred_check_branch
          %339 = sbr.rel (%p337) target = $region66
        $region65: #{rawvsr_forward.27} parent=23 // pred_region
          %s340 = smul.u32 2, %s10
          %p341 = scmp.lt.s32.totalorder %s340, 3
          %s342 = scalar_select %p341, %s340, 3
          %s343 = smul.addr %s342, 4
          %s344 = scalar_lea.vmem %s3, %s343
          %s345 = smul.u32 2, %s10
        $region66: #{rawvsr_forward.27} parent=23 // pred_fallthru
          _
      $region24: #{rawvsr_forward.27} parent=5 // pred_fallthru
        _
      %p346 = scmp.le.s32.totalorder 1, %s10
      %p347 = scmp.lt.s32.totalorder %s10, 3
      %p348 = pnand %p346, %p347
      %p349 = pneg %p348
      // Predicated region
      $region67: #{rawvsr_forward.27} parent=5 // pred_check
        _
      $region68: #{rawvsr_forward.27} parent=5 // pred_check_branch
        %351 = sbr.rel (%p348) target = $region70
      $region69: #{rawvsr_forward.27} parent=5 // pred_region
        %s352 = ssub.s32 %s10, 1
        %s353 = sand.u32 %s44, 1
        %s354 = sand.u32 %s44, 1
        %s355 = smul.addr %s354, 288
        %s356 = scalar_lea.vmem [#allocation2], %s355
        // Predicated region
        $region71: #{rawvsr_forward.27} parent=69 // pred_check
          %p357 = pneg %p57
        $region72: #{rawvsr_forward.27} parent=69 // pred_check_branch
          %359 = sbr.rel (%p357) target = $region74
        $region73: #{rawvsr_forward.27} parent=69 // pred_region
          _
        $region74: #{rawvsr_forward.27} parent=69 // pred_fallthru
          _
        %p360 = pneg %p31
        %p361 = pneg %p28
        %s362 = sand.u32 %s44, 1
        %s363 = sand.u32 %s44, 1
        %s364 = smul.addr %s363, 288
        %s365 = scalar_lea.vmem [#allocation2], %s364
        %p366 = pneg %p57
        %p367 = pneg %p54
        %p368 = pneg %p78
        %p369 = pneg %p75
        %s370 = smul.u32 2, %s15
        %p371 = scmp.lt.s32.totalorder %s370, 3
        %s372 = scalar_select %p371, %s370, 3
        %s373 = smul.addr %s372, 4
        %s374 = scalar_lea.vmem %s3, %s373
        %p375 = pneg %p104
        %p376 = pneg %p101
        %p377 = pneg %p130
        %p378 = pneg %p127
        %s379 = smul.u32 2, %s15
        %p380 = scmp.lt.s32.totalorder %s379, 3
        %s381 = scalar_select %p380, %s379, 3
        %s382 = smul.addr %s381, 4
        %s383 = scalar_lea.vmem %s4, %s382
        %s384 = smul.u32 2, %s15
        %s385 = smul.u32 2, %s15
        %p386 = scmp.lt.s32.totalorder %s385, 3
        %s387 = scalar_select %p386, %s385, 3
        %s388 = smul.addr %s387, 4
        %s389 = scalar_lea.vmem %s3, %s388
        %s390 = smul.u32 2, %s15
        %s391 = smul.u32 2, %s15
        %p392 = scmp.lt.s32.totalorder %s391, 3
        %s393 = scalar_select %p392, %s391, 3
        %s394 = smul.addr %s393, 4
        %s395 = scalar_lea.vmem %s4, %s394
        %s396 = smul.u32 2, %s15
        %v398 = vld [vmem:[%s0] sm:$0xff]
        %v399 = vld [vmem:[%s0 + $0x8] sm:$0xf]
        %v400 = vld [vmem:[%s0 + $0xc] sm:$0x11]
        %v401 = vld [vmem:[%s0 + $0x14] sm:$0x1]
        %v402 = vld [vmem:[%s356] sm:$0xff]
        %v403 = vld [vmem:[%s356 + $0x8] sm:$0xff]
        %v404 = vld [vmem:[%s356 + $0x10] sm:$0xff]
        %v405 = vld [vmem:[%s356 + $0x18] sm:$0xff]
        %v406 = vld [vmem:[%s356 + $0x20] sm:$0xff]
        %v407 = vld [vmem:[%s356 + $0x28] sm:$0xff]
        %v408 = vld [vmem:[%s356 + $0x30] sm:$0xff]
        %v409 = vld [vmem:[%s356 + $0x38] sm:$0xff]
        %v410 = vld [vmem:[%s356 + $0x40] sm:$0xff]
        %v411 = vld [vmem:[%s356 + $0x48] sm:$0xff]
        %v412 = vld [vmem:[%s356 + $0x50] sm:$0xff]
        %v413 = vld [vmem:[%s356 + $0x58] sm:$0xff]
        %v414 = vld [vmem:[%s356 + $0x60] sm:$0xff]
        %v415 = vld [vmem:[%s356 + $0x68] sm:$0xff]
        %v416 = vld [vmem:[%s356 + $0x70] sm:$0xff]
        %v417 = vld [vmem:[%s356 + $0x78] sm:$0xff]
        %v418 = vld [vmem:[%s356 + $0x80] sm:$0xff]
        %v419 = vld [vmem:[%s356 + $0x88] sm:$0xff]
        %v420 = vld [vmem:[%s356 + $0x90] sm:$0xff]
        %v421 = vld [vmem:[%s356 + $0x98] sm:$0xff]
        %v422 = vld [vmem:[%s356 + $0xa0] sm:$0xff]
        %v423 = vld [vmem:[%s356 + $0xa8] sm:$0xff]
        %v424 = vld [vmem:[%s356 + $0xb0] sm:$0xff]
        %v425 = vld [vmem:[%s356 + $0xb8] sm:$0xff]
        %v426 = vld [vmem:[%s356 + $0xc0] sm:$0xff]
        %v427 = vld [vmem:[%s356 + $0xc8] sm:$0xff]
        %v428 = vld [vmem:[%s356 + $0xd0] sm:$0xff]
        %v429 = vld [vmem:[%s356 + $0xd8] sm:$0xff]
        %v430 = vld [vmem:[%s356 + $0xe0] sm:$0xff]
        %v431 = vld [vmem:[%s356 + $0xe8] sm:$0xff]
        %v432 = vld [vmem:[%s356 + $0xf0] sm:$0xff]
        %v433 = vld [vmem:[%s356 + $0xf8] sm:$0xff]
        %v434 = vld [vmem:[%s356 + $0x100] sm:$0xff]
        %v435 = vld [vmem:[%s356 + $0x108] sm:$0xff]
        %v436 = vld [vmem:[%s356 + $0x110] sm:$0xff]
        %v437 = vld [vmem:[%s356 + $0x118] sm:$0xff]
        %v438 = vld [vmem:[%s2] sm:$0xff]
        %v439 = vld [vmem:[%s2 + $0x8] sm:$0x1]
        %441 = vset.pattern.permute.xlu0 0
        %442 = vperm.xlu0 %441, %v438
        %v443 = vpop.permute.xlu0 %442
        %446 = vset.pattern.permute.xlu0 0
        %447 = vperm.xlu0 %446, %v439
        %v448 = vpop.permute.xlu0 %447
        %v454 = vunpack.c.l.b16 %v398
        %v455 = vunpack.c.h.b16 %v398
        %v456 = vunpack.c.l.b16 %v399
        %v457 = vunpack.c.l.b16 %v400
        %v458 = vunpack.c.h.b16 %v400
        %v459 = vunpack.c.l.b16 %v401
        %v460 = vpack.c.b16 %v457, %v454
        %v461 = vpack.c.b16 %v458, %v455
        %v462 = vpack.c.b16 %v459, %v456
        %v501 = vunpack.c.l.b16 %v402
        %v502 = vunpack.c.h.b16 %v402
        %v503 = vunpack.c.l.b16 %v403
        %v504 = vunpack.c.h.b16 %v403
        %v505 = vunpack.c.l.b16 %v404
        %v506 = vunpack.c.h.b16 %v404
        %v507 = vunpack.c.l.b16 %v405
        %v508 = vunpack.c.h.b16 %v405
        %v509 = vunpack.c.l.b16 %v406
        %v510 = vunpack.c.h.b16 %v406
        %v511 = vunpack.c.l.b16 %v407
        %v512 = vunpack.c.h.b16 %v407
        %v513 = vunpack.c.l.b16 %v408
        %v514 = vunpack.c.h.b16 %v408
        %v515 = vunpack.c.l.b16 %v409
        %v516 = vunpack.c.h.b16 %v409
        %v517 = vunpack.c.l.b16 %v410
        %v518 = vunpack.c.h.b16 %v410
        %v519 = vunpack.c.l.b16 %v411
        %v520 = vunpack.c.h.b16 %v411
        %v521 = vunpack.c.l.b16 %v412
        %v522 = vunpack.c.h.b16 %v412
        %v523 = vunpack.c.l.b16 %v413
        %v524 = vunpack.c.h.b16 %v413
        %v525 = vunpack.c.l.b16 %v414
        %v526 = vunpack.c.h.b16 %v414
        %v527 = vunpack.c.l.b16 %v415
        %v528 = vunpack.c.h.b16 %v415
        %v529 = vunpack.c.l.b16 %v416
        %v530 = vunpack.c.h.b16 %v416
        %v531 = vunpack.c.l.b16 %v417
        %v532 = vunpack.c.h.b16 %v417
        %v533 = vunpack.c.l.b16 %v418
        %v534 = vunpack.c.h.b16 %v418
        %v535 = vunpack.c.l.b16 %v419
        %v536 = vunpack.c.h.b16 %v419
        %v537 = vunpack.c.l.b16 %v420
        %v538 = vunpack.c.h.b16 %v420
        %v539 = vunpack.c.l.b16 %v421
        %v540 = vunpack.c.h.b16 %v421
        %v541 = vunpack.c.l.b16 %v422
        %v542 = vunpack.c.h.b16 %v422
        %v543 = vunpack.c.l.b16 %v423
        %v544 = vunpack.c.h.b16 %v423
        %v545 = vunpack.c.l.b16 %v424
        %v546 = vunpack.c.h.b16 %v424
        %v547 = vunpack.c.l.b16 %v425
        %v548 = vunpack.c.h.b16 %v425
        %v549 = vunpack.c.l.b16 %v426
        %v550 = vunpack.c.h.b16 %v426
        %v551 = vunpack.c.l.b16 %v427
        %v552 = vunpack.c.h.b16 %v427
        %v553 = vunpack.c.l.b16 %v428
        %v554 = vunpack.c.h.b16 %v428
        %v555 = vunpack.c.l.b16 %v429
        %v556 = vunpack.c.h.b16 %v429
        %v557 = vunpack.c.l.b16 %v430
        %v558 = vunpack.c.h.b16 %v430
        %v559 = vunpack.c.l.b16 %v431
        %v560 = vunpack.c.h.b16 %v431
        %v561 = vunpack.c.l.b16 %v432
        %v562 = vunpack.c.h.b16 %v432
        %v563 = vunpack.c.l.b16 %v433
        %v564 = vunpack.c.h.b16 %v433
        %v565 = vunpack.c.l.b16 %v434
        %v566 = vunpack.c.h.b16 %v434
        %v567 = vunpack.c.l.b16 %v435
        %v568 = vunpack.c.h.b16 %v435
        %v569 = vunpack.c.l.b16 %v436
        %v570 = vunpack.c.h.b16 %v436
        %v571 = vunpack.c.l.b16 %v437
        %v572 = vunpack.c.h.b16 %v437
        %v573 = vpack.c.b16 %v503, %v501
        %v574 = vpack.c.b16 %v504, %v502
        %v575 = vpack.c.b16 %v507, %v505
        %v576 = vpack.c.b16 %v508, %v506
        %v577 = vpack.c.b16 %v511, %v509
        %v578 = vpack.c.b16 %v512, %v510
        %v579 = vpack.c.b16 %v515, %v513
        %v580 = vpack.c.b16 %v516, %v514
        %v581 = vpack.c.b16 %v519, %v517
        %v582 = vpack.c.b16 %v520, %v518
        %v583 = vpack.c.b16 %v523, %v521
        %v584 = vpack.c.b16 %v524, %v522
        %v585 = vpack.c.b16 %v527, %v525
        %v586 = vpack.c.b16 %v528, %v526
        %v587 = vpack.c.b16 %v531, %v529
        %v588 = vpack.c.b16 %v532, %v530
        %v589 = vpack.c.b16 %v535, %v533
        %v590 = vpack.c.b16 %v536, %v534
        %v591 = vpack.c.b16 %v539, %v537
        %v592 = vpack.c.b16 %v540, %v538
        %v593 = vpack.c.b16 %v543, %v541
        %v594 = vpack.c.b16 %v544, %v542
        %v595 = vpack.c.b16 %v547, %v545
        %v596 = vpack.c.b16 %v548, %v546
        %v597 = vpack.c.b16 %v551, %v549
        %v598 = vpack.c.b16 %v552, %v550
        %v599 = vpack.c.b16 %v555, %v553
        %v600 = vpack.c.b16 %v556, %v554
        %v601 = vpack.c.b16 %v559, %v557
        %v602 = vpack.c.b16 %v560, %v558
        %v603 = vpack.c.b16 %v563, %v561
        %v604 = vpack.c.b16 %v564, %v562
        %v605 = vpack.c.b16 %v567, %v565
        %v606 = vpack.c.b16 %v568, %v566
        %v607 = vpack.c.b16 %v571, %v569
        %v608 = vpack.c.b16 %v572, %v570
        %vm645 = vcmask 261120
        %v647 = vsel %vm645, %v462, 0
        %649 = vmatprep.subr.bf16.mxu0 %v574
        %650 = vmatpush1.bf16.msra.mxu0 %v573
        %651 = vmatprep.subr.bf16.mxu0 %v576
        %652 = vmatpush1.bf16.msra.mxu0 %v575
        %653 = vmatprep.subr.bf16.mxu0 %v578
        %654 = vmatpush1.bf16.msra.mxu0 %v577
        %655 = vmatprep.subr.bf16.mxu0 %v580
        %656 = vmatpush1.bf16.msra.mxu0 %v579
        %657 = vmatprep.subr.bf16.mxu0 %v582
        %658 = vmatpush1.bf16.msra.mxu0 %v581
        %659 = vmatprep.subr.bf16.mxu0 %v584
        %660 = vmatpush1.bf16.msra.mxu0 %v583
        %661 = vmatprep.subr.bf16.mxu0 %v586
        %662 = vmatpush1.bf16.msra.mxu0 %v585
        %663 = vmatprep.subr.bf16.mxu0 %v588
        %664 = vmatpush1.bf16.msra.mxu0 %v587
        %665 = vmatprep.subr.bf16.mxu0 %v590
        %666 = vmatpush1.bf16.msra.mxu0 %v589
        %667 = vmatprep.subr.bf16.mxu0 %v592
        %668 = vmatpush1.bf16.msra.mxu0 %v591
        %669 = vmatprep.subr.bf16.mxu0 %v594
        %670 = vmatpush1.bf16.msra.mxu0 %v593
        %671 = vmatprep.subr.bf16.mxu0 %v596
        %672 = vmatpush1.bf16.msra.mxu0 %v595
        %673 = vmatprep.subr.bf16.mxu0 %v598
        %674 = vmatpush1.bf16.msra.mxu0 %v597
        %675 = vmatprep.subr.bf16.mxu0 %v600
        %676 = vmatpush1.bf16.msra.mxu0 %v599
        %677 = vmatprep.subr.bf16.mxu0 %v602
        %678 = vmatpush1.bf16.msra.mxu0 %v601
        %679 = vmatprep.subr.bf16.mxu0 %v604
        %680 = vmatpush1.bf16.msra.mxu0 %v603
        %681 = vmatprep.mubr.bf16.mxu0 %v461
        %682 = vmatmul.mubr.bf16.gmra.mrb[0].mxu0 %v460
        %v683 = vpop.f32.mrb[0].mxu0
        %v684 = vadd.f32 %v443, %v683
        %v685 = vpop.f32.mrb[0].mxu0
        %v686 = vadd.f32 %v443, %v685
        %v687 = vpop.f32.mrb[0].mxu0
        %v688 = vadd.f32 %v448, %v687
        %v689 = vpop.f32.mrb[0].mxu0
        %v690 = vadd.f32 %v448, %v689
        %691 = vdwg.mxu0
        %692 = vmatprep.subr.bf16.mxu0 %v606
        %693 = vmatpush1.bf16.msra.mxu0 %v605
        %694 = vmatprep.subr.bf16.mxu0 %v608
        %695 = vmatpush1.bf16.msra.mxu0 %v607
        %696 = vmatprep.subr.bf16.mxu0 0
        %697 = vmatpush1.bf16.msra.mxu0 0
        %698 = vmatprep.subr.bf16.mxu0 0
        %699 = vmatpush1.bf16.msra.mxu0 0
        %700 = vmatprep.subr.bf16.mxu0 0
        %701 = vmatpush1.bf16.msra.mxu0 0
        %702 = vmatprep.subr.bf16.mxu0 0
        %703 = vmatpush1.bf16.msra.mxu0 0
        %704 = vmatprep.subr.bf16.mxu0 0
        %705 = vmatpush1.bf16.msra.mxu0 0
        %706 = vmatprep.subr.bf16.mxu0 0
        %707 = vmatpush1.bf16.msra.mxu0 0
        %708 = vmatprep.subr.bf16.mxu0 0
        %709 = vmatpush1.bf16.msra.mxu0 0
        %710 = vmatprep.subr.bf16.mxu0 0
        %711 = vmatpush1.bf16.msra.mxu0 0
        %712 = vmatprep.subr.bf16.mxu0 0
        %713 = vmatpush1.bf16.msra.mxu0 0
        %714 = vmatprep.subr.bf16.mxu0 0
        %715 = vmatpush1.bf16.msra.mxu0 0
        %716 = vmatprep.subr.bf16.mxu0 0
        %717 = vmatpush1.bf16.msra.mxu0 0
        %718 = vmatprep.subr.bf16.mxu0 0
        %719 = vmatpush1.bf16.msra.mxu0 0
        %720 = vmatprep.subr.bf16.mxu0 0
        %721 = vmatpush1.bf16.msra.mxu0 0
        %722 = vmatprep.subr.bf16.mxu0 0
        %723 = vmatpush1.bf16.msra.mxu0 0
        %724 = vmatprep.mubr.bf16.mxu0 0
        %725 = vmatmul.mubr.bf16.gmra.mrb[0].mxu0 %v647
        %v726 = vpop.f32.mrb[0].mxu0
        %v727 = vadd.f32 %v684, %v726
        %v728 = vpop.f32.mrb[0].mxu0
        %v729 = vadd.f32 %v686, %v728
        %v730 = vpop.f32.mrb[0].mxu0
        %v731 = vadd.f32 %v688, %v730
        %v732 = vpop.f32.mrb[0].mxu0
        %v733 = vadd.f32 %v690, %v732
        %734 = vdwg.mxu0
        %v735 = vmax.f32 %v727, 0.0
        %v736 = vmax.f32 %v729, 0.0
        %v737 = vmax.f32 %v731, 0.0
        %v738 = vmax.f32 %v733, 0.0
        %v739 = vld [vmem:[%s389] sm:$0x77]
        %v742 = vcombine.low %v735, %v736
        %v744 = vmul.f32 %v739, %v742
        %v746 = vrot.slane %v744, 5
        %v747 = vrot.slane %v746, 4
        %v749 = vadd.f32 %v744, %v747
        %v750 = vrot.slane %v744, 6
        %v751 = vrot.slane %v750, 4
        %v753 = vadd.f32 %v749, %v751
        %v754 = vrot.slane %v742, 7
        %v755 = vrot.slane %v754, 4
        %v757 = vmul.f32 %v739, %v755
        %v758 = vcombine.high %v735, %v736
        %v759 = vrot.slane %v758, 7
        %v761 = vmul.f32 %v739, %v759
        %v763 = vrot.slane %v761, 5
        %v764 = vrot.slane %v763, 4
        %v766 = vadd.f32 %v757, %v764
        %v767 = vrot.slane %v761, 6
        %v768 = vrot.slane %v767, 4
        %v770 = vadd.f32 %v766, %v768
        %v771 = vrot.slane %v758, 6
        %v772 = vrot.slane %v771, 4
        %v774 = vmul.f32 %v739, %v772
        %v776 = vrot.slane %v774, 5
        %v777 = vrot.slane %v776, 4
        %v779 = vadd.f32 %v774, %v777
        %v782 = vcombine.low %v737, %v738
        %v783 = vrot.slane %v782, 6
        %v785 = vmul.f32 %v739, %v783
        %v787 = vrot.slane %v785, 6
        %v788 = vrot.slane %v787, 4
        %v790 = vadd.f32 %v779, %v788
        %v792 = vlaneseq
        %v793 = vshrl.u32 %v792, 7
        %v794 = vsub.s32 0, %v793
        %v795 = vrot.slane %v753, %v794
        %v796 = vlaneseq
        %v797 = vshrl.u32 %v796, 7
        %v798 = vsub.s32 4, %v797
        %v799 = vrot.slane %v753, %v798
        %v803 = vlaneseq
        %v804 = vshrl.u32 %v803, 7
        %v805 = vsub.s32 0, %v804
        %v806 = vrot.slane %v770, %v805
        %v807 = vlaneseq
        %v808 = vshrl.u32 %v807, 7
        %v809 = vsub.s32 4, %v808
        %v810 = vrot.slane %v770, %v809
        %v814 = vlaneseq
        %v815 = vshrl.u32 %v814, 7
        %v816 = vsub.s32 0, %v815
        %v817 = vrot.slane %v790, %v816
        %v818 = vlaneseq
        %v819 = vshrl.u32 %v818, 7
        %v820 = vsub.s32 4, %v819
        %v821 = vrot.slane %v790, %v820
        %vm824 = vcmask 1040384
        %v825 = vsel %vm824, %v795, %v806
        %v826 = vsel %vm824, %v799, %v810
        %vm827 = vcmask 1041408
        %v828 = vsel %vm827, %v825, %v817
        %v829 = vsel %vm827, %v826, %v821
        %v832 = vcombine.low %v828, %v829
        %834 = vst [vmem:[%s395] sm:$0x77] %v832
        %s835 = smul.u32 2, %s15
        %p836 = scmp.lt.s32.totalorder %s835, 3
        %s837 = scalar_select %p836, %s835, 3
        %s838 = smul.addr %s837, 4
        %s839 = scalar_lea.vmem %s4, %s838
        // Predicated region
        $region75: #{rawvsr_forward.27} parent=69 // pred_check
          %p840 = pneg %p127
        $region76: #{rawvsr_forward.27} parent=69 // pred_check_branch
          %842 = sbr.rel (%p840) target = $region78
        $region77: #{rawvsr_forward.27} parent=69 // pred_region
          %s843 = smul.u32 2, %s15
        $region78: #{rawvsr_forward.27} parent=69 // pred_fallthru
          _
      $region70: #{rawvsr_forward.27} parent=5 // pred_fallthru
        _
      %p844 = scmp.le.s32.totalorder 2, %s10
      // Predicated region
      $region79: #{rawvsr_forward.27} parent=5 // pred_check
        %p845 = pneg %p844
      $region80: #{rawvsr_forward.27} parent=5 // pred_check_branch
        %847 = sbr.rel (%p845) target = $region82
      $region81: #{rawvsr_forward.27} parent=5 // pred_region
        %s848 = ssub.s32 %s10, 2
        // Predicated region
        $region83: #{rawvsr_forward.27} parent=81 // pred_check
          %p849 = pneg %p133
        $region84: #{rawvsr_forward.27} parent=81 // pred_check_branch
          %851 = sbr.rel (%p849) target = $region86
        $region85: #{rawvsr_forward.27} parent=81 // pred_region
          %s852 = smul.u32 2, %s16
          %p853 = scmp.lt.s32.totalorder %s852, 3
          %s854 = scalar_select %p853, %s852, 3
          %s855 = smul.addr %s854, 4
          %s856 = scalar_lea.vmem %s4, %s855
        $region86: #{rawvsr_forward.27} parent=81 // pred_fallthru
          _
      $region82: #{rawvsr_forward.27} parent=5 // pred_fallthru
        _
    $region6: #{rawvsr_forward.27} parent=1 // loop_footer
      %s14 = sadd.s32 1, %s10
    $region7: #{rawvsr_forward.27} parent=1 // loop_footer_branch
      %9 = sbr.rel target = $region3
    $region8: #{rawvsr_forward.27} parent=1 // loop_exit
      _

</llo_original>
